<compile_context>
chip_gen: v6e
topology: v6e:2x2x1
jax: 0.10.0
libtpu: 0.0.40
codegen_flags: <defaults>
</compile_context>

<pallas_src>
import jax
import jax.numpy as jnp
import numpy as np
from jax.experimental import pallas as pl
from jax.experimental.pallas import tpu as pltpu


def residual_block_kernel(x_ref, w1_ref, w2_ref, s1_ref, b1_ref, s2_ref,
                          b2_ref, o_ref, xpad_ref):
    # x_ref:   (1, H, W, Cp)   unpadded NHWC input tile (one batch element)
    # w*_ref:  (9*Cp, Cp)      im2col weight slab, rows ordered (kh, kw, ci)
    # s*/b*:   (1, Cp)         folded BN scale / shift (f32)
    # o_ref:   (1, H, W, Cp)   output tile (lane-dense last dim)
    # xpad_ref: (H+2, W+2, Cp) VMEM scratch with a zero 1-px halo (reused for
    #                          both conv inputs)
    _, H, W, Cp = x_ref.shape
    Hp, Wp = H + 2, W + 2

    # Keep a zero 1-pixel halo around the scratch slab.  Only the thin border
    # strips are written; the interior is fully overwritten below, and the
    # halo is never dirtied between conv1 and conv2, so one zeroing per step
    # suffices.  Re-done every step (not just program_id==0) so it stays
    # correct when the parallel batch axis is sharded across TensorCores.
    # TODO(synk): hoist behind a per-core first-visit flag (pl.get_global).
    zrow = jnp.zeros((1, Wp, Cp), xpad_ref.dtype)
    zcol = jnp.zeros((Hp, 1, Cp), xpad_ref.dtype)
    xpad_ref[0:1, :, :] = zrow
    xpad_ref[Hp - 1:Hp, :, :] = zrow
    xpad_ref[:, 0:1, :] = zcol
    xpad_ref[:, Wp - 1:Wp, :] = zcol

    # Stage the input into the interior of the padded scratch (halo stays 0).
    # TODO(synk): could DMA straight from HBM into this interior (pl.ANY +
    # make_async_copy) to skip the VMEM->VMEM copy, at the cost of losing the
    # BlockSpec's automatic cross-step prefetch of x.
    xpad_ref[1:H + 1, 1:W + 1, :] = x_ref[0]

    def conv3x3(src_ref, w2d_ref):
        # kh-grouped im2col: 3 accumulated (H*W, 3*Cp) @ (3*Cp, Cp) MXU
        # matmuls instead of one (H*W, 9*Cp) slab -> 3x smaller patch
        # temporary and far less patch-build copy traffic.
        # TODO(synk): the kw=1,2 taps are sublane-misaligned slices; a
        # pltpu.roll-based shift (XLU slot) would remove the relayout copies.
        acc = None
        for kh in range(3):
            taps = [src_ref[kh:kh + H, kw:kw + W, :] for kw in range(3)]
            patches = jnp.concatenate(taps, axis=-1).reshape(H * W, 3 * Cp)
            part = jnp.dot(patches,
                           w2d_ref[kh * 3 * Cp:(kh + 1) * 3 * Cp, :],
                           preferred_element_type=jnp.float32)
            acc = part if acc is None else acc + part
        return acc

    # conv1 -> BN1 (folded affine) -> ReLU   (all f32 accumulation/epilogue)
    out1 = jnp.maximum(conv3x3(xpad_ref, w1_ref) * s1_ref[...] + b1_ref[...],
                       0.0)

    # Reuse xpad as the conv2 input buffer: out1 is a fully materialized value
    # at this point, so overwriting the interior is safe.  The residual is
    # read from x_ref, which is untouched and still VMEM-resident.
    xpad_ref[1:H + 1, 1:W + 1, :] = (out1.reshape(H, W, Cp)
                                     .astype(xpad_ref.dtype))

    # conv2 -> BN2 -> + residual -> ReLU
    out2 = conv3x3(xpad_ref, w2_ref) * s2_ref[...] + b2_ref[...]
    residual = x_ref[0].astype(jnp.float32).reshape(H * W, Cp)
    o_ref[0] = (jnp.maximum(out2 + residual, 0.0)
                .reshape(H, W, Cp).astype(o_ref.dtype))


def residual_block(x_nchw, w1_oihw, w2_oihw,
                   gamma1, beta1, mean1, var1,
                   gamma2, beta2, mean2, var2,
                   eps=1e-5, compute_dtype=jnp.float32):
    N, C, H, W = x_nchw.shape
    LANE = 128
    Cp = ((C + LANE - 1) // LANE) * LANE     # lane-dense channel padding
    # TODO(synk): for very small C most of K=9*Cp is zero padding; packing
    # (kw, ci) into the lane dim would cut MXU passes for small-C layers.

    # NCHW -> NHWC; pad channels to Cp.  No spatial pad here (halo handled
    # in-kernel), so the activation tensor is not rewritten in HBM.
    x = jnp.transpose(x_nchw, (0, 2, 3, 1)).astype(compute_dtype)
    if Cp != C:
        x = jnp.pad(x, ((0, 0), (0, 0), (0, 0), (0, Cp - C)))

    def prep_w(w_oihw):
        # OIHW -> (kh, kw, ci, co), zero-pad channels, flatten to a single
        # lane-dense (9*Cp, Cp) im2col weight slab (rows ordered kh, kw, ci).
        w = jnp.transpose(w_oihw, (2, 3, 1, 0)).astype(compute_dtype)
        w = jnp.pad(w, ((0, 0), (0, 0), (0, Cp - C), (0, Cp - C)))
        return w.reshape(9 * Cp, Cp)

    w1 = prep_w(w1_oihw)
    w2 = prep_w(w2_oihw)

    def fold_bn(gamma, beta, mean, var):
        inv = (gamma / jnp.sqrt(var + eps)).astype(jnp.float32)
        scale = jnp.pad(inv, (0, Cp - C)).reshape(1, Cp)
        shift = jnp.pad((beta - mean * inv).astype(jnp.float32),
                        (0, Cp - C)).reshape(1, Cp)
        return scale, shift

    s1, b1 = fold_bn(gamma1, beta1, mean1, var1)
    s2, b2 = fold_bn(gamma2, beta2, mean2, var2)

    # Right-size the VMEM request: actual footprint with headroom, capped at
    # 48 MiB (never the full 64 MiB of a v7x TensorCore), floored at 16 MiB
    # (v5e's small scoped default).
    isz = jnp.dtype(compute_dtype).itemsize
    blk = H * W * Cp * isz                          # one x / out block
    scratch = (H + 2) * (W + 2) * Cp * isz          # padded halo scratch
    consts = 2 * 9 * Cp * Cp * isz + 4 * Cp * 4     # weight slabs + BN vecs
    temps = H * W * 3 * Cp * isz + 3 * H * W * Cp * 4   # patch + f32 temps
    footprint = scratch + 4 * blk + 2 * consts + temps  # incl. double buffers
    vmem_limit = int(min(max(2 * footprint, 16 * 2**20), 48 * 2**20))

    out_nhwc = pl.pallas_call(
        residual_block_kernel,
        out_shape=jax.ShapeDtypeStruct((N, H, W, Cp), compute_dtype),
        grid_spec=pltpu.PrefetchScalarGridSpec(
            num_scalar_prefetch=0,
            grid=(N,),
            in_specs=[
                pl.BlockSpec((1, H, W, Cp), lambda n: (n, 0, 0, 0)),
                pl.BlockSpec((9 * Cp, Cp), lambda n: (0, 0)),
                pl.BlockSpec((9 * Cp, Cp), lambda n: (0, 0)),
                pl.BlockSpec((1, Cp), lambda n: (0, 0)),
                pl.BlockSpec((1, Cp), lambda n: (0, 0)),
                pl.BlockSpec((1, Cp), lambda n: (0, 0)),
                pl.BlockSpec((1, Cp), lambda n: (0, 0)),
            ],
            out_specs=pl.BlockSpec((1, H, W, Cp), lambda n: (n, 0, 0, 0)),
            scratch_shapes=[
                pltpu.VMEM((H + 2, W + 2, Cp), compute_dtype),  # padded x/mid
            ],
        ),
        compiler_params=pltpu.CompilerParams(
            dimension_semantics=("parallel",),
            vmem_limit_bytes=vmem_limit,
        ),
    )(x, w1, w2, s1, b1, s2, b2)

    out_nhwc = out_nhwc[..., :C]                       # drop channel padding
    return jnp.transpose(out_nhwc, (0, 3, 1, 2)).astype(jnp.float32)  # NCHW


def _reference(x, w1, w2, gamma1, beta1, mean1, var1,
               gamma2, beta2, mean2, var2, eps=1e-5):
    # Pure-JAX reference (NCHW) for correctness check.
    def bn(y, g, b, m, v):
        return (y - m[None, :, None, None]) / jnp.sqrt(v[None, :, None, None] + eps) \
               * g[None, :, None, None] + b[None, :, None, None]

    dn = ('NCHW', 'OIHW', 'NCHW')
    y = jax.lax.conv_general_dilated(x, w1, (1, 1), 'SAME', dimension_numbers=dn)
    y = jnp.maximum(bn(y, gamma1, beta1, mean1, var1), 0.0)
    z = jax.lax.conv_general_dilated(y, w2, (1, 1), 'SAME', dimension_numbers=dn)
    z = bn(z, gamma2, beta2, mean2, var2) + x
    return jnp.maximum(z, 0.0)


if __name__ == "__main__":
    key = jax.random.PRNGKey(0)
    k1, k2, k3, k4, k5, k6, k7 = jax.random.split(key, 7)

    N, C, H, W = 2, 4, 16, 16
    x = jax.random.normal(k1, (N, C, H, W), jnp.float32)

    # Deterministic parameter init (shapes per nn.Conv2d / nn.BatchNorm2d).
    w1 = jax.random.normal(k2, (C, C, 3, 3), jnp.float32) * 0.1   # OIHW, bias=False
    w2 = jax.random.normal(k3, (C, C, 3, 3), jnp.float32) * 0.1
    gamma1 = 1.0 + 0.1 * jax.random.normal(k4, (C,), jnp.float32)
    beta1 = 0.1 * jax.random.normal(k5, (C,), jnp.float32)
    gamma2 = 1.0 + 0.1 * jax.random.normal(k6, (C,), jnp.float32)
    beta2 = 0.1 * jax.random.normal(k7, (C,), jnp.float32)
    mean1 = jnp.zeros((C,), jnp.float32)
    var1 = jnp.ones((C,), jnp.float32)
    mean2 = jnp.zeros((C,), jnp.float32)
    var2 = jnp.ones((C,), jnp.float32)

    out = residual_block(x, w1, w2, gamma1, beta1, mean1, var1,
                         gamma2, beta2, mean2, var2)
    jax.block_until_ready(out)

    ref = _reference(x, w1, w2, gamma1, beta1, mean1, var1,
                     gamma2, beta2, mean2, var2)
    np.testing.assert_allclose(np.asarray(out), np.asarray(ref),
                               rtol=1e-4, atol=1e-4)
    print("KERNEL_OK")
</pallas_src>

<mosaic_0001>
module attributes {stable_mosaic.version = 11 : i64} {
  func.func @residual_block_kernel(%arg0: i32, %arg1: memref<1x16x16x128xf32, #tpu.memory_space<vmem>>, %arg2: memref<1152x128xf32, #tpu.memory_space<vmem>>, %arg3: memref<1152x128xf32, #tpu.memory_space<vmem>>, %arg4: memref<1x128xf32, #tpu.memory_space<vmem>>, %arg5: memref<1x128xf32, #tpu.memory_space<vmem>>, %arg6: memref<1x128xf32, #tpu.memory_space<vmem>>, %arg7: memref<1x128xf32, #tpu.memory_space<vmem>>, %arg8: memref<1x16x16x128xf32, #tpu.memory_space<vmem>>, %arg9: memref<18x18x128xf32, #tpu.memory_space<vmem>>) attributes {dimension_semantics = [#tpu.dimension_semantics<parallel>], iteration_bounds = array<i64: 2>, scalar_prefetch = 0 : i64, scratch_operands = 1 : i64, tpu.core_type = #tpu.core_type<tc>, window_params = [{transform_indices = @transform_0, window_bounds = array<i64: 1, 16, 16, 128>}, {pipeline_mode = #tpu.pipeline_mode<synchronous>, transform_indices = @transform_1, window_bounds = array<i64: 1152, 128>}, {pipeline_mode = #tpu.pipeline_mode<synchronous>, transform_indices = @transform_2, window_bounds = array<i64: 1152, 128>}, {pipeline_mode = #tpu.pipeline_mode<synchronous>, transform_indices = @transform_3, window_bounds = array<i64: 1, 128>}, {pipeline_mode = #tpu.pipeline_mode<synchronous>, transform_indices = @transform_4, window_bounds = array<i64: 1, 128>}, {pipeline_mode = #tpu.pipeline_mode<synchronous>, transform_indices = @transform_5, window_bounds = array<i64: 1, 128>}, {pipeline_mode = #tpu.pipeline_mode<synchronous>, transform_indices = @transform_6, window_bounds = array<i64: 1, 128>}, {transform_indices = @transform_7, window_bounds = array<i64: 1, 16, 16, 128>}]} {
    %cst = arith.constant 0.000000e+00 : f32
    %0 = vector.broadcast %cst : f32 to vector<1x18x128xf32>
    %cst_0 = arith.constant 0.000000e+00 : f32
    %1 = vector.broadcast %cst_0 : f32 to vector<18x1x128xf32>
    %c0 = arith.constant 0 : index
    %c0_1 = arith.constant 0 : index
    %c0_2 = arith.constant 0 : index
    %2 = vector.load %arg9[%c0, %c0_1, %c0_2] : memref<18x18x128xf32, #tpu.memory_space<vmem>>, vector<1x18x128xf32>
    tpu.vector_store %arg9[%c0, %c0_1, %c0_2], %0 {strides = array<i32>} : memref<18x18x128xf32, #tpu.memory_space<vmem>>, vector<1x18x128xf32>,
    %c17 = arith.constant 17 : index
    %c0_3 = arith.constant 0 : index
    %c0_4 = arith.constant 0 : index
    %3 = vector.load %arg9[%c17, %c0_3, %c0_4] : memref<18x18x128xf32, #tpu.memory_space<vmem>>, vector<1x18x128xf32>
    tpu.vector_store %arg9[%c17, %c0_3, %c0_4], %0 {strides = array<i32>} : memref<18x18x128xf32, #tpu.memory_space<vmem>>, vector<1x18x128xf32>,
    %c0_5 = arith.constant 0 : index
    %c0_6 = arith.constant 0 : index
    %c0_7 = arith.constant 0 : index
    %4 = vector.load %arg9[%c0_5, %c0_6, %c0_7] : memref<18x18x128xf32, #tpu.memory_space<vmem>>, vector<18x1x128xf32>
    tpu.vector_store %arg9[%c0_5, %c0_6, %c0_7], %1 {strides = array<i32>} : memref<18x18x128xf32, #tpu.memory_space<vmem>>, vector<18x1x128xf32>,
    %c0_8 = arith.constant 0 : index
    %c17_9 = arith.constant 17 : index
    %c0_10 = arith.constant 0 : index
    %5 = vector.load %arg9[%c0_8, %c17_9, %c0_10] : memref<18x18x128xf32, #tpu.memory_space<vmem>>, vector<18x1x128xf32>
    tpu.vector_store %arg9[%c0_8, %c17_9, %c0_10], %1 {strides = array<i32>} : memref<18x18x128xf32, #tpu.memory_space<vmem>>, vector<18x1x128xf32>,
    %c0_11 = arith.constant 0 : index
    %c0_12 = arith.constant 0 : index
    %c0_13 = arith.constant 0 : index
    %c0_14 = arith.constant 0 : index
    %6 = vector.load %arg1[%c0_11, %c0_12, %c0_13, %c0_14] : memref<1x16x16x128xf32, #tpu.memory_space<vmem>>, vector<1x16x16x128xf32>
    %7 = vector.shape_cast %6 : vector<1x16x16x128xf32> to vector<16x16x128xf32>
    %c1 = arith.constant 1 : index
    %c1_15 = arith.constant 1 : index
    %c0_16 = arith.constant 0 : index
    %8 = vector.load %arg9[%c1, %c1_15, %c0_16] : memref<18x18x128xf32, #tpu.memory_space<vmem>>, vector<16x16x128xf32>
    tpu.vector_store %arg9[%c1, %c1_15, %c0_16], %7 {strides = array<i32>} : memref<18x18x128xf32, #tpu.memory_space<vmem>>, vector<16x16x128xf32>,
    %c0_17 = arith.constant 0 : index
    %c0_18 = arith.constant 0 : index
    %c0_19 = arith.constant 0 : index
    %9 = vector.load %arg9[%c0_17, %c0_18, %c0_19] : memref<18x18x128xf32, #tpu.memory_space<vmem>>, vector<16x16x128xf32>
    %c0_20 = arith.constant 0 : index
    %c1_21 = arith.constant 1 : index
    %c0_22 = arith.constant 0 : index
    %10 = vector.load %arg9[%c0_20, %c1_21, %c0_22] : memref<18x18x128xf32, #tpu.memory_space<vmem>>, vector<16x16x128xf32>
    %c0_23 = arith.constant 0 : index
    %c2 = arith.constant 2 : index
    %c0_24 = arith.constant 0 : index
    %11 = vector.load %arg9[%c0_23, %c2, %c0_24] : memref<18x18x128xf32, #tpu.memory_space<vmem>>, vector<16x16x128xf32>
    %12 = tpu.concatenate %9, %10, %11 in 2 : vector<16x16x128xf32>, vector<16x16x128xf32>, vector<16x16x128xf32> -> vector<16x16x384xf32>
    %13 = vector.shape_cast %12 : vector<16x16x384xf32> to vector<256x384xf32>
    %c0_25 = arith.constant 0 : index
    %c0_26 = arith.constant 0 : index
    %14 = vector.load %arg2[%c0_25, %c0_26] : memref<1152x128xf32, #tpu.memory_space<vmem>>, vector<384x128xf32>
    %cst_27 = arith.constant dense<0.000000e+00> : vector<256x128xf32>
    %15 = tpu.matmul %13, %14, %cst_27 {dimension_numbers = #tpu.dot_dimension_numbers<[1], [0], [0], [1], [0, 0, 1, 1], [], []>} : vector<256x384xf32>, vector<384x128xf32>, vector<256x128xf32> -> vector<256x128xf32>
    %c1_28 = arith.constant 1 : index
    %c0_29 = arith.constant 0 : index
    %c0_30 = arith.constant 0 : index
    %16 = vector.load %arg9[%c1_28, %c0_29, %c0_30] : memref<18x18x128xf32, #tpu.memory_space<vmem>>, vector<16x16x128xf32>
    %c1_31 = arith.constant 1 : index
    %c1_32 = arith.constant 1 : index
    %c0_33 = arith.constant 0 : index
    %17 = vector.load %arg9[%c1_31, %c1_32, %c0_33] : memref<18x18x128xf32, #tpu.memory_space<vmem>>, vector<16x16x128xf32>
    %c1_34 = arith.constant 1 : index
    %c2_35 = arith.constant 2 : index
    %c0_36 = arith.constant 0 : index
    %18 = vector.load %arg9[%c1_34, %c2_35, %c0_36] : memref<18x18x128xf32, #tpu.memory_space<vmem>>, vector<16x16x128xf32>
    %19 = tpu.concatenate %16, %17, %18 in 2 : vector<16x16x128xf32>, vector<16x16x128xf32>, vector<16x16x128xf32> -> vector<16x16x384xf32>
    %20 = vector.shape_cast %19 : vector<16x16x384xf32> to vector<256x384xf32>
    %c384 = arith.constant 384 : index
    %c0_37 = arith.constant 0 : index
    %21 = vector.load %arg2[%c384, %c0_37] : memref<1152x128xf32, #tpu.memory_space<vmem>>, vector<384x128xf32>
    %cst_38 = arith.constant dense<0.000000e+00> : vector<256x128xf32>
    %22 = tpu.matmul %20, %21, %cst_38 {dimension_numbers = #tpu.dot_dimension_numbers<[1], [0], [0], [1], [0, 0, 1, 1], [], []>} : vector<256x384xf32>, vector<384x128xf32>, vector<256x128xf32> -> vector<256x128xf32>
    %23 = arith.addf %15, %22 : vector<256x128xf32>
    %c2_39 = arith.constant 2 : index
    %c0_40 = arith.constant 0 : index
    %c0_41 = arith.constant 0 : index
    %24 = vector.load %arg9[%c2_39, %c0_40, %c0_41] : memref<18x18x128xf32, #tpu.memory_space<vmem>>, vector<16x16x128xf32>
    %c2_42 = arith.constant 2 : index
    %c1_43 = arith.constant 1 : index
    %c0_44 = arith.constant 0 : index
    %25 = vector.load %arg9[%c2_42, %c1_43, %c0_44] : memref<18x18x128xf32, #tpu.memory_space<vmem>>, vector<16x16x128xf32>
    %c2_45 = arith.constant 2 : index
    %c2_46 = arith.constant 2 : index
    %c0_47 = arith.constant 0 : index
    %26 = vector.load %arg9[%c2_45, %c2_46, %c0_47] : memref<18x18x128xf32, #tpu.memory_space<vmem>>, vector<16x16x128xf32>
    %27 = tpu.concatenate %24, %25, %26 in 2 : vector<16x16x128xf32>, vector<16x16x128xf32>, vector<16x16x128xf32> -> vector<16x16x384xf32>
    %28 = vector.shape_cast %27 : vector<16x16x384xf32> to vector<256x384xf32>
    %c768 = arith.constant 768 : index
    %c0_48 = arith.constant 0 : index
    %29 = vector.load %arg2[%c768, %c0_48] : memref<1152x128xf32, #tpu.memory_space<vmem>>, vector<384x128xf32>
    %cst_49 = arith.constant dense<0.000000e+00> : vector<256x128xf32>
    %30 = tpu.matmul %28, %29, %cst_49 {dimension_numbers = #tpu.dot_dimension_numbers<[1], [0], [0], [1], [0, 0, 1, 1], [], []>} : vector<256x384xf32>, vector<384x128xf32>, vector<256x128xf32> -> vector<256x128xf32>
    %31 = arith.addf %23, %30 : vector<256x128xf32>
    %c0_50 = arith.constant 0 : index
    %c0_51 = arith.constant 0 : index
    %32 = vector.load %arg4[%c0_50, %c0_51] : memref<1x128xf32, #tpu.memory_space<vmem>>, vector<1x128xf32>
    %33 = vector.broadcast %32 : vector<1x128xf32> to vector<256x128xf32>
    %34 = arith.mulf %31, %33 : vector<256x128xf32>
    %c0_52 = arith.constant 0 : index
    %c0_53 = arith.constant 0 : index
    %35 = vector.load %arg5[%c0_52, %c0_53] : memref<1x128xf32, #tpu.memory_space<vmem>>, vector<1x128xf32>
    %36 = vector.broadcast %35 : vector<1x128xf32> to vector<256x128xf32>
    %37 = arith.addf %34, %36 : vector<256x128xf32>
    %cst_54 = arith.constant 0.000000e+00 : f32
    %38 = vector.broadcast %cst_54 : f32 to vector<256x128xf32>
    %39 = arith.maximumf %37, %38 : vector<256x128xf32>
    %40 = vector.shape_cast %39 : vector<256x128xf32> to vector<16x16x128xf32>
    %c1_55 = arith.constant 1 : index
    %c1_56 = arith.constant 1 : index
    %c0_57 = arith.constant 0 : index
    %41 = vector.load %arg9[%c1_55, %c1_56, %c0_57] : memref<18x18x128xf32, #tpu.memory_space<vmem>>, vector<16x16x128xf32>
    tpu.vector_store %arg9[%c1_55, %c1_56, %c0_57], %40 {strides = array<i32>} : memref<18x18x128xf32, #tpu.memory_space<vmem>>, vector<16x16x128xf32>,
    %c0_58 = arith.constant 0 : index
    %c0_59 = arith.constant 0 : index
    %c0_60 = arith.constant 0 : index
    %42 = vector.load %arg9[%c0_58, %c0_59, %c0_60] : memref<18x18x128xf32, #tpu.memory_space<vmem>>, vector<16x16x128xf32>
    %c0_61 = arith.constant 0 : index
    %c1_62 = arith.constant 1 : index
    %c0_63 = arith.constant 0 : index
    %43 = vector.load %arg9[%c0_61, %c1_62, %c0_63] : memref<18x18x128xf32, #tpu.memory_space<vmem>>, vector<16x16x128xf32>
    %c0_64 = arith.constant 0 : index
    %c2_65 = arith.constant 2 : index
    %c0_66 = arith.constant 0 : index
    %44 = vector.load %arg9[%c0_64, %c2_65, %c0_66] : memref<18x18x128xf32, #tpu.memory_space<vmem>>, vector<16x16x128xf32>
    %45 = tpu.concatenate %42, %43, %44 in 2 : vector<16x16x128xf32>, vector<16x16x128xf32>, vector<16x16x128xf32> -> vector<16x16x384xf32>
    %46 = vector.shape_cast %45 : vector<16x16x384xf32> to vector<256x384xf32>
    %c0_67 = arith.constant 0 : index
    %c0_68 = arith.constant 0 : index
    %47 = vector.load %arg3[%c0_67, %c0_68] : memref<1152x128xf32, #tpu.memory_space<vmem>>, vector<384x128xf32>
    %cst_69 = arith.constant dense<0.000000e+00> : vector<256x128xf32>
    %48 = tpu.matmul %46, %47, %cst_69 {dimension_numbers = #tpu.dot_dimension_numbers<[1], [0], [0], [1], [0, 0, 1, 1], [], []>} : vector<256x384xf32>, vector<384x128xf32>, vector<256x128xf32> -> vector<256x128xf32>
    %c1_70 = arith.constant 1 : index
    %c0_71 = arith.constant 0 : index
    %c0_72 = arith.constant 0 : index
    %49 = vector.load %arg9[%c1_70, %c0_71, %c0_72] : memref<18x18x128xf32, #tpu.memory_space<vmem>>, vector<16x16x128xf32>
    %c1_73 = arith.constant 1 : index
    %c1_74 = arith.constant 1 : index
    %c0_75 = arith.constant 0 : index
    %50 = vector.load %arg9[%c1_73, %c1_74, %c0_75] : memref<18x18x128xf32, #tpu.memory_space<vmem>>, vector<16x16x128xf32>
    %c1_76 = arith.constant 1 : index
    %c2_77 = arith.constant 2 : index
    %c0_78 = arith.constant 0 : index
    %51 = vector.load %arg9[%c1_76, %c2_77, %c0_78] : memref<18x18x128xf32, #tpu.memory_space<vmem>>, vector<16x16x128xf32>
    %52 = tpu.concatenate %49, %50, %51 in 2 : vector<16x16x128xf32>, vector<16x16x128xf32>, vector<16x16x128xf32> -> vector<16x16x384xf32>
    %53 = vector.shape_cast %52 : vector<16x16x384xf32> to vector<256x384xf32>
    %c384_79 = arith.constant 384 : index
    %c0_80 = arith.constant 0 : index
    %54 = vector.load %arg3[%c384_79, %c0_80] : memref<1152x128xf32, #tpu.memory_space<vmem>>, vector<384x128xf32>
    %cst_81 = arith.constant dense<0.000000e+00> : vector<256x128xf32>
    %55 = tpu.matmul %53, %54, %cst_81 {dimension_numbers = #tpu.dot_dimension_numbers<[1], [0], [0], [1], [0, 0, 1, 1], [], []>} : vector<256x384xf32>, vector<384x128xf32>, vector<256x128xf32> -> vector<256x128xf32>
    %56 = arith.addf %48, %55 : vector<256x128xf32>
    %c2_82 = arith.constant 2 : index
    %c0_83 = arith.constant 0 : index
    %c0_84 = arith.constant 0 : index
    %57 = vector.load %arg9[%c2_82, %c0_83, %c0_84] : memref<18x18x128xf32, #tpu.memory_space<vmem>>, vector<16x16x128xf32>
    %c2_85 = arith.constant 2 : index
    %c1_86 = arith.constant 1 : index
    %c0_87 = arith.constant 0 : index
    %58 = vector.load %arg9[%c2_85, %c1_86, %c0_87] : memref<18x18x128xf32, #tpu.memory_space<vmem>>, vector<16x16x128xf32>
    %c2_88 = arith.constant 2 : index
    %c2_89 = arith.constant 2 : index
    %c0_90 = arith.constant 0 : index
    %59 = vector.load %arg9[%c2_88, %c2_89, %c0_90] : memref<18x18x128xf32, #tpu.memory_space<vmem>>, vector<16x16x128xf32>
    %60 = tpu.concatenate %57, %58, %59 in 2 : vector<16x16x128xf32>, vector<16x16x128xf32>, vector<16x16x128xf32> -> vector<16x16x384xf32>
    %61 = vector.shape_cast %60 : vector<16x16x384xf32> to vector<256x384xf32>
    %c768_91 = arith.constant 768 : index
    %c0_92 = arith.constant 0 : index
    %62 = vector.load %arg3[%c768_91, %c0_92] : memref<1152x128xf32, #tpu.memory_space<vmem>>, vector<384x128xf32>
    %cst_93 = arith.constant dense<0.000000e+00> : vector<256x128xf32>
    %63 = tpu.matmul %61, %62, %cst_93 {dimension_numbers = #tpu.dot_dimension_numbers<[1], [0], [0], [1], [0, 0, 1, 1], [], []>} : vector<256x384xf32>, vector<384x128xf32>, vector<256x128xf32> -> vector<256x128xf32>
    %64 = arith.addf %56, %63 : vector<256x128xf32>
    %c0_94 = arith.constant 0 : index
    %c0_95 = arith.constant 0 : index
    %65 = vector.load %arg6[%c0_94, %c0_95] : memref<1x128xf32, #tpu.memory_space<vmem>>, vector<1x128xf32>
    %66 = vector.broadcast %65 : vector<1x128xf32> to vector<256x128xf32>
    %67 = arith.mulf %64, %66 : vector<256x128xf32>
    %c0_96 = arith.constant 0 : index
    %c0_97 = arith.constant 0 : index
    %68 = vector.load %arg7[%c0_96, %c0_97] : memref<1x128xf32, #tpu.memory_space<vmem>>, vector<1x128xf32>
    %69 = vector.broadcast %68 : vector<1x128xf32> to vector<256x128xf32>
    %70 = arith.addf %67, %69 : vector<256x128xf32>
    %c0_98 = arith.constant 0 : index
    %c0_99 = arith.constant 0 : index
    %c0_100 = arith.constant 0 : index
    %c0_101 = arith.constant 0 : index
    %71 = vector.load %arg1[%c0_98, %c0_99, %c0_100, %c0_101] : memref<1x16x16x128xf32, #tpu.memory_space<vmem>>, vector<1x16x16x128xf32>
    %72 = vector.shape_cast %71 : vector<1x16x16x128xf32> to vector<16x16x128xf32>
    %73 = vector.shape_cast %72 : vector<16x16x128xf32> to vector<256x128xf32>
    %74 = arith.addf %70, %73 : vector<256x128xf32>
    %cst_102 = arith.constant 0.000000e+00 : f32
    %75 = vector.broadcast %cst_102 : f32 to vector<256x128xf32>
    %76 = arith.maximumf %74, %75 : vector<256x128xf32>
    %77 = vector.shape_cast %76 : vector<256x128xf32> to vector<16x16x128xf32>
    %c0_103 = arith.constant 0 : index
    %c0_104 = arith.constant 0 : index
    %c0_105 = arith.constant 0 : index
    %c0_106 = arith.constant 0 : index
    %78 = vector.load %arg8[%c0_103, %c0_104, %c0_105, %c0_106] : memref<1x16x16x128xf32, #tpu.memory_space<vmem>>, vector<1x16x16x128xf32>
    %79 = vector.shape_cast %78 : vector<1x16x16x128xf32> to vector<16x16x128xf32>
    %80 = vector.shape_cast %77 : vector<16x16x128xf32> to vector<1x16x16x128xf32>
    tpu.vector_store %arg8[%c0_103, %c0_104, %c0_105, %c0_106], %80 {strides = array<i32>} : memref<1x16x16x128xf32, #tpu.memory_space<vmem>>, vector<1x16x16x128xf32>,
    return
  }
  func.func @transform_0(%arg0: i32) -> (i32, i32, i32, i32) {
    %c0_i32 = arith.constant 0 : i32
    %c0_i32_0 = arith.constant 0 : i32
    %c0_i32_1 = arith.constant 0 : i32
    %c0_i32_2 = arith.constant 0 : i32
    return %arg0, %c0_i32, %c0_i32_0, %c0_i32_1 : i32, i32, i32, i32
  }
  func.func @transform_1(%arg0: i32) -> (i32, i32) {
    %c0_i32 = arith.constant 0 : i32
    %c0_i32_0 = arith.constant 0 : i32
    %c0_i32_1 = arith.constant 0 : i32
    return %c0_i32, %c0_i32_0 : i32, i32
  }
  func.func @transform_2(%arg0: i32) -> (i32, i32) {
    %c0_i32 = arith.constant 0 : i32
    %c0_i32_0 = arith.constant 0 : i32
    %c0_i32_1 = arith.constant 0 : i32
    return %c0_i32, %c0_i32_0 : i32, i32
  }
  func.func @transform_3(%arg0: i32) -> (i32, i32) {
    %c0_i32 = arith.constant 0 : i32
    %c0_i32_0 = arith.constant 0 : i32
    %c0_i32_1 = arith.constant 0 : i32
    return %c0_i32, %c0_i32_0 : i32, i32
  }
  func.func @transform_4(%arg0: i32) -> (i32, i32) {
    %c0_i32 = arith.constant 0 : i32
    %c0_i32_0 = arith.constant 0 : i32
    %c0_i32_1 = arith.constant 0 : i32
    return %c0_i32, %c0_i32_0 : i32, i32
  }
  func.func @transform_5(%arg0: i32) -> (i32, i32) {
    %c0_i32 = arith.constant 0 : i32
    %c0_i32_0 = arith.constant 0 : i32
    %c0_i32_1 = arith.constant 0 : i32
    return %c0_i32, %c0_i32_0 : i32, i32
  }
  func.func @transform_6(%arg0: i32) -> (i32, i32) {
    %c0_i32 = arith.constant 0 : i32
    %c0_i32_0 = arith.constant 0 : i32
    %c0_i32_1 = arith.constant 0 : i32
    return %c0_i32, %c0_i32_0 : i32, i32
  }
  func.func @transform_7(%arg0: i32) -> (i32, i32, i32, i32) {
    %c0_i32 = arith.constant 0 : i32
    %c0_i32_0 = arith.constant 0 : i32
    %c0_i32_1 = arith.constant 0 : i32
    %c0_i32_2 = arith.constant 0 : i32
    return %arg0, %c0_i32, %c0_i32_0, %c0_i32_1 : i32, i32, i32, i32
  }
}

</mosaic_0001>

<llo_original>
// kernel: tpu_custom_call.1
$region0: #{tpu_custom_call.1}
  #allocation0 [shape = 'u32[]', space=smem, size = 0x4, offset = 0x4, fixed_abs, tag = 'smem constant byte address 0x4 - core index']
  #allocation1 [shape = 'u32[144,128]{1,0:T(1,128)}', space=vmem, size = 0x12000, scoped, tag = 'internal scratch']
  #allocation2 [shape = 'f32[18,18,128]{2,1,0:T(8,128)}', space=vmem, size = 0x36000, scoped, tag = 'scratch operand']
  %s0 = inlined_call_operand.hbm [shape: f32[2,16,16,128], index: 0, kind: input, shape index: {}]
  %s1 = inlined_call_operand.hbm [shape: f32[1152,128], index: 1, kind: input, shape index: {}]
  %s2 = inlined_call_operand.hbm [shape: f32[1152,128], index: 2, kind: input, shape index: {}]
  %s3 = inlined_call_operand.vmem [shape: f32[1,128], index: 3, kind: input, shape index: {}]
  %s4 = inlined_call_operand.vmem [shape: f32[1,128], index: 4, kind: input, shape index: {}]
  %s5 = inlined_call_operand.vmem [shape: f32[1,128], index: 5, kind: input, shape index: {}]
  %s6 = inlined_call_operand.vmem [shape: f32[1,128], index: 6, kind: input, shape index: {}]
  %s7 = inlined_call_operand.hbm [shape: f32[2,16,16,128], index: 7, kind: output, shape index: {}]
  %s8 = sld [smem:[#allocation0]]
  $region73: #{tpu_custom_call.1} parent=0
    _
  %s10 = ssub.s32 1, %s8
  %s11 = scalar_select 0, %s10, %s8
  $region1: #{tpu_custom_call.1} parent=0
    #allocation3 [shape = 'u8[262144]{0}', space=vmem, size = 0x40000, scoped, tag = 'input window, operand 0']
    #allocation4 [shape = 's32[2]{0}', space=sflag, size = 0x8, scoped, tag = 'scoped memory for tpu_custom_call.1']
    #allocation5 [shape = 's32[2]{0}', space=sflag, size = 0x8, scoped, tag = 'scoped memory for tpu_custom_call.1']
    #allocation6 [shape = 'u8[589824]{0}', space=vmem, size = 0x90000, scoped, tag = 'input window, operand 1, single buffered']
    #allocation7 [shape = 's32[1]{0}', space=sflag, size = 0x4, scoped, tag = 'scoped memory for tpu_custom_call.1']
    #allocation8 [shape = 'u8[589824]{0}', space=vmem, size = 0x90000, scoped, tag = 'input window, operand 2, single buffered']
    #allocation9 [shape = 'u8[262144]{0}', space=vmem, size = 0x40000, scoped, tag = 'output window, operand 0']
    %12 = vsyncpa [#allocation4], 0
    %s13 = scalar_lea.sflag [#allocation4], 1
    %14 = vsyncpa %s13, 0
    %15 = vsyncpa [#allocation7], 0
    %16 = vsyncpa [#allocation5], 0
    %s17 = scalar_lea.sflag [#allocation5], 1
    %18 = vsyncpa %s17, 0
    loop: start=0, step=1, limit=4
    $region2: #{tpu_custom_call.1} parent=1 // loop_pre_header
      _
    $region3: #{tpu_custom_call.1} parent=1 // loop_header
      %s20 = sphi 0, %s24
      %p21 = scmp.ge.s32.totalorder %s20, 4
      %s30 = sphi 0, %s32
      %s33 = sphi 0, %s30
      %s34 = sphi 0, %s33
      %s50 = sphi 0, %s34
      %s54 = sphi 0, %s54
      %s56 = sphi 0, %s54
      %s57 = sphi 0, %s56
      %s71 = sphi 0, %s57
      %s75 = sphi 0, %s75
      %s77 = sphi 0, %s75
      %s78 = sphi 0, %s77
      %s92 = sphi 0, %s78
      %s96 = sphi 0, %s96
      %s98 = sphi 0, %s96
      %s99 = sphi 0, %s98
      %s113 = sphi 0, %s99
      %s117 = sphi 0, %s117
      %s119 = sphi 0, %s117
      %s120 = sphi 0, %s119
      %s134 = sphi 0, %s120
      %s138 = sphi 0, %s138
      %s140 = sphi 0, %s138
      %s141 = sphi 0, %s140
      %s155 = sphi 0, %s141
      %s159 = sphi 0, %s159
      %s161 = sphi 0, %s159
      %s162 = sphi 0, %s161
      %s176 = sphi 0, %s162
      %s182 = sphi 0, %s184
      %s185 = sphi 0, %s182
      %s186 = sphi 0, %s185
      %s202 = sphi 0, %s186
    $region4: #{tpu_custom_call.1} parent=1 // loop_header_branch
      %23 = sbr.rel (%p21) target = $region8
    $region5: #{tpu_custom_call.1} parent=1 // loop_body
      %s25 = ssub.s32 %s20, 1
      %s26 = ssub.s32 %s20, 2
      %s27 = sadd.s32 %s20, 1
      %s28 = ssub.s32 %s20, %s27
      %p29 = scmp.eq.s32.totalorder %s28, 0
      %s31 = sadd.s32 %s30, 1
      %s32 = scalar_select %p29, %s30, %s31
      %p35 = pneg %p29
      %p36 = scmp.eq.s32.totalorder %s20, 1
      %p37 = por %p35, %p36
      %p38 = scmp.ne.s32.totalorder %s30, %s33
      %p39 = scmp.eq.s32.totalorder %s20, 0
      %p40 = por %p38, %p39
      %p41 = scmp.ne.s32.totalorder %s30, %s33
      %p42 = scmp.eq.s32.totalorder %s25, 1
      %p43 = por %p41, %p42
      %p44 = scmp.ne.s32.totalorder %s33, %s34
      %p45 = scmp.eq.s32.totalorder %s25, 0
      %p46 = por %p44, %p45
      %p47 = scmp.ne.s32.totalorder %s33, %s34
      %p48 = scmp.eq.s32.totalorder %s26, 1
      %p49 = por %p47, %p48
      %p51 = scmp.ne.s32.totalorder %s34, %s50
      %p52 = scmp.eq.s32.totalorder %s26, 0
      %p53 = por %p51, %p52
      %s55 = sadd.s32 %s54, 1
      %p58 = scmp.eq.s32.totalorder %s20, 1
      %p59 = scmp.ne.s32.totalorder %s54, %s56
      %p60 = scmp.eq.s32.totalorder %s20, 0
      %p61 = por %p59, %p60
      %p62 = scmp.ne.s32.totalorder %s54, %s56
      %p63 = scmp.eq.s32.totalorder %s25, 1
      %p64 = por %p62, %p63
      %p65 = scmp.ne.s32.totalorder %s56, %s57
      %p66 = scmp.eq.s32.totalorder %s25, 0
      %p67 = por %p65, %p66
      %p68 = scmp.ne.s32.totalorder %s56, %s57
      %p69 = scmp.eq.s32.totalorder %s26, 1
      %p70 = por %p68, %p69
      %p72 = scmp.ne.s32.totalorder %s57, %s71
      %p73 = scmp.eq.s32.totalorder %s26, 0
      %p74 = por %p72, %p73
      %s76 = sadd.s32 %s75, 1
      %p79 = scmp.eq.s32.totalorder %s20, 1
      %p80 = scmp.ne.s32.totalorder %s75, %s77
      %p81 = scmp.eq.s32.totalorder %s20, 0
      %p82 = por %p80, %p81
      %p83 = scmp.ne.s32.totalorder %s75, %s77
      %p84 = scmp.eq.s32.totalorder %s25, 1
      %p85 = por %p83, %p84
      %p86 = scmp.ne.s32.totalorder %s77, %s78
      %p87 = scmp.eq.s32.totalorder %s25, 0
      %p88 = por %p86, %p87
      %p89 = scmp.ne.s32.totalorder %s77, %s78
      %p90 = scmp.eq.s32.totalorder %s26, 1
      %p91 = por %p89, %p90
      %p93 = scmp.ne.s32.totalorder %s78, %s92
      %p94 = scmp.eq.s32.totalorder %s26, 0
      %p95 = por %p93, %p94
      %s97 = sadd.s32 %s96, 1
      %p100 = scmp.eq.s32.totalorder %s20, 1
      %p101 = scmp.ne.s32.totalorder %s96, %s98
      %p102 = scmp.eq.s32.totalorder %s20, 0
      %p103 = por %p101, %p102
      %p104 = scmp.ne.s32.totalorder %s96, %s98
      %p105 = scmp.eq.s32.totalorder %s25, 1
      %p106 = por %p104, %p105
      %p107 = scmp.ne.s32.totalorder %s98, %s99
      %p108 = scmp.eq.s32.totalorder %s25, 0
      %p109 = por %p107, %p108
      %p110 = scmp.ne.s32.totalorder %s98, %s99
      %p111 = scmp.eq.s32.totalorder %s26, 1
      %p112 = por %p110, %p111
      %p114 = scmp.ne.s32.totalorder %s99, %s113
      %p115 = scmp.eq.s32.totalorder %s26, 0
      %p116 = por %p114, %p115
      %s118 = sadd.s32 %s117, 1
      %p121 = scmp.eq.s32.totalorder %s20, 1
      %p122 = scmp.ne.s32.totalorder %s117, %s119
      %p123 = scmp.eq.s32.totalorder %s20, 0
      %p124 = por %p122, %p123
      %p125 = scmp.ne.s32.totalorder %s117, %s119
      %p126 = scmp.eq.s32.totalorder %s25, 1
      %p127 = por %p125, %p126
      %p128 = scmp.ne.s32.totalorder %s119, %s120
      %p129 = scmp.eq.s32.totalorder %s25, 0
      %p130 = por %p128, %p129
      %p131 = scmp.ne.s32.totalorder %s119, %s120
      %p132 = scmp.eq.s32.totalorder %s26, 1
      %p133 = por %p131, %p132
      %p135 = scmp.ne.s32.totalorder %s120, %s134
      %p136 = scmp.eq.s32.totalorder %s26, 0
      %p137 = por %p135, %p136
      %s139 = sadd.s32 %s138, 1
      %p142 = scmp.eq.s32.totalorder %s20, 1
      %p143 = scmp.ne.s32.totalorder %s138, %s140
      %p144 = scmp.eq.s32.totalorder %s20, 0
      %p145 = por %p143, %p144
      %p146 = scmp.ne.s32.totalorder %s138, %s140
      %p147 = scmp.eq.s32.totalorder %s25, 1
      %p148 = por %p146, %p147
      %p149 = scmp.ne.s32.totalorder %s140, %s141
      %p150 = scmp.eq.s32.totalorder %s25, 0
      %p151 = por %p149, %p150
      %p152 = scmp.ne.s32.totalorder %s140, %s141
      %p153 = scmp.eq.s32.totalorder %s26, 1
      %p154 = por %p152, %p153
      %p156 = scmp.ne.s32.totalorder %s141, %s155
      %p157 = scmp.eq.s32.totalorder %s26, 0
      %p158 = por %p156, %p157
      %s160 = sadd.s32 %s159, 1
      %p163 = scmp.eq.s32.totalorder %s20, 1
      %p164 = scmp.ne.s32.totalorder %s159, %s161
      %p165 = scmp.eq.s32.totalorder %s20, 0
      %p166 = por %p164, %p165
      %p167 = scmp.ne.s32.totalorder %s159, %s161
      %p168 = scmp.eq.s32.totalorder %s25, 1
      %p169 = por %p167, %p168
      %p170 = scmp.ne.s32.totalorder %s161, %s162
      %p171 = scmp.eq.s32.totalorder %s25, 0
      %p172 = por %p170, %p171
      %p173 = scmp.ne.s32.totalorder %s161, %s162
      %p174 = scmp.eq.s32.totalorder %s26, 1
      %p175 = por %p173, %p174
      %p177 = scmp.ne.s32.totalorder %s162, %s176
      %p178 = scmp.eq.s32.totalorder %s26, 0
      %p179 = por %p177, %p178
      %s180 = ssub.s32 %s20, %s27
      %p181 = scmp.eq.s32.totalorder %s180, 0
      %s183 = sadd.s32 %s182, 1
      %s184 = scalar_select %p181, %s182, %s183
      %p187 = pneg %p181
      %p188 = scmp.eq.s32.totalorder %s20, 1
      %p189 = por %p187, %p188
      %p190 = scmp.ne.s32.totalorder %s182, %s185
      %p191 = scmp.eq.s32.totalorder %s20, 0
      %p192 = por %p190, %p191
      %p193 = scmp.ne.s32.totalorder %s182, %s185
      %p194 = scmp.eq.s32.totalorder %s25, 1
      %p195 = por %p193, %p194
      %p196 = scmp.ne.s32.totalorder %s185, %s186
      %p197 = scmp.eq.s32.totalorder %s25, 0
      %p198 = por %p196, %p197
      %p199 = scmp.ne.s32.totalorder %s185, %s186
      %p200 = scmp.eq.s32.totalorder %s26, 1
      %p201 = por %p199, %p200
      %p203 = scmp.ne.s32.totalorder %s186, %s202
      %p204 = scmp.eq.s32.totalorder %s26, 0
      %p205 = por %p203, %p204
      %p206 = scmp.le.s32.totalorder 1, %s20
      %p207 = scmp.lt.s32.totalorder %s20, 3
      %p208 = pnand %p206, %p207
      %p209 = pneg %p208
      // Predicated region
      $region9: #{tpu_custom_call.1} parent=5 // pred_check
        _
      $region10: #{tpu_custom_call.1} parent=5 // pred_check_branch
        %211 = sbr.rel (%p208) target = $region12
      $region11: #{tpu_custom_call.1} parent=5 // pred_region
        %s212 = ssub.s32 %s20, 1
        // Predicated region
        $region13: #{tpu_custom_call.1} parent=11 // pred_check
          %p213 = pneg %p67
        $region14: #{tpu_custom_call.1} parent=11 // pred_check_branch
          %215 = sbr.rel (%p213) target = $region16
        $region15: #{tpu_custom_call.1} parent=11 // pred_region
          %s217 = ssub.s32 18432, 18432
          %218 = vsyncadd [#allocation7], %s217
          %s219 = sshll.u32 [#allocation6], 4
          %s220 = int_to_ptr.vmem [resolvable:$true] %s219
          %225 = dma.hbm_to_vmem [thread:$0]  %s1, 18432, %s220, [#allocation7], 128, 128, 8
        $region16: #{tpu_custom_call.1} parent=11 // pred_fallthru
          _
        // Predicated region
        $region17: #{tpu_custom_call.1} parent=11 // pred_check
          %p226 = pneg %p88
        $region18: #{tpu_custom_call.1} parent=11 // pred_check_branch
          %228 = sbr.rel (%p226) target = $region20
        $region19: #{tpu_custom_call.1} parent=11 // pred_region
          %s230 = ssub.s32 18432, 18432
          %231 = vsyncadd [#allocation7], %s230
          %s232 = sshll.u32 [#allocation8], 4
          %s233 = int_to_ptr.vmem [resolvable:$true] %s232
          %238 = dma.hbm_to_vmem [thread:$0]  %s2, 18432, %s233, [#allocation7], 128, 128, 8
        $region20: #{tpu_custom_call.1} parent=11 // pred_fallthru
          _
        // Predicated region
        $region21: #{tpu_custom_call.1} parent=11 // pred_check
          %p239 = pneg %p109
        $region22: #{tpu_custom_call.1} parent=11 // pred_check_branch
          %241 = sbr.rel (%p239) target = $region24
        $region23: #{tpu_custom_call.1} parent=11 // pred_region
          _
        $region24: #{tpu_custom_call.1} parent=11 // pred_fallthru
          _
        // Predicated region
        $region25: #{tpu_custom_call.1} parent=11 // pred_check
          %p242 = pneg %p130
        $region26: #{tpu_custom_call.1} parent=11 // pred_check_branch
          %244 = sbr.rel (%p242) target = $region28
        $region27: #{tpu_custom_call.1} parent=11 // pred_region
          _
        $region28: #{tpu_custom_call.1} parent=11 // pred_fallthru
          _
        // Predicated region
        $region29: #{tpu_custom_call.1} parent=11 // pred_check
          %p245 = pneg %p151
        $region30: #{tpu_custom_call.1} parent=11 // pred_check_branch
          %247 = sbr.rel (%p245) target = $region32
        $region31: #{tpu_custom_call.1} parent=11 // pred_region
          _
        $region32: #{tpu_custom_call.1} parent=11 // pred_fallthru
          _
        // Predicated region
        $region33: #{tpu_custom_call.1} parent=11 // pred_check
          %p248 = pneg %p172
        $region34: #{tpu_custom_call.1} parent=11 // pred_check_branch
          %250 = sbr.rel (%p248) target = $region36
        $region35: #{tpu_custom_call.1} parent=11 // pred_region
          _
        $region36: #{tpu_custom_call.1} parent=11 // pred_fallthru
          _
      $region12: #{tpu_custom_call.1} parent=5 // pred_fallthru
        _
      %p251 = scmp.lt.s32.totalorder %s20, 2
      // Predicated region
      $region37: #{tpu_custom_call.1} parent=5 // pred_check
        %p252 = pneg %p251
      $region38: #{tpu_custom_call.1} parent=5 // pred_check_branch
        %254 = sbr.rel (%p252) target = $region40
      $region39: #{tpu_custom_call.1} parent=5 // pred_region
        // Predicated region
        $region41: #{tpu_custom_call.1} parent=39 // pred_check
          %p255 = pneg %p40
        $region42: #{tpu_custom_call.1} parent=39 // pred_check_branch
          %257 = sbr.rel (%p255) target = $region44
        $region43: #{tpu_custom_call.1} parent=39 // pred_region
          %s258 = sand.u32 %s30, 1
          %s259 = scalar_lea.sflag [#allocation4], %s258
          %s260 = sand.u32 %s30, 1
          %s261 = smul.addr %s260, 256
          %s262 = scalar_lea.vmem [#allocation3], %s261
          %s264 = ssub.s32 4096, 4096
          %265 = vsyncadd %s259, %s264
          %s266 = smul.addr %s20, 32
          %s267 = smul.addr %s266, 128
          %s268 = scalar_lea.hbm %s0, %s267
          %s269 = sshll.u32 %s262, 4
          %s270 = int_to_ptr.vmem [resolvable:$true] %s269
          %275 = dma.hbm_to_vmem [thread:$0]  %s268, 4096, %s270, %s259, 128, 128, 8
        $region44: #{tpu_custom_call.1} parent=39 // pred_fallthru
          _
      $region40: #{tpu_custom_call.1} parent=5 // pred_fallthru
        _
      %p276 = scmp.le.s32.totalorder 1, %s20
      %p277 = scmp.lt.s32.totalorder %s20, 3
      %p278 = pnand %p276, %p277
      %p279 = pneg %p278
      // Predicated region
      $region45: #{tpu_custom_call.1} parent=5 // pred_check
        _
      $region46: #{tpu_custom_call.1} parent=5 // pred_check_branch
        %281 = sbr.rel (%p278) target = $region48
      $region47: #{tpu_custom_call.1} parent=5 // pred_region
        %s282 = ssub.s32 %s20, 1
        %s283 = sand.u32 %s33, 1
        %s284 = scalar_lea.sflag [#allocation4], %s283
        %s285 = sand.u32 %s33, 1
        %s286 = smul.addr %s285, 256
        %s287 = scalar_lea.vmem [#allocation3], %s286
        // Predicated region
        $region49: #{tpu_custom_call.1} parent=47 // pred_check
          %p288 = pneg %p46
        $region50: #{tpu_custom_call.1} parent=47 // pred_check_branch
          %290 = sbr.rel (%p288) target = $region52
        $region51: #{tpu_custom_call.1} parent=47 // pred_region
          %291 = dma.done %s284, 4096
        $region52: #{tpu_custom_call.1} parent=47 // pred_fallthru
          _
        // Predicated region
        $region53: #{tpu_custom_call.1} parent=47 // pred_check
          %p292 = pneg %p67
        $region54: #{tpu_custom_call.1} parent=47 // pred_check_branch
          %294 = sbr.rel (%p292) target = $region56
        $region55: #{tpu_custom_call.1} parent=47 // pred_region
          %295 = dma.done [#allocation7], 18432
        $region56: #{tpu_custom_call.1} parent=47 // pred_fallthru
          _
        // Predicated region
        $region57: #{tpu_custom_call.1} parent=47 // pred_check
          %p296 = pneg %p88
        $region58: #{tpu_custom_call.1} parent=47 // pred_check_branch
          %298 = sbr.rel (%p296) target = $region60
        $region59: #{tpu_custom_call.1} parent=47 // pred_region
          %299 = dma.done [#allocation7], 18432
        $region60: #{tpu_custom_call.1} parent=47 // pred_fallthru
          _
        %s300 = sand.u32 %s33, 1
        %s301 = scalar_lea.sflag [#allocation4], %s300
        %s302 = sand.u32 %s33, 1
        %s303 = smul.addr %s302, 256
        %s304 = scalar_lea.vmem [#allocation3], %s303
        %p305 = pneg %p46
        %p306 = pneg %p43
        %p307 = pneg %p67
        %p308 = pneg %p64
        %p309 = pneg %p88
        %p310 = pneg %p85
        %p311 = pneg %p109
        %p312 = pneg %p106
        %p313 = pneg %p130
        %p314 = pneg %p127
        %p315 = pneg %p151
        %p316 = pneg %p148
        %p317 = pneg %p172
        %p318 = pneg %p169
        %p319 = pneg %p198
        %p320 = pneg %p195
        %s321 = sand.u32 %s185, 1
        %s322 = scalar_lea.sflag [#allocation5], %s321
        %s323 = sand.u32 %s185, 1
        %s324 = smul.addr %s323, 256
        %s325 = scalar_lea.vmem [#allocation9], %s324
        %326 = vst [vmem:[#allocation2] sm:$0xff] 0.0
        %327 = vst [vmem:[#allocation2 + $0x8] sm:$0xff] 0.0
        %328 = vst [vmem:[#allocation2 + $0x10] sm:$0x3] 0.0
        %s329 = scalar_lea.vmem [#allocation2], 408
        %330 = vst [vmem:[%s329] sm:$0xff] 0.0
        %331 = vst [vmem:[%s329 + $0x8] sm:$0xff] 0.0
        %332 = vst [vmem:[%s329 + $0x10] sm:$0x3] 0.0
        %333 = vst [vmem:[#allocation2] sm:$0x1] 0.0
        %334 = vst [vmem:[#allocation2 + $0x18] sm:$0x1] 0.0
        %335 = vst [vmem:[#allocation2 + $0x30] sm:$0x1] 0.0
        %336 = vst [vmem:[#allocation2 + $0x48] sm:$0x1] 0.0
        %337 = vst [vmem:[#allocation2 + $0x60] sm:$0x1] 0.0
        %338 = vst [vmem:[#allocation2 + $0x78] sm:$0x1] 0.0
        %339 = vst [vmem:[#allocation2 + $0x90] sm:$0x1] 0.0
        %340 = vst [vmem:[#allocation2 + $0xa8] sm:$0x1] 0.0
        %341 = vst [vmem:[#allocation2 + $0xc0] sm:$0x1] 0.0
        %342 = vst [vmem:[#allocation2 + $0xd8] sm:$0x1] 0.0
        %343 = vst [vmem:[#allocation2 + $0xf0] sm:$0x1] 0.0
        %344 = vst [vmem:[#allocation2 + $0x108] sm:$0x1] 0.0
        %345 = vst [vmem:[#allocation2 + $0x120] sm:$0x1] 0.0
        %346 = vst [vmem:[#allocation2 + $0x138] sm:$0x1] 0.0
        %347 = vst [vmem:[#allocation2 + $0x150] sm:$0x1] 0.0
        %348 = vst [vmem:[#allocation2 + $0x168] sm:$0x1] 0.0
        %349 = vst [vmem:[#allocation2 + $0x180] sm:$0x1] 0.0
        %350 = vst [vmem:[#allocation2 + $0x198] sm:$0x1] 0.0
        %351 = vst [vmem:[#allocation2 + $0x11] sm:$0x1] 0.0
        %352 = vst [vmem:[#allocation2 + $0x29] sm:$0x1] 0.0
        %353 = vst [vmem:[#allocation2 + $0x41] sm:$0x1] 0.0
        %354 = vst [vmem:[#allocation2 + $0x59] sm:$0x1] 0.0
        %355 = vst [vmem:[#allocation2 + $0x71] sm:$0x1] 0.0
        %356 = vst [vmem:[#allocation2 + $0x89] sm:$0x1] 0.0
        %357 = vst [vmem:[#allocation2 + $0xa1] sm:$0x1] 0.0
        %358 = vst [vmem:[#allocation2 + $0xb9] sm:$0x1] 0.0
        %359 = vst [vmem:[#allocation2 + $0xd1] sm:$0x1] 0.0
        %360 = vst [vmem:[#allocation2 + $0xe9] sm:$0x1] 0.0
        %361 = vst [vmem:[#allocation2 + $0x101] sm:$0x1] 0.0
        %362 = vst [vmem:[#allocation2 + $0x119] sm:$0x1] 0.0
        %363 = vst [vmem:[#allocation2 + $0x131] sm:$0x1] 0.0
        %364 = vst [vmem:[#allocation2 + $0x149] sm:$0x1] 0.0
        %365 = vst [vmem:[#allocation2 + $0x161] sm:$0x1] 0.0
        %366 = vst [vmem:[#allocation2 + $0x179] sm:$0x1] 0.0
        %367 = vst [vmem:[#allocation2 + $0x191] sm:$0x1] 0.0
        %368 = vst [vmem:[#allocation2 + $0x1a9] sm:$0x1] 0.0
        %v369 = vld [vmem:[%s287] sm:$0xff]
        %v370 = vld [vmem:[%s287 + $0x8] sm:$0xff]
        %v371 = vld [vmem:[%s287 + $0x10] sm:$0xff]
        %v372 = vld [vmem:[%s287 + $0x18] sm:$0xff]
        %v373 = vld [vmem:[%s287 + $0x20] sm:$0xff]
        %v374 = vld [vmem:[%s287 + $0x28] sm:$0xff]
        %v375 = vld [vmem:[%s287 + $0x30] sm:$0xff]
        %v376 = vld [vmem:[%s287 + $0x38] sm:$0xff]
        %v377 = vld [vmem:[%s287 + $0x40] sm:$0xff]
        %v378 = vld [vmem:[%s287 + $0x48] sm:$0xff]
        %v379 = vld [vmem:[%s287 + $0x50] sm:$0xff]
        %v380 = vld [vmem:[%s287 + $0x58] sm:$0xff]
        %v381 = vld [vmem:[%s287 + $0x60] sm:$0xff]
        %v382 = vld [vmem:[%s287 + $0x68] sm:$0xff]
        %v383 = vld [vmem:[%s287 + $0x70] sm:$0xff]
        %v384 = vld [vmem:[%s287 + $0x78] sm:$0xff]
        %v385 = vld [vmem:[%s287 + $0x80] sm:$0xff]
        %v386 = vld [vmem:[%s287 + $0x88] sm:$0xff]
        %v387 = vld [vmem:[%s287 + $0x90] sm:$0xff]
        %v388 = vld [vmem:[%s287 + $0x98] sm:$0xff]
        %v389 = vld [vmem:[%s287 + $0xa0] sm:$0xff]
        %v390 = vld [vmem:[%s287 + $0xa8] sm:$0xff]
        %v391 = vld [vmem:[%s287 + $0xb0] sm:$0xff]
        %v392 = vld [vmem:[%s287 + $0xb8] sm:$0xff]
        %v393 = vld [vmem:[%s287 + $0xc0] sm:$0xff]
        %v394 = vld [vmem:[%s287 + $0xc8] sm:$0xff]
        %v395 = vld [vmem:[%s287 + $0xd0] sm:$0xff]
        %v396 = vld [vmem:[%s287 + $0xd8] sm:$0xff]
        %v397 = vld [vmem:[%s287 + $0xe0] sm:$0xff]
        %v398 = vld [vmem:[%s287 + $0xe8] sm:$0xff]
        %v399 = vld [vmem:[%s287 + $0xf0] sm:$0xff]
        %v400 = vld [vmem:[%s287 + $0xf8] sm:$0xff]
        %s401 = scalar_lea.vmem [#allocation2], 24
        %402 = vst [vmem:[%s401 + $0x1] sm:$0xff] %v369
        %403 = vst [vmem:[%s401 + $0x9] sm:$0xff] %v370
        %404 = vst [vmem:[%s401 + $0x19] sm:$0xff] %v371
        %405 = vst [vmem:[%s401 + $0x21] sm:$0xff] %v372
        %406 = vst [vmem:[%s401 + $0x31] sm:$0xff] %v373
        %407 = vst [vmem:[%s401 + $0x39] sm:$0xff] %v374
        %408 = vst [vmem:[%s401 + $0x49] sm:$0xff] %v375
        %409 = vst [vmem:[%s401 + $0x51] sm:$0xff] %v376
        %410 = vst [vmem:[%s401 + $0x61] sm:$0xff] %v377
        %411 = vst [vmem:[%s401 + $0x69] sm:$0xff] %v378
        %412 = vst [vmem:[%s401 + $0x79] sm:$0xff] %v379
        %413 = vst [vmem:[%s401 + $0x81] sm:$0xff] %v380
        %414 = vst [vmem:[%s401 + $0x91] sm:$0xff] %v381
        %415 = vst [vmem:[%s401 + $0x99] sm:$0xff] %v382
        %416 = vst [vmem:[%s401 + $0xa9] sm:$0xff] %v383
        %417 = vst [vmem:[%s401 + $0xb1] sm:$0xff] %v384
        %418 = vst [vmem:[%s401 + $0xc1] sm:$0xff] %v385
        %419 = vst [vmem:[%s401 + $0xc9] sm:$0xff] %v386
        %420 = vst [vmem:[%s401 + $0xd9] sm:$0xff] %v387
        %421 = vst [vmem:[%s401 + $0xe1] sm:$0xff] %v388
        %422 = vst [vmem:[%s401 + $0xf1] sm:$0xff] %v389
        %423 = vst [vmem:[%s401 + $0xf9] sm:$0xff] %v390
        %424 = vst [vmem:[%s401 + $0x109] sm:$0xff] %v391
        %425 = vst [vmem:[%s401 + $0x111] sm:$0xff] %v392
        %426 = vst [vmem:[%s401 + $0x121] sm:$0xff] %v393
        %427 = vst [vmem:[%s401 + $0x129] sm:$0xff] %v394
        %428 = vst [vmem:[%s401 + $0x139] sm:$0xff] %v395
        %429 = vst [vmem:[%s401 + $0x141] sm:$0xff] %v396
        %430 = vst [vmem:[%s401 + $0x151] sm:$0xff] %v397
        %431 = vst [vmem:[%s401 + $0x159] sm:$0xff] %v398
        %432 = vst [vmem:[%s401 + $0x169] sm:$0xff] %v399
        %433 = vst [vmem:[%s401 + $0x171] sm:$0xff] %v400
        %v434 = vld [vmem:[#allocation2] sm:$0xff]
        %v435 = vld [vmem:[#allocation2 + $0x8] sm:$0xff]
        %v436 = vld [vmem:[#allocation2 + $0x18] sm:$0xff]
        %v437 = vld [vmem:[#allocation2 + $0x20] sm:$0xff]
        %v438 = vld [vmem:[#allocation2 + $0x30] sm:$0xff]
        %v439 = vld [vmem:[#allocation2 + $0x38] sm:$0xff]
        %v440 = vld [vmem:[#allocation2 + $0x48] sm:$0xff]
        %v441 = vld [vmem:[#allocation2 + $0x50] sm:$0xff]
        %v442 = vld [vmem:[#allocation2 + $0x60] sm:$0xff]
        %v443 = vld [vmem:[#allocation2 + $0x68] sm:$0xff]
        %v444 = vld [vmem:[#allocation2 + $0x78] sm:$0xff]
        %v445 = vld [vmem:[#allocation2 + $0x80] sm:$0xff]
        %v446 = vld [vmem:[#allocation2 + $0x90] sm:$0xff]
        %v447 = vld [vmem:[#allocation2 + $0x98] sm:$0xff]
        %v448 = vld [vmem:[#allocation2 + $0xa8] sm:$0xff]
        %v449 = vld [vmem:[#allocation2 + $0xb0] sm:$0xff]
        %v450 = vld [vmem:[#allocation2 + $0xc0] sm:$0xff]
        %v451 = vld [vmem:[#allocation2 + $0xc8] sm:$0xff]
        %v452 = vld [vmem:[#allocation2 + $0xd8] sm:$0xff]
        %v453 = vld [vmem:[#allocation2 + $0xe0] sm:$0xff]
        %v454 = vld [vmem:[#allocation2 + $0xf0] sm:$0xff]
        %v455 = vld [vmem:[#allocation2 + $0xf8] sm:$0xff]
        %v456 = vld [vmem:[#allocation2 + $0x108] sm:$0xff]
        %v457 = vld [vmem:[#allocation2 + $0x110] sm:$0xff]
        %v458 = vld [vmem:[#allocation2 + $0x120] sm:$0xff]
        %v459 = vld [vmem:[#allocation2 + $0x128] sm:$0xff]
        %v460 = vld [vmem:[#allocation2 + $0x138] sm:$0xff]
        %v461 = vld [vmem:[#allocation2 + $0x140] sm:$0xff]
        %v462 = vld [vmem:[#allocation2 + $0x150] sm:$0xff]
        %v463 = vld [vmem:[#allocation2 + $0x158] sm:$0xff]
        %v464 = vld [vmem:[#allocation2 + $0x168] sm:$0xff]
        %v465 = vld [vmem:[#allocation2 + $0x170] sm:$0xff]
        %v466 = vld [vmem:[#allocation2 + $0x1] sm:$0xff]
        %v467 = vld [vmem:[#allocation2 + $0x9] sm:$0xff]
        %v468 = vld [vmem:[#allocation2 + $0x19] sm:$0xff]
        %v469 = vld [vmem:[#allocation2 + $0x21] sm:$0xff]
        %v470 = vld [vmem:[#allocation2 + $0x31] sm:$0xff]
        %v471 = vld [vmem:[#allocation2 + $0x39] sm:$0xff]
        %v472 = vld [vmem:[#allocation2 + $0x49] sm:$0xff]
        %v473 = vld [vmem:[#allocation2 + $0x51] sm:$0xff]
        %v474 = vld [vmem:[#allocation2 + $0x61] sm:$0xff]
        %v475 = vld [vmem:[#allocation2 + $0x69] sm:$0xff]
        %v476 = vld [vmem:[#allocation2 + $0x79] sm:$0xff]
        %v477 = vld [vmem:[#allocation2 + $0x81] sm:$0xff]
        %v478 = vld [vmem:[#allocation2 + $0x91] sm:$0xff]
        %v479 = vld [vmem:[#allocation2 + $0x99] sm:$0xff]
        %v480 = vld [vmem:[#allocation2 + $0xa9] sm:$0xff]
        %v481 = vld [vmem:[#allocation2 + $0xb1] sm:$0xff]
        %v482 = vld [vmem:[#allocation2 + $0xc1] sm:$0xff]
        %v483 = vld [vmem:[#allocation2 + $0xc9] sm:$0xff]
        %v484 = vld [vmem:[#allocation2 + $0xd9] sm:$0xff]
        %v485 = vld [vmem:[#allocation2 + $0xe1] sm:$0xff]
        %v486 = vld [vmem:[#allocation2 + $0xf1] sm:$0xff]
        %v487 = vld [vmem:[#allocation2 + $0xf9] sm:$0xff]
        %v488 = vld [vmem:[#allocation2 + $0x109] sm:$0xff]
        %v489 = vld [vmem:[#allocation2 + $0x111] sm:$0xff]
        %v490 = vld [vmem:[#allocation2 + $0x121] sm:$0xff]
        %v491 = vld [vmem:[#allocation2 + $0x129] sm:$0xff]
        %v492 = vld [vmem:[#allocation2 + $0x139] sm:$0xff]
        %v493 = vld [vmem:[#allocation2 + $0x141] sm:$0xff]
        %v494 = vld [vmem:[#allocation2 + $0x151] sm:$0xff]
        %v495 = vld [vmem:[#allocation2 + $0x159] sm:$0xff]
        %v496 = vld [vmem:[#allocation2 + $0x169] sm:$0xff]
        %v497 = vld [vmem:[#allocation2 + $0x171] sm:$0xff]
        %v498 = vld [vmem:[#allocation2 + $0x2] sm:$0xff]
        %v499 = vld [vmem:[#allocation2 + $0xa] sm:$0xff]
        %v500 = vld [vmem:[#allocation2 + $0x1a] sm:$0xff]
        %v501 = vld [vmem:[#allocation2 + $0x22] sm:$0xff]
        %v502 = vld [vmem:[#allocation2 + $0x32] sm:$0xff]
        %v503 = vld [vmem:[#allocation2 + $0x3a] sm:$0xff]
        %v504 = vld [vmem:[#allocation2 + $0x4a] sm:$0xff]
        %v505 = vld [vmem:[#allocation2 + $0x52] sm:$0xff]
        %v506 = vld [vmem:[#allocation2 + $0x62] sm:$0xff]
        %v507 = vld [vmem:[#allocation2 + $0x6a] sm:$0xff]
        %v508 = vld [vmem:[#allocation2 + $0x7a] sm:$0xff]
        %v509 = vld [vmem:[#allocation2 + $0x82] sm:$0xff]
        %v510 = vld [vmem:[#allocation2 + $0x92] sm:$0xff]
        %v511 = vld [vmem:[#allocation2 + $0x9a] sm:$0xff]
        %v512 = vld [vmem:[#allocation2 + $0xaa] sm:$0xff]
        %v513 = vld [vmem:[#allocation2 + $0xb2] sm:$0xff]
        %v514 = vld [vmem:[#allocation2 + $0xc2] sm:$0xff]
        %v515 = vld [vmem:[#allocation2 + $0xca] sm:$0xff]
        %v516 = vld [vmem:[#allocation2 + $0xda] sm:$0xff]
        %v517 = vld [vmem:[#allocation2 + $0xe2] sm:$0xff]
        %v518 = vld [vmem:[#allocation2 + $0xf2] sm:$0xff]
        %v519 = vld [vmem:[#allocation2 + $0xfa] sm:$0xff]
        %v520 = vld [vmem:[#allocation2 + $0x10a] sm:$0xff]
        %v521 = vld [vmem:[#allocation2 + $0x112] sm:$0xff]
        %v522 = vld [vmem:[#allocation2 + $0x122] sm:$0xff]
        %v523 = vld [vmem:[#allocation2 + $0x12a] sm:$0xff]
        %v524 = vld [vmem:[#allocation2 + $0x13a] sm:$0xff]
        %v525 = vld [vmem:[#allocation2 + $0x142] sm:$0xff]
        %v526 = vld [vmem:[#allocation2 + $0x152] sm:$0xff]
        %v527 = vld [vmem:[#allocation2 + $0x15a] sm:$0xff]
        %v528 = vld [vmem:[#allocation2 + $0x16a] sm:$0xff]
        %v529 = vld [vmem:[#allocation2 + $0x172] sm:$0xff]
        %v530 = vld [vmem:[#allocation6] sm:$0xff]
        %v531 = vld [vmem:[#allocation6 + $0x8] sm:$0xff]
        %v532 = vld [vmem:[#allocation6 + $0x10] sm:$0xff]
        %v533 = vld [vmem:[#allocation6 + $0x18] sm:$0xff]
        %v534 = vld [vmem:[#allocation6 + $0x20] sm:$0xff]
        %v535 = vld [vmem:[#allocation6 + $0x28] sm:$0xff]
        %v536 = vld [vmem:[#allocation6 + $0x30] sm:$0xff]
        %v537 = vld [vmem:[#allocation6 + $0x38] sm:$0xff]
        %v538 = vld [vmem:[#allocation6 + $0x40] sm:$0xff]
        %v539 = vld [vmem:[#allocation6 + $0x48] sm:$0xff]
        %v540 = vld [vmem:[#allocation6 + $0x50] sm:$0xff]
        %v541 = vld [vmem:[#allocation6 + $0x58] sm:$0xff]
        %v542 = vld [vmem:[#allocation6 + $0x60] sm:$0xff]
        %v543 = vld [vmem:[#allocation6 + $0x68] sm:$0xff]
        %v544 = vld [vmem:[#allocation6 + $0x70] sm:$0xff]
        %v545 = vld [vmem:[#allocation6 + $0x78] sm:$0xff]
        %v546 = vld [vmem:[#allocation6 + $0x80] sm:$0xff]
        %v547 = vld [vmem:[#allocation6 + $0x88] sm:$0xff]
        %v548 = vld [vmem:[#allocation6 + $0x90] sm:$0xff]
        %v549 = vld [vmem:[#allocation6 + $0x98] sm:$0xff]
        %v550 = vld [vmem:[#allocation6 + $0xa0] sm:$0xff]
        %v551 = vld [vmem:[#allocation6 + $0xa8] sm:$0xff]
        %v552 = vld [vmem:[#allocation6 + $0xb0] sm:$0xff]
        %v553 = vld [vmem:[#allocation6 + $0xb8] sm:$0xff]
        %v554 = vld [vmem:[#allocation6 + $0xc0] sm:$0xff]
        %v555 = vld [vmem:[#allocation6 + $0xc8] sm:$0xff]
        %v556 = vld [vmem:[#allocation6 + $0xd0] sm:$0xff]
        %v557 = vld [vmem:[#allocation6 + $0xd8] sm:$0xff]
        %v558 = vld [vmem:[#allocation6 + $0xe0] sm:$0xff]
        %v559 = vld [vmem:[#allocation6 + $0xe8] sm:$0xff]
        %v560 = vld [vmem:[#allocation6 + $0xf0] sm:$0xff]
        %v561 = vld [vmem:[#allocation6 + $0xf8] sm:$0xff]
        %v562 = vld [vmem:[#allocation6 + $0x100] sm:$0xff]
        %v563 = vld [vmem:[#allocation6 + $0x108] sm:$0xff]
        %v564 = vld [vmem:[#allocation6 + $0x110] sm:$0xff]
        %v565 = vld [vmem:[#allocation6 + $0x118] sm:$0xff]
        %v566 = vld [vmem:[#allocation6 + $0x120] sm:$0xff]
        %v567 = vld [vmem:[#allocation6 + $0x128] sm:$0xff]
        %v568 = vld [vmem:[#allocation6 + $0x130] sm:$0xff]
        %v569 = vld [vmem:[#allocation6 + $0x138] sm:$0xff]
        %v570 = vld [vmem:[#allocation6 + $0x140] sm:$0xff]
        %v571 = vld [vmem:[#allocation6 + $0x148] sm:$0xff]
        %v572 = vld [vmem:[#allocation6 + $0x150] sm:$0xff]
        %v573 = vld [vmem:[#allocation6 + $0x158] sm:$0xff]
        %v574 = vld [vmem:[#allocation6 + $0x160] sm:$0xff]
        %v575 = vld [vmem:[#allocation6 + $0x168] sm:$0xff]
        %v576 = vld [vmem:[#allocation6 + $0x170] sm:$0xff]
        %v577 = vld [vmem:[#allocation6 + $0x178] sm:$0xff]
        %v578 = vld [vmem:[%s401] sm:$0xff]
        %v579 = vld [vmem:[%s401 + $0x8] sm:$0xff]
        %v580 = vld [vmem:[%s401 + $0x18] sm:$0xff]
        %v581 = vld [vmem:[%s401 + $0x20] sm:$0xff]
        %v582 = vld [vmem:[%s401 + $0x30] sm:$0xff]
        %v583 = vld [vmem:[%s401 + $0x38] sm:$0xff]
        %v584 = vld [vmem:[%s401 + $0x48] sm:$0xff]
        %v585 = vld [vmem:[%s401 + $0x50] sm:$0xff]
        %v586 = vld [vmem:[%s401 + $0x60] sm:$0xff]
        %v587 = vld [vmem:[%s401 + $0x68] sm:$0xff]
        %v588 = vld [vmem:[%s401 + $0x78] sm:$0xff]
        %v589 = vld [vmem:[%s401 + $0x80] sm:$0xff]
        %v590 = vld [vmem:[%s401 + $0x90] sm:$0xff]
        %v591 = vld [vmem:[%s401 + $0x98] sm:$0xff]
        %v592 = vld [vmem:[%s401 + $0xa8] sm:$0xff]
        %v593 = vld [vmem:[%s401 + $0xb0] sm:$0xff]
        %v594 = vld [vmem:[%s401 + $0xc0] sm:$0xff]
        %v595 = vld [vmem:[%s401 + $0xc8] sm:$0xff]
        %v596 = vld [vmem:[%s401 + $0xd8] sm:$0xff]
        %v597 = vld [vmem:[%s401 + $0xe0] sm:$0xff]
        %v598 = vld [vmem:[%s401 + $0xf0] sm:$0xff]
        %v599 = vld [vmem:[%s401 + $0xf8] sm:$0xff]
        %v600 = vld [vmem:[%s401 + $0x108] sm:$0xff]
        %v601 = vld [vmem:[%s401 + $0x110] sm:$0xff]
        %v602 = vld [vmem:[%s401 + $0x120] sm:$0xff]
        %v603 = vld [vmem:[%s401 + $0x128] sm:$0xff]
        %v604 = vld [vmem:[%s401 + $0x138] sm:$0xff]
        %v605 = vld [vmem:[%s401 + $0x140] sm:$0xff]
        %v606 = vld [vmem:[%s401 + $0x150] sm:$0xff]
        %v607 = vld [vmem:[%s401 + $0x158] sm:$0xff]
        %v608 = vld [vmem:[%s401 + $0x168] sm:$0xff]
        %v609 = vld [vmem:[%s401 + $0x170] sm:$0xff]
        %v610 = vld [vmem:[%s401 + $0x1] sm:$0xff]
        %v611 = vld [vmem:[%s401 + $0x9] sm:$0xff]
        %v612 = vld [vmem:[%s401 + $0x19] sm:$0xff]
        %v613 = vld [vmem:[%s401 + $0x21] sm:$0xff]
        %v614 = vld [vmem:[%s401 + $0x31] sm:$0xff]
        %v615 = vld [vmem:[%s401 + $0x39] sm:$0xff]
        %v616 = vld [vmem:[%s401 + $0x49] sm:$0xff]
        %v617 = vld [vmem:[%s401 + $0x51] sm:$0xff]
        %v618 = vld [vmem:[%s401 + $0x61] sm:$0xff]
        %v619 = vld [vmem:[%s401 + $0x69] sm:$0xff]
        %v620 = vld [vmem:[%s401 + $0x79] sm:$0xff]
        %v621 = vld [vmem:[%s401 + $0x81] sm:$0xff]
        %v622 = vld [vmem:[%s401 + $0x91] sm:$0xff]
        %v623 = vld [vmem:[%s401 + $0x99] sm:$0xff]
        %v624 = vld [vmem:[%s401 + $0xa9] sm:$0xff]
        %v625 = vld [vmem:[%s401 + $0xb1] sm:$0xff]
        %v626 = vld [vmem:[%s401 + $0xc1] sm:$0xff]
        %v627 = vld [vmem:[%s401 + $0xc9] sm:$0xff]
        %v628 = vld [vmem:[%s401 + $0xd9] sm:$0xff]
        %v629 = vld [vmem:[%s401 + $0xe1] sm:$0xff]
        %v630 = vld [vmem:[%s401 + $0xf1] sm:$0xff]
        %v631 = vld [vmem:[%s401 + $0xf9] sm:$0xff]
        %v632 = vld [vmem:[%s401 + $0x109] sm:$0xff]
        %v633 = vld [vmem:[%s401 + $0x111] sm:$0xff]
        %v634 = vld [vmem:[%s401 + $0x121] sm:$0xff]
        %v635 = vld [vmem:[%s401 + $0x129] sm:$0xff]
        %v636 = vld [vmem:[%s401 + $0x139] sm:$0xff]
        %v637 = vld [vmem:[%s401 + $0x141] sm:$0xff]
        %v638 = vld [vmem:[%s401 + $0x151] sm:$0xff]
        %v639 = vld [vmem:[%s401 + $0x159] sm:$0xff]
        %v640 = vld [vmem:[%s401 + $0x169] sm:$0xff]
        %v641 = vld [vmem:[%s401 + $0x171] sm:$0xff]
        %v642 = vld [vmem:[%s401 + $0x2] sm:$0xff]
        %v643 = vld [vmem:[%s401 + $0xa] sm:$0xff]
        %v644 = vld [vmem:[%s401 + $0x1a] sm:$0xff]
        %v645 = vld [vmem:[%s401 + $0x22] sm:$0xff]
        %v646 = vld [vmem:[%s401 + $0x32] sm:$0xff]
        %v647 = vld [vmem:[%s401 + $0x3a] sm:$0xff]
        %v648 = vld [vmem:[%s401 + $0x4a] sm:$0xff]
        %v649 = vld [vmem:[%s401 + $0x52] sm:$0xff]
        %v650 = vld [vmem:[%s401 + $0x62] sm:$0xff]
        %v651 = vld [vmem:[%s401 + $0x6a] sm:$0xff]
        %v652 = vld [vmem:[%s401 + $0x7a] sm:$0xff]
        %v653 = vld [vmem:[%s401 + $0x82] sm:$0xff]
        %v654 = vld [vmem:[%s401 + $0x92] sm:$0xff]
        %v655 = vld [vmem:[%s401 + $0x9a] sm:$0xff]
        %v656 = vld [vmem:[%s401 + $0xaa] sm:$0xff]
        %v657 = vld [vmem:[%s401 + $0xb2] sm:$0xff]
        %v658 = vld [vmem:[%s401 + $0xc2] sm:$0xff]
        %v659 = vld [vmem:[%s401 + $0xca] sm:$0xff]
        %v660 = vld [vmem:[%s401 + $0xda] sm:$0xff]
        %v661 = vld [vmem:[%s401 + $0xe2] sm:$0xff]
        %v662 = vld [vmem:[%s401 + $0xf2] sm:$0xff]
        %v663 = vld [vmem:[%s401 + $0xfa] sm:$0xff]
        %v664 = vld [vmem:[%s401 + $0x10a] sm:$0xff]
        %v665 = vld [vmem:[%s401 + $0x112] sm:$0xff]
        %v666 = vld [vmem:[%s401 + $0x122] sm:$0xff]
        %v667 = vld [vmem:[%s401 + $0x12a] sm:$0xff]
        %v668 = vld [vmem:[%s401 + $0x13a] sm:$0xff]
        %v669 = vld [vmem:[%s401 + $0x142] sm:$0xff]
        %v670 = vld [vmem:[%s401 + $0x152] sm:$0xff]
        %v671 = vld [vmem:[%s401 + $0x15a] sm:$0xff]
        %v672 = vld [vmem:[%s401 + $0x16a] sm:$0xff]
        %v673 = vld [vmem:[%s401 + $0x172] sm:$0xff]
        %v674 = vld [vmem:[#allocation6 + $0x180] sm:$0xff]
        %v675 = vld [vmem:[#allocation6 + $0x188] sm:$0xff]
        %v676 = vld [vmem:[#allocation6 + $0x190] sm:$0xff]
        %v677 = vld [vmem:[#allocation6 + $0x198] sm:$0xff]
        %v678 = vld [vmem:[#allocation6 + $0x1a0] sm:$0xff]
        %v679 = vld [vmem:[#allocation6 + $0x1a8] sm:$0xff]
        %v680 = vld [vmem:[#allocation6 + $0x1b0] sm:$0xff]
        %v681 = vld [vmem:[#allocation6 + $0x1b8] sm:$0xff]
        %v682 = vld [vmem:[#allocation6 + $0x1c0] sm:$0xff]
        %v683 = vld [vmem:[#allocation6 + $0x1c8] sm:$0xff]
        %v684 = vld [vmem:[#allocation6 + $0x1d0] sm:$0xff]
        %v685 = vld [vmem:[#allocation6 + $0x1d8] sm:$0xff]
        %v686 = vld [vmem:[#allocation6 + $0x1e0] sm:$0xff]
        %v687 = vld [vmem:[#allocation6 + $0x1e8] sm:$0xff]
        %v688 = vld [vmem:[#allocation6 + $0x1f0] sm:$0xff]
        %v689 = vld [vmem:[#allocation6 + $0x1f8] sm:$0xff]
        %v690 = vld [vmem:[#allocation6 + $0x200] sm:$0xff]
        %v691 = vld [vmem:[#allocation6 + $0x208] sm:$0xff]
        %v692 = vld [vmem:[#allocation6 + $0x210] sm:$0xff]
        %v693 = vld [vmem:[#allocation6 + $0x218] sm:$0xff]
        %v694 = vld [vmem:[#allocation6 + $0x220] sm:$0xff]
        %v695 = vld [vmem:[#allocation6 + $0x228] sm:$0xff]
        %v696 = vld [vmem:[#allocation6 + $0x230] sm:$0xff]
        %v697 = vld [vmem:[#allocation6 + $0x238] sm:$0xff]
        %v698 = vld [vmem:[#allocation6 + $0x240] sm:$0xff]
        %v699 = vld [vmem:[#allocation6 + $0x248] sm:$0xff]
        %v700 = vld [vmem:[#allocation6 + $0x250] sm:$0xff]
        %v701 = vld [vmem:[#allocation6 + $0x258] sm:$0xff]
        %v702 = vld [vmem:[#allocation6 + $0x260] sm:$0xff]
        %v703 = vld [vmem:[#allocation6 + $0x268] sm:$0xff]
        %v704 = vld [vmem:[#allocation6 + $0x270] sm:$0xff]
        %v705 = vld [vmem:[#allocation6 + $0x278] sm:$0xff]
        %v706 = vld [vmem:[#allocation6 + $0x280] sm:$0xff]
        %v707 = vld [vmem:[#allocation6 + $0x288] sm:$0xff]
        %v708 = vld [vmem:[#allocation6 + $0x290] sm:$0xff]
        %v709 = vld [vmem:[#allocation6 + $0x298] sm:$0xff]
        %v710 = vld [vmem:[#allocation6 + $0x2a0] sm:$0xff]
        %v711 = vld [vmem:[#allocation6 + $0x2a8] sm:$0xff]
        %v712 = vld [vmem:[#allocation6 + $0x2b0] sm:$0xff]
        %v713 = vld [vmem:[#allocation6 + $0x2b8] sm:$0xff]
        %v714 = vld [vmem:[#allocation6 + $0x2c0] sm:$0xff]
        %v715 = vld [vmem:[#allocation6 + $0x2c8] sm:$0xff]
        %v716 = vld [vmem:[#allocation6 + $0x2d0] sm:$0xff]
        %v717 = vld [vmem:[#allocation6 + $0x2d8] sm:$0xff]
        %v718 = vld [vmem:[#allocation6 + $0x2e0] sm:$0xff]
        %v719 = vld [vmem:[#allocation6 + $0x2e8] sm:$0xff]
        %v720 = vld [vmem:[#allocation6 + $0x2f0] sm:$0xff]
        %v721 = vld [vmem:[#allocation6 + $0x2f8] sm:$0xff]
        %722 = vmatprep.subr.mxu0 0.0
        %723 = vmatpush1.msra.mxu0 %v689
        %724 = vmatprep.subr.mxu0 0.0
        %725 = vmatpush1.msra.mxu0 %v688
        %726 = vmatprep.subr.mxu0 0.0
        %727 = vmatpush1.msra.mxu0 %v687
        %728 = vmatprep.subr.mxu0 0.0
        %729 = vmatpush1.msra.mxu0 %v686
        %730 = vmatprep.subr.mxu0 0.0
        %731 = vmatpush1.msra.mxu0 %v685
        %732 = vmatprep.subr.mxu0 0.0
        %733 = vmatpush1.msra.mxu0 %v684
        %734 = vmatprep.subr.mxu0 0.0
        %735 = vmatpush1.msra.mxu0 %v683
        %736 = vmatprep.subr.mxu0 0.0
        %737 = vmatpush1.msra.mxu0 %v682
        %738 = vmatprep.subr.mxu0 0.0
        %739 = vmatpush1.msra.mxu0 %v681
        %740 = vmatprep.subr.mxu0 0.0
        %741 = vmatpush1.msra.mxu0 %v680
        %742 = vmatprep.subr.mxu0 0.0
        %743 = vmatpush1.msra.mxu0 %v679
        %744 = vmatprep.subr.mxu0 0.0
        %745 = vmatpush1.msra.mxu0 %v678
        %746 = vmatprep.subr.mxu0 0.0
        %747 = vmatpush1.msra.mxu0 %v677
        %748 = vmatprep.subr.mxu0 0.0
        %749 = vmatpush1.msra.mxu0 %v676
        %750 = vmatprep.subr.mxu0 0.0
        %751 = vmatpush1.msra.mxu0 %v675
        %752 = vmatprep.subr.mxu0 0.0
        %753 = vmatpush1.msra.mxu0 %v674
        %754 = vmatprep.subr.mxu0 0.0
        %755 = vmatpush2.msra.mxu0 %v705
        %756 = vmatprep.subr.mxu0 0.0
        %757 = vmatpush2.msra.mxu0 %v704
        %758 = vmatprep.subr.mxu0 0.0
        %759 = vmatpush2.msra.mxu0 %v703
        %760 = vmatprep.subr.mxu0 0.0
        %761 = vmatpush2.msra.mxu0 %v702
        %762 = vmatprep.subr.mxu0 0.0
        %763 = vmatpush2.msra.mxu0 %v701
        %764 = vmatprep.subr.mxu0 0.0
        %765 = vmatpush2.msra.mxu0 %v700
        %766 = vmatprep.subr.mxu0 0.0
        %767 = vmatpush2.msra.mxu0 %v699
        %768 = vmatprep.subr.mxu0 0.0
        %769 = vmatpush2.msra.mxu0 %v698
        %770 = vmatprep.subr.mxu0 0.0
        %771 = vmatpush2.msra.mxu0 %v697
        %772 = vmatprep.subr.mxu0 0.0
        %773 = vmatpush2.msra.mxu0 %v696
        %774 = vmatprep.subr.mxu0 0.0
        %775 = vmatpush2.msra.mxu0 %v695
        %776 = vmatprep.subr.mxu0 0.0
        %777 = vmatpush2.msra.mxu0 %v694
        %778 = vmatprep.subr.mxu0 0.0
        %779 = vmatpush2.msra.mxu0 %v693
        %780 = vmatprep.subr.mxu0 0.0
        %781 = vmatpush2.msra.mxu0 %v692
        %782 = vmatprep.subr.mxu0 0.0
        %783 = vmatpush2.msra.mxu0 %v691
        %784 = vmatprep.subr.mxu0 0.0
        %785 = vmatpush2.msra.mxu0 %v690
        %786 = vmatprep.mubr.f32.mxu0 %v610
        %787 = vmatmul.mubr.f32.gmra.mxu0 %v578
        %v788 = vpop.f32.mrf.mxu0
        %v789 = vadd.f32 0.0, %v788
        %v790 = vpop.f32.mrf.mxu0
        %791 = vmatprep.mubr.f32.mxu0 %v611
        %792 = vmatmul.mubr.f32.gmra.mxu0 %v579
        %v793 = vpop.f32.mrf.mxu0
        %v794 = vadd.f32 0.0, %v793
        %v795 = vpop.f32.mrf.mxu0
        %796 = vmatprep.mubr.f32.mxu0 %v612
        %797 = vmatmul.mubr.f32.gmra.mxu0 %v580
        %v798 = vpop.f32.mrf.mxu0
        %v799 = vadd.f32 0.0, %v798
        %v800 = vpop.f32.mrf.mxu0
        %801 = vmatprep.mubr.f32.mxu0 %v613
        %802 = vmatmul.mubr.f32.gmra.mxu0 %v581
        %v803 = vpop.f32.mrf.mxu0
        %v804 = vadd.f32 0.0, %v803
        %v805 = vpop.f32.mrf.mxu0
        %806 = vmatprep.mubr.f32.mxu0 %v614
        %807 = vmatmul.mubr.f32.gmra.mxu0 %v582
        %v808 = vpop.f32.mrf.mxu0
        %v809 = vadd.f32 0.0, %v808
        %v810 = vpop.f32.mrf.mxu0
        %811 = vmatprep.mubr.f32.mxu0 %v615
        %812 = vmatmul.mubr.f32.gmra.mxu0 %v583
        %v813 = vpop.f32.mrf.mxu0
        %v814 = vadd.f32 0.0, %v813
        %v815 = vpop.f32.mrf.mxu0
        %816 = vmatprep.mubr.f32.mxu0 %v616
        %817 = vmatmul.mubr.f32.gmra.mxu0 %v584
        %v818 = vpop.f32.mrf.mxu0
        %v819 = vadd.f32 0.0, %v818
        %v820 = vpop.f32.mrf.mxu0
        %821 = vmatprep.mubr.f32.mxu0 %v617
        %822 = vmatmul.mubr.f32.gmra.mxu0 %v585
        %v823 = vpop.f32.mrf.mxu0
        %v824 = vadd.f32 0.0, %v823
        %v825 = vpop.f32.mrf.mxu0
        %826 = vmatprep.mubr.f32.mxu0 %v618
        %827 = vmatmul.mubr.f32.gmra.mxu0 %v586
        %v828 = vpop.f32.mrf.mxu0
        %v829 = vadd.f32 0.0, %v828
        %v830 = vpop.f32.mrf.mxu0
        %831 = vmatprep.mubr.f32.mxu0 %v619
        %832 = vmatmul.mubr.f32.gmra.mxu0 %v587
        %v833 = vpop.f32.mrf.mxu0
        %v834 = vadd.f32 0.0, %v833
        %v835 = vpop.f32.mrf.mxu0
        %836 = vmatprep.mubr.f32.mxu0 %v620
        %837 = vmatmul.mubr.f32.gmra.mxu0 %v588
        %v838 = vpop.f32.mrf.mxu0
        %v839 = vadd.f32 0.0, %v838
        %v840 = vpop.f32.mrf.mxu0
        %841 = vmatprep.mubr.f32.mxu0 %v621
        %842 = vmatmul.mubr.f32.gmra.mxu0 %v589
        %v843 = vpop.f32.mrf.mxu0
        %v844 = vadd.f32 0.0, %v843
        %v845 = vpop.f32.mrf.mxu0
        %846 = vmatprep.mubr.f32.mxu0 %v622
        %847 = vmatmul.mubr.f32.gmra.mxu0 %v590
        %v848 = vpop.f32.mrf.mxu0
        %v849 = vadd.f32 0.0, %v848
        %v850 = vpop.f32.mrf.mxu0
        %851 = vmatprep.mubr.f32.mxu0 %v623
        %852 = vmatmul.mubr.f32.gmra.mxu0 %v591
        %v853 = vpop.f32.mrf.mxu0
        %v854 = vadd.f32 0.0, %v853
        %v855 = vpop.f32.mrf.mxu0
        %856 = vmatprep.mubr.f32.mxu0 %v624
        %857 = vmatmul.mubr.f32.gmra.mxu0 %v592
        %v858 = vpop.f32.mrf.mxu0
        %v859 = vadd.f32 0.0, %v858
        %v860 = vpop.f32.mrf.mxu0
        %861 = vmatprep.mubr.f32.mxu0 %v625
        %862 = vmatmul.mubr.f32.gmra.mxu0 %v593
        %v863 = vpop.f32.mrf.mxu0
        %v864 = vadd.f32 0.0, %v863
        %v865 = vpop.f32.mrf.mxu0
        %866 = vmatprep.mubr.f32.mxu0 %v626
        %867 = vmatmul.mubr.f32.gmra.mxu0 %v594
        %v868 = vpop.f32.mrf.mxu0
        %v869 = vadd.f32 0.0, %v868
        %v870 = vpop.f32.mrf.mxu0
        %871 = vmatprep.mubr.f32.mxu0 %v627
        %872 = vmatmul.mubr.f32.gmra.mxu0 %v595
        %v873 = vpop.f32.mrf.mxu0
        %v874 = vadd.f32 0.0, %v873
        %v875 = vpop.f32.mrf.mxu0
        %876 = vmatprep.mubr.f32.mxu0 %v628
        %877 = vmatmul.mubr.f32.gmra.mxu0 %v596
        %v878 = vpop.f32.mrf.mxu0
        %v879 = vadd.f32 0.0, %v878
        %v880 = vpop.f32.mrf.mxu0
        %881 = vmatprep.mubr.f32.mxu0 %v629
        %882 = vmatmul.mubr.f32.gmra.mxu0 %v597
        %v883 = vpop.f32.mrf.mxu0
        %v884 = vadd.f32 0.0, %v883
        %v885 = vpop.f32.mrf.mxu0
        %886 = vmatprep.mubr.f32.mxu0 %v630
        %887 = vmatmul.mubr.f32.gmra.mxu0 %v598
        %v888 = vpop.f32.mrf.mxu0
        %v889 = vadd.f32 0.0, %v888
        %v890 = vpop.f32.mrf.mxu0
        %891 = vmatprep.mubr.f32.mxu0 %v631
        %892 = vmatmul.mubr.f32.gmra.mxu0 %v599
        %v893 = vpop.f32.mrf.mxu0
        %v894 = vadd.f32 0.0, %v893
        %v895 = vpop.f32.mrf.mxu0
        %896 = vmatprep.mubr.f32.mxu0 %v632
        %897 = vmatmul.mubr.f32.gmra.mxu0 %v600
        %v898 = vpop.f32.mrf.mxu0
        %v899 = vadd.f32 0.0, %v898
        %v900 = vpop.f32.mrf.mxu0
        %901 = vmatprep.mubr.f32.mxu0 %v633
        %902 = vmatmul.mubr.f32.gmra.mxu0 %v601
        %v903 = vpop.f32.mrf.mxu0
        %v904 = vadd.f32 0.0, %v903
        %v905 = vpop.f32.mrf.mxu0
        %906 = vmatprep.mubr.f32.mxu0 %v634
        %907 = vmatmul.mubr.f32.gmra.mxu0 %v602
        %v908 = vpop.f32.mrf.mxu0
        %v909 = vadd.f32 0.0, %v908
        %v910 = vpop.f32.mrf.mxu0
        %911 = vmatprep.mubr.f32.mxu0 %v635
        %912 = vmatmul.mubr.f32.gmra.mxu0 %v603
        %v913 = vpop.f32.mrf.mxu0
        %v914 = vadd.f32 0.0, %v913
        %v915 = vpop.f32.mrf.mxu0
        %916 = vmatprep.mubr.f32.mxu0 %v636
        %917 = vmatmul.mubr.f32.gmra.mxu0 %v604
        %v918 = vpop.f32.mrf.mxu0
        %v919 = vadd.f32 0.0, %v918
        %v920 = vpop.f32.mrf.mxu0
        %921 = vmatprep.mubr.f32.mxu0 %v637
        %922 = vmatmul.mubr.f32.gmra.mxu0 %v605
        %v923 = vpop.f32.mrf.mxu0
        %v924 = vadd.f32 0.0, %v923
        %v925 = vpop.f32.mrf.mxu0
        %926 = vmatprep.mubr.f32.mxu0 %v638
        %927 = vmatmul.mubr.f32.gmra.mxu0 %v606
        %v928 = vpop.f32.mrf.mxu0
        %v929 = vadd.f32 0.0, %v928
        %v930 = vpop.f32.mrf.mxu0
        %931 = vmatprep.mubr.f32.mxu0 %v639
        %932 = vmatmul.mubr.f32.gmra.mxu0 %v607
        %v933 = vpop.f32.mrf.mxu0
        %v934 = vadd.f32 0.0, %v933
        %v935 = vpop.f32.mrf.mxu0
        %936 = vmatprep.mubr.f32.mxu0 %v640
        %937 = vmatmul.mubr.f32.gmra.mxu0 %v608
        %v938 = vpop.f32.mrf.mxu0
        %v939 = vadd.f32 0.0, %v938
        %v940 = vpop.f32.mrf.mxu0
        %941 = vmatprep.mubr.f32.mxu0 %v641
        %942 = vmatmul.mubr.f32.gmra.mxu0 %v609
        %v943 = vpop.f32.mrf.mxu0
        %v944 = vadd.f32 0.0, %v943
        %v945 = vpop.f32.mrf.mxu0
        %946 = vdwg.mxu0
        %947 = vmatprep.subr.mxu0 0.0
        %948 = vmatpush1.msra.mxu0 %v721
        %949 = vmatprep.subr.mxu0 0.0
        %950 = vmatpush1.msra.mxu0 %v720
        %951 = vmatprep.subr.mxu0 0.0
        %952 = vmatpush1.msra.mxu0 %v719
        %953 = vmatprep.subr.mxu0 0.0
        %954 = vmatpush1.msra.mxu0 %v718
        %955 = vmatprep.subr.mxu0 0.0
        %956 = vmatpush1.msra.mxu0 %v717
        %957 = vmatprep.subr.mxu0 0.0
        %958 = vmatpush1.msra.mxu0 %v716
        %959 = vmatprep.subr.mxu0 0.0
        %960 = vmatpush1.msra.mxu0 %v715
        %961 = vmatprep.subr.mxu0 0.0
        %962 = vmatpush1.msra.mxu0 %v714
        %963 = vmatprep.subr.mxu0 0.0
        %964 = vmatpush1.msra.mxu0 %v713
        %965 = vmatprep.subr.mxu0 0.0
        %966 = vmatpush1.msra.mxu0 %v712
        %967 = vmatprep.subr.mxu0 0.0
        %968 = vmatpush1.msra.mxu0 %v711
        %969 = vmatprep.subr.mxu0 0.0
        %970 = vmatpush1.msra.mxu0 %v710
        %971 = vmatprep.subr.mxu0 0.0
        %972 = vmatpush1.msra.mxu0 %v709
        %973 = vmatprep.subr.mxu0 0.0
        %974 = vmatpush1.msra.mxu0 %v708
        %975 = vmatprep.subr.mxu0 0.0
        %976 = vmatpush1.msra.mxu0 %v707
        %977 = vmatprep.subr.mxu0 0.0
        %978 = vmatpush1.msra.mxu0 %v706
        %979 = vmatprep.subr.mxu0 0.0
        %980 = vmatpush2.msra.mxu0 0.0
        %981 = vmatprep.subr.mxu0 0.0
        %982 = vmatpush2.msra.mxu0 0.0
        %983 = vmatprep.subr.mxu0 0.0
        %984 = vmatpush2.msra.mxu0 0.0
        %985 = vmatprep.subr.mxu0 0.0
        %986 = vmatpush2.msra.mxu0 0.0
        %987 = vmatprep.subr.mxu0 0.0
        %988 = vmatpush2.msra.mxu0 0.0
        %989 = vmatprep.subr.mxu0 0.0
        %990 = vmatpush2.msra.mxu0 0.0
        %991 = vmatprep.subr.mxu0 0.0
        %992 = vmatpush2.msra.mxu0 0.0
        %993 = vmatprep.subr.mxu0 0.0
        %994 = vmatpush2.msra.mxu0 0.0
        %995 = vmatprep.subr.mxu0 0.0
        %996 = vmatpush2.msra.mxu0 0.0
        %997 = vmatprep.subr.mxu0 0.0
        %998 = vmatpush2.msra.mxu0 0.0
        %999 = vmatprep.subr.mxu0 0.0
        %1000 = vmatpush2.msra.mxu0 0.0
        %1001 = vmatprep.subr.mxu0 0.0
        %1002 = vmatpush2.msra.mxu0 0.0
        %1003 = vmatprep.subr.mxu0 0.0
        %1004 = vmatpush2.msra.mxu0 0.0
        %1005 = vmatprep.subr.mxu0 0.0
        %1006 = vmatpush2.msra.mxu0 0.0
        %1007 = vmatprep.subr.mxu0 0.0
        %1008 = vmatpush2.msra.mxu0 0.0
        %1009 = vmatprep.subr.mxu0 0.0
        %1010 = vmatpush2.msra.mxu0 0.0
        %1011 = vmatprep.mubr.f32.mxu0 0.0
        %1012 = vmatmul.mubr.f32.gmra.mxu0 %v642
        %v1013 = vpop.f32.mrf.mxu0
        %v1014 = vadd.f32 %v789, %v1013
        %v1015 = vpop.f32.mrf.mxu0
        %1016 = vmatprep.mubr.f32.mxu0 0.0
        %1017 = vmatmul.mubr.f32.gmra.mxu0 %v643
        %v1018 = vpop.f32.mrf.mxu0
        %v1019 = vadd.f32 %v794, %v1018
        %v1020 = vpop.f32.mrf.mxu0
        %1021 = vmatprep.mubr.f32.mxu0 0.0
        %1022 = vmatmul.mubr.f32.gmra.mxu0 %v644
        %v1023 = vpop.f32.mrf.mxu0
        %v1024 = vadd.f32 %v799, %v1023
        %v1025 = vpop.f32.mrf.mxu0
        %1026 = vmatprep.mubr.f32.mxu0 0.0
        %1027 = vmatmul.mubr.f32.gmra.mxu0 %v645
        %v1028 = vpop.f32.mrf.mxu0
        %v1029 = vadd.f32 %v804, %v1028
        %v1030 = vpop.f32.mrf.mxu0
        %1031 = vmatprep.mubr.f32.mxu0 0.0
        %1032 = vmatmul.mubr.f32.gmra.mxu0 %v646
        %v1033 = vpop.f32.mrf.mxu0
        %v1034 = vadd.f32 %v809, %v1033
        %v1035 = vpop.f32.mrf.mxu0
        %1036 = vmatprep.mubr.f32.mxu0 0.0
        %1037 = vmatmul.mubr.f32.gmra.mxu0 %v647
        %v1038 = vpop.f32.mrf.mxu0
        %v1039 = vadd.f32 %v814, %v1038
        %v1040 = vpop.f32.mrf.mxu0
        %1041 = vmatprep.mubr.f32.mxu0 0.0
        %1042 = vmatmul.mubr.f32.gmra.mxu0 %v648
        %v1043 = vpop.f32.mrf.mxu0
        %v1044 = vadd.f32 %v819, %v1043
        %v1045 = vpop.f32.mrf.mxu0
        %1046 = vmatprep.mubr.f32.mxu0 0.0
        %1047 = vmatmul.mubr.f32.gmra.mxu0 %v649
        %v1048 = vpop.f32.mrf.mxu0
        %v1049 = vadd.f32 %v824, %v1048
        %v1050 = vpop.f32.mrf.mxu0
        %1051 = vmatprep.mubr.f32.mxu0 0.0
        %1052 = vmatmul.mubr.f32.gmra.mxu0 %v650
        %v1053 = vpop.f32.mrf.mxu0
        %v1054 = vadd.f32 %v829, %v1053
        %v1055 = vpop.f32.mrf.mxu0
        %1056 = vmatprep.mubr.f32.mxu0 0.0
        %1057 = vmatmul.mubr.f32.gmra.mxu0 %v651
        %v1058 = vpop.f32.mrf.mxu0
        %v1059 = vadd.f32 %v834, %v1058
        %v1060 = vpop.f32.mrf.mxu0
        %1061 = vmatprep.mubr.f32.mxu0 0.0
        %1062 = vmatmul.mubr.f32.gmra.mxu0 %v652
        %v1063 = vpop.f32.mrf.mxu0
        %v1064 = vadd.f32 %v839, %v1063
        %v1065 = vpop.f32.mrf.mxu0
        %1066 = vmatprep.mubr.f32.mxu0 0.0
        %1067 = vmatmul.mubr.f32.gmra.mxu0 %v653
        %v1068 = vpop.f32.mrf.mxu0
        %v1069 = vadd.f32 %v844, %v1068
        %v1070 = vpop.f32.mrf.mxu0
        %1071 = vmatprep.mubr.f32.mxu0 0.0
        %1072 = vmatmul.mubr.f32.gmra.mxu0 %v654
        %v1073 = vpop.f32.mrf.mxu0
        %v1074 = vadd.f32 %v849, %v1073
        %v1075 = vpop.f32.mrf.mxu0
        %1076 = vmatprep.mubr.f32.mxu0 0.0
        %1077 = vmatmul.mubr.f32.gmra.mxu0 %v655
        %v1078 = vpop.f32.mrf.mxu0
        %v1079 = vadd.f32 %v854, %v1078
        %v1080 = vpop.f32.mrf.mxu0
        %1081 = vmatprep.mubr.f32.mxu0 0.0
        %1082 = vmatmul.mubr.f32.gmra.mxu0 %v656
        %v1083 = vpop.f32.mrf.mxu0
        %v1084 = vadd.f32 %v859, %v1083
        %v1085 = vpop.f32.mrf.mxu0
        %1086 = vmatprep.mubr.f32.mxu0 0.0
        %1087 = vmatmul.mubr.f32.gmra.mxu0 %v657
        %v1088 = vpop.f32.mrf.mxu0
        %v1089 = vadd.f32 %v864, %v1088
        %v1090 = vpop.f32.mrf.mxu0
        %1091 = vmatprep.mubr.f32.mxu0 0.0
        %1092 = vmatmul.mubr.f32.gmra.mxu0 %v658
        %v1093 = vpop.f32.mrf.mxu0
        %v1094 = vadd.f32 %v869, %v1093
        %v1095 = vpop.f32.mrf.mxu0
        %1096 = vmatprep.mubr.f32.mxu0 0.0
        %1097 = vmatmul.mubr.f32.gmra.mxu0 %v659
        %v1098 = vpop.f32.mrf.mxu0
        %v1099 = vadd.f32 %v874, %v1098
        %v1100 = vpop.f32.mrf.mxu0
        %1101 = vmatprep.mubr.f32.mxu0 0.0
        %1102 = vmatmul.mubr.f32.gmra.mxu0 %v660
        %v1103 = vpop.f32.mrf.mxu0
        %v1104 = vadd.f32 %v879, %v1103
        %v1105 = vpop.f32.mrf.mxu0
        %1106 = vmatprep.mubr.f32.mxu0 0.0
        %1107 = vmatmul.mubr.f32.gmra.mxu0 %v661
        %v1108 = vpop.f32.mrf.mxu0
        %v1109 = vadd.f32 %v884, %v1108
        %v1110 = vpop.f32.mrf.mxu0
        %1111 = vmatprep.mubr.f32.mxu0 0.0
        %1112 = vmatmul.mubr.f32.gmra.mxu0 %v662
        %v1113 = vpop.f32.mrf.mxu0
        %v1114 = vadd.f32 %v889, %v1113
        %v1115 = vpop.f32.mrf.mxu0
        %1116 = vmatprep.mubr.f32.mxu0 0.0
        %1117 = vmatmul.mubr.f32.gmra.mxu0 %v663
        %v1118 = vpop.f32.mrf.mxu0
        %v1119 = vadd.f32 %v894, %v1118
        %v1120 = vpop.f32.mrf.mxu0
        %1121 = vmatprep.mubr.f32.mxu0 0.0
        %1122 = vmatmul.mubr.f32.gmra.mxu0 %v664
        %v1123 = vpop.f32.mrf.mxu0
        %v1124 = vadd.f32 %v899, %v1123
        %v1125 = vpop.f32.mrf.mxu0
        %1126 = vmatprep.mubr.f32.mxu0 0.0
        %1127 = vmatmul.mubr.f32.gmra.mxu0 %v665
        %v1128 = vpop.f32.mrf.mxu0
        %v1129 = vadd.f32 %v904, %v1128
        %v1130 = vpop.f32.mrf.mxu0
        %1131 = vmatprep.mubr.f32.mxu0 0.0
        %1132 = vmatmul.mubr.f32.gmra.mxu0 %v666
        %v1133 = vpop.f32.mrf.mxu0
        %v1134 = vadd.f32 %v909, %v1133
        %v1135 = vpop.f32.mrf.mxu0
        %1136 = vmatprep.mubr.f32.mxu0 0.0
        %1137 = vmatmul.mubr.f32.gmra.mxu0 %v667
        %v1138 = vpop.f32.mrf.mxu0
        %v1139 = vadd.f32 %v914, %v1138
        %v1140 = vpop.f32.mrf.mxu0
        %1141 = vmatprep.mubr.f32.mxu0 0.0
        %1142 = vmatmul.mubr.f32.gmra.mxu0 %v668
        %v1143 = vpop.f32.mrf.mxu0
        %v1144 = vadd.f32 %v919, %v1143
        %v1145 = vpop.f32.mrf.mxu0
        %1146 = vmatprep.mubr.f32.mxu0 0.0
        %1147 = vmatmul.mubr.f32.gmra.mxu0 %v669
        %v1148 = vpop.f32.mrf.mxu0
        %v1149 = vadd.f32 %v924, %v1148
        %v1150 = vpop.f32.mrf.mxu0
        %1151 = vmatprep.mubr.f32.mxu0 0.0
        %1152 = vmatmul.mubr.f32.gmra.mxu0 %v670
        %v1153 = vpop.f32.mrf.mxu0
        %v1154 = vadd.f32 %v929, %v1153
        %v1155 = vpop.f32.mrf.mxu0
        %1156 = vmatprep.mubr.f32.mxu0 0.0
        %1157 = vmatmul.mubr.f32.gmra.mxu0 %v671
        %v1158 = vpop.f32.mrf.mxu0
        %v1159 = vadd.f32 %v934, %v1158
        %v1160 = vpop.f32.mrf.mxu0
        %1161 = vmatprep.mubr.f32.mxu0 0.0
        %1162 = vmatmul.mubr.f32.gmra.mxu0 %v672
        %v1163 = vpop.f32.mrf.mxu0
        %v1164 = vadd.f32 %v939, %v1163
        %v1165 = vpop.f32.mrf.mxu0
        %1166 = vmatprep.mubr.f32.mxu0 0.0
        %1167 = vmatmul.mubr.f32.gmra.mxu0 %v673
        %v1168 = vpop.f32.mrf.mxu0
        %v1169 = vadd.f32 %v944, %v1168
        %v1170 = vpop.f32.mrf.mxu0
        %1171 = vdwg.mxu0
        %1172 = vmatprep.subr.mxu0 0.0
        %1173 = vmatpush1.msra.mxu0 %v545
        %1174 = vmatprep.subr.mxu0 0.0
        %1175 = vmatpush1.msra.mxu0 %v544
        %1176 = vmatprep.subr.mxu0 0.0
        %1177 = vmatpush1.msra.mxu0 %v543
        %1178 = vmatprep.subr.mxu0 0.0
        %1179 = vmatpush1.msra.mxu0 %v542
        %1180 = vmatprep.subr.mxu0 0.0
        %1181 = vmatpush1.msra.mxu0 %v541
        %1182 = vmatprep.subr.mxu0 0.0
        %1183 = vmatpush1.msra.mxu0 %v540
        %1184 = vmatprep.subr.mxu0 0.0
        %1185 = vmatpush1.msra.mxu0 %v539
        %1186 = vmatprep.subr.mxu0 0.0
        %1187 = vmatpush1.msra.mxu0 %v538
        %1188 = vmatprep.subr.mxu0 0.0
        %1189 = vmatpush1.msra.mxu0 %v537
        %1190 = vmatprep.subr.mxu0 0.0
        %1191 = vmatpush1.msra.mxu0 %v536
        %1192 = vmatprep.subr.mxu0 0.0
        %1193 = vmatpush1.msra.mxu0 %v535
        %1194 = vmatprep.subr.mxu0 0.0
        %1195 = vmatpush1.msra.mxu0 %v534
        %1196 = vmatprep.subr.mxu0 0.0
        %1197 = vmatpush1.msra.mxu0 %v533
        %1198 = vmatprep.subr.mxu0 0.0
        %1199 = vmatpush1.msra.mxu0 %v532
        %1200 = vmatprep.subr.mxu0 0.0
        %1201 = vmatpush1.msra.mxu0 %v531
        %1202 = vmatprep.subr.mxu0 0.0
        %1203 = vmatpush1.msra.mxu0 %v530
        %1204 = vmatprep.subr.mxu0 0.0
        %1205 = vmatpush2.msra.mxu0 %v561
        %1206 = vmatprep.subr.mxu0 0.0
        %1207 = vmatpush2.msra.mxu0 %v560
        %1208 = vmatprep.subr.mxu0 0.0
        %1209 = vmatpush2.msra.mxu0 %v559
        %1210 = vmatprep.subr.mxu0 0.0
        %1211 = vmatpush2.msra.mxu0 %v558
        %1212 = vmatprep.subr.mxu0 0.0
        %1213 = vmatpush2.msra.mxu0 %v557
        %1214 = vmatprep.subr.mxu0 0.0
        %1215 = vmatpush2.msra.mxu0 %v556
        %1216 = vmatprep.subr.mxu0 0.0
        %1217 = vmatpush2.msra.mxu0 %v555
        %1218 = vmatprep.subr.mxu0 0.0
        %1219 = vmatpush2.msra.mxu0 %v554
        %1220 = vmatprep.subr.mxu0 0.0
        %1221 = vmatpush2.msra.mxu0 %v553
        %1222 = vmatprep.subr.mxu0 0.0
        %1223 = vmatpush2.msra.mxu0 %v552
        %1224 = vmatprep.subr.mxu0 0.0
        %1225 = vmatpush2.msra.mxu0 %v551
        %1226 = vmatprep.subr.mxu0 0.0
        %1227 = vmatpush2.msra.mxu0 %v550
        %1228 = vmatprep.subr.mxu0 0.0
        %1229 = vmatpush2.msra.mxu0 %v549
        %1230 = vmatprep.subr.mxu0 0.0
        %1231 = vmatpush2.msra.mxu0 %v548
        %1232 = vmatprep.subr.mxu0 0.0
        %1233 = vmatpush2.msra.mxu0 %v547
        %1234 = vmatprep.subr.mxu0 0.0
        %1235 = vmatpush2.msra.mxu0 %v546
        %1236 = vmatprep.mubr.f32.mxu0 %v466
        %1237 = vmatmul.mubr.f32.gmra.mxu0 %v434
        %v1238 = vpop.f32.mrf.mxu0
        %v1239 = vadd.f32 %v1014, %v1238
        %v1240 = vpop.f32.mrf.mxu0
        %1241 = vmatprep.mubr.f32.mxu0 %v467
        %1242 = vmatmul.mubr.f32.gmra.mxu0 %v435
        %v1243 = vpop.f32.mrf.mxu0
        %v1244 = vadd.f32 %v1019, %v1243
        %v1245 = vpop.f32.mrf.mxu0
        %1246 = vmatprep.mubr.f32.mxu0 %v468
        %1247 = vmatmul.mubr.f32.gmra.mxu0 %v436
        %v1248 = vpop.f32.mrf.mxu0
        %v1249 = vadd.f32 %v1024, %v1248
        %v1250 = vpop.f32.mrf.mxu0
        %1251 = vmatprep.mubr.f32.mxu0 %v469
        %1252 = vmatmul.mubr.f32.gmra.mxu0 %v437
        %v1253 = vpop.f32.mrf.mxu0
        %v1254 = vadd.f32 %v1029, %v1253
        %v1255 = vpop.f32.mrf.mxu0
        %1256 = vmatprep.mubr.f32.mxu0 %v470
        %1257 = vmatmul.mubr.f32.gmra.mxu0 %v438
        %v1258 = vpop.f32.mrf.mxu0
        %v1259 = vadd.f32 %v1034, %v1258
        %v1260 = vpop.f32.mrf.mxu0
        %1261 = vmatprep.mubr.f32.mxu0 %v471
        %1262 = vmatmul.mubr.f32.gmra.mxu0 %v439
        %v1263 = vpop.f32.mrf.mxu0
        %v1264 = vadd.f32 %v1039, %v1263
        %v1265 = vpop.f32.mrf.mxu0
        %1266 = vmatprep.mubr.f32.mxu0 %v472
        %1267 = vmatmul.mubr.f32.gmra.mxu0 %v440
        %v1268 = vpop.f32.mrf.mxu0
        %v1269 = vadd.f32 %v1044, %v1268
        %v1270 = vpop.f32.mrf.mxu0
        %1271 = vmatprep.mubr.f32.mxu0 %v473
        %1272 = vmatmul.mubr.f32.gmra.mxu0 %v441
        %v1273 = vpop.f32.mrf.mxu0
        %v1274 = vadd.f32 %v1049, %v1273
        %v1275 = vpop.f32.mrf.mxu0
        %1276 = vmatprep.mubr.f32.mxu0 %v474
        %1277 = vmatmul.mubr.f32.gmra.mxu0 %v442
        %v1278 = vpop.f32.mrf.mxu0
        %v1279 = vadd.f32 %v1054, %v1278
        %v1280 = vpop.f32.mrf.mxu0
        %1281 = vmatprep.mubr.f32.mxu0 %v475
        %1282 = vmatmul.mubr.f32.gmra.mxu0 %v443
        %v1283 = vpop.f32.mrf.mxu0
        %v1284 = vadd.f32 %v1059, %v1283
        %v1285 = vpop.f32.mrf.mxu0
        %1286 = vmatprep.mubr.f32.mxu0 %v476
        %1287 = vmatmul.mubr.f32.gmra.mxu0 %v444
        %v1288 = vpop.f32.mrf.mxu0
        %v1289 = vadd.f32 %v1064, %v1288
        %v1290 = vpop.f32.mrf.mxu0
        %1291 = vmatprep.mubr.f32.mxu0 %v477
        %1292 = vmatmul.mubr.f32.gmra.mxu0 %v445
        %v1293 = vpop.f32.mrf.mxu0
        %v1294 = vadd.f32 %v1069, %v1293
        %v1295 = vpop.f32.mrf.mxu0
        %1296 = vmatprep.mubr.f32.mxu0 %v478
        %1297 = vmatmul.mubr.f32.gmra.mxu0 %v446
        %v1298 = vpop.f32.mrf.mxu0
        %v1299 = vadd.f32 %v1074, %v1298
        %v1300 = vpop.f32.mrf.mxu0
        %1301 = vmatprep.mubr.f32.mxu0 %v479
        %1302 = vmatmul.mubr.f32.gmra.mxu0 %v447
        %v1303 = vpop.f32.mrf.mxu0
        %v1304 = vadd.f32 %v1079, %v1303
        %v1305 = vpop.f32.mrf.mxu0
        %1306 = vmatprep.mubr.f32.mxu0 %v480
        %1307 = vmatmul.mubr.f32.gmra.mxu0 %v448
        %v1308 = vpop.f32.mrf.mxu0
        %v1309 = vadd.f32 %v1084, %v1308
        %v1310 = vpop.f32.mrf.mxu0
        %1311 = vmatprep.mubr.f32.mxu0 %v481
        %1312 = vmatmul.mubr.f32.gmra.mxu0 %v449
        %v1313 = vpop.f32.mrf.mxu0
        %v1314 = vadd.f32 %v1089, %v1313
        %v1315 = vpop.f32.mrf.mxu0
        %1316 = vmatprep.mubr.f32.mxu0 %v482
        %1317 = vmatmul.mubr.f32.gmra.mxu0 %v450
        %v1318 = vpop.f32.mrf.mxu0
        %v1319 = vadd.f32 %v1094, %v1318
        %v1320 = vpop.f32.mrf.mxu0
        %1321 = vmatprep.mubr.f32.mxu0 %v483
        %1322 = vmatmul.mubr.f32.gmra.mxu0 %v451
        %v1323 = vpop.f32.mrf.mxu0
        %v1324 = vadd.f32 %v1099, %v1323
        %v1325 = vpop.f32.mrf.mxu0
        %1326 = vmatprep.mubr.f32.mxu0 %v484
        %1327 = vmatmul.mubr.f32.gmra.mxu0 %v452
        %v1328 = vpop.f32.mrf.mxu0
        %v1329 = vadd.f32 %v1104, %v1328
        %v1330 = vpop.f32.mrf.mxu0
        %1331 = vmatprep.mubr.f32.mxu0 %v485
        %1332 = vmatmul.mubr.f32.gmra.mxu0 %v453
        %v1333 = vpop.f32.mrf.mxu0
        %v1334 = vadd.f32 %v1109, %v1333
        %v1335 = vpop.f32.mrf.mxu0
        %1336 = vmatprep.mubr.f32.mxu0 %v486
        %1337 = vmatmul.mubr.f32.gmra.mxu0 %v454
        %v1338 = vpop.f32.mrf.mxu0
        %v1339 = vadd.f32 %v1114, %v1338
        %v1340 = vpop.f32.mrf.mxu0
        %1341 = vmatprep.mubr.f32.mxu0 %v487
        %1342 = vmatmul.mubr.f32.gmra.mxu0 %v455
        %v1343 = vpop.f32.mrf.mxu0
        %v1344 = vadd.f32 %v1119, %v1343
        %v1345 = vpop.f32.mrf.mxu0
        %1346 = vmatprep.mubr.f32.mxu0 %v488
        %1347 = vmatmul.mubr.f32.gmra.mxu0 %v456
        %v1348 = vpop.f32.mrf.mxu0
        %v1349 = vadd.f32 %v1124, %v1348
        %v1350 = vpop.f32.mrf.mxu0
        %1351 = vmatprep.mubr.f32.mxu0 %v489
        %1352 = vmatmul.mubr.f32.gmra.mxu0 %v457
        %v1353 = vpop.f32.mrf.mxu0
        %v1354 = vadd.f32 %v1129, %v1353
        %v1355 = vpop.f32.mrf.mxu0
        %1356 = vmatprep.mubr.f32.mxu0 %v490
        %1357 = vmatmul.mubr.f32.gmra.mxu0 %v458
        %v1358 = vpop.f32.mrf.mxu0
        %v1359 = vadd.f32 %v1134, %v1358
        %v1360 = vpop.f32.mrf.mxu0
        %1361 = vmatprep.mubr.f32.mxu0 %v491
        %1362 = vmatmul.mubr.f32.gmra.mxu0 %v459
        %v1363 = vpop.f32.mrf.mxu0
        %v1364 = vadd.f32 %v1139, %v1363
        %v1365 = vpop.f32.mrf.mxu0
        %1366 = vmatprep.mubr.f32.mxu0 %v492
        %1367 = vmatmul.mubr.f32.gmra.mxu0 %v460
        %v1368 = vpop.f32.mrf.mxu0
        %v1369 = vadd.f32 %v1144, %v1368
        %v1370 = vpop.f32.mrf.mxu0
        %1371 = vmatprep.mubr.f32.mxu0 %v493
        %1372 = vmatmul.mubr.f32.gmra.mxu0 %v461
        %v1373 = vpop.f32.mrf.mxu0
        %v1374 = vadd.f32 %v1149, %v1373
        %v1375 = vpop.f32.mrf.mxu0
        %1376 = vmatprep.mubr.f32.mxu0 %v494
        %1377 = vmatmul.mubr.f32.gmra.mxu0 %v462
        %v1378 = vpop.f32.mrf.mxu0
        %v1379 = vadd.f32 %v1154, %v1378
        %v1380 = vpop.f32.mrf.mxu0
        %1381 = vmatprep.mubr.f32.mxu0 %v495
        %1382 = vmatmul.mubr.f32.gmra.mxu0 %v463
        %v1383 = vpop.f32.mrf.mxu0
        %v1384 = vadd.f32 %v1159, %v1383
        %v1385 = vpop.f32.mrf.mxu0
        %1386 = vmatprep.mubr.f32.mxu0 %v496
        %1387 = vmatmul.mubr.f32.gmra.mxu0 %v464
        %v1388 = vpop.f32.mrf.mxu0
        %v1389 = vadd.f32 %v1164, %v1388
        %v1390 = vpop.f32.mrf.mxu0
        %1391 = vmatprep.mubr.f32.mxu0 %v497
        %1392 = vmatmul.mubr.f32.gmra.mxu0 %v465
        %v1393 = vpop.f32.mrf.mxu0
        %v1394 = vadd.f32 %v1169, %v1393
        %v1395 = vpop.f32.mrf.mxu0
        %1396 = vdwg.mxu0
        %1397 = vmatprep.subr.mxu0 0.0
        %1398 = vmatpush1.msra.mxu0 %v577
        %1399 = vmatprep.subr.mxu0 0.0
        %1400 = vmatpush1.msra.mxu0 %v576
        %1401 = vmatprep.subr.mxu0 0.0
        %1402 = vmatpush1.msra.mxu0 %v575
        %1403 = vmatprep.subr.mxu0 0.0
        %1404 = vmatpush1.msra.mxu0 %v574
        %1405 = vmatprep.subr.mxu0 0.0
        %1406 = vmatpush1.msra.mxu0 %v573
        %1407 = vmatprep.subr.mxu0 0.0
        %1408 = vmatpush1.msra.mxu0 %v572
        %1409 = vmatprep.subr.mxu0 0.0
        %1410 = vmatpush1.msra.mxu0 %v571
        %1411 = vmatprep.subr.mxu0 0.0
        %1412 = vmatpush1.msra.mxu0 %v570
        %1413 = vmatprep.subr.mxu0 0.0
        %1414 = vmatpush1.msra.mxu0 %v569
        %1415 = vmatprep.subr.mxu0 0.0
        %1416 = vmatpush1.msra.mxu0 %v568
        %1417 = vmatprep.subr.mxu0 0.0
        %1418 = vmatpush1.msra.mxu0 %v567
        %1419 = vmatprep.subr.mxu0 0.0
        %1420 = vmatpush1.msra.mxu0 %v566
        %1421 = vmatprep.subr.mxu0 0.0
        %1422 = vmatpush1.msra.mxu0 %v565
        %1423 = vmatprep.subr.mxu0 0.0
        %1424 = vmatpush1.msra.mxu0 %v564
        %1425 = vmatprep.subr.mxu0 0.0
        %1426 = vmatpush1.msra.mxu0 %v563
        %1427 = vmatprep.subr.mxu0 0.0
        %1428 = vmatpush1.msra.mxu0 %v562
        %1429 = vmatprep.subr.mxu0 0.0
        %1430 = vmatpush2.msra.mxu0 0.0
        %1431 = vmatprep.subr.mxu0 0.0
        %1432 = vmatpush2.msra.mxu0 0.0
        %1433 = vmatprep.subr.mxu0 0.0
        %1434 = vmatpush2.msra.mxu0 0.0
        %1435 = vmatprep.subr.mxu0 0.0
        %1436 = vmatpush2.msra.mxu0 0.0
        %1437 = vmatprep.subr.mxu0 0.0
        %1438 = vmatpush2.msra.mxu0 0.0
        %1439 = vmatprep.subr.mxu0 0.0
        %1440 = vmatpush2.msra.mxu0 0.0
        %1441 = vmatprep.subr.mxu0 0.0
        %1442 = vmatpush2.msra.mxu0 0.0
        %1443 = vmatprep.subr.mxu0 0.0
        %1444 = vmatpush2.msra.mxu0 0.0
        %1445 = vmatprep.subr.mxu0 0.0
        %1446 = vmatpush2.msra.mxu0 0.0
        %1447 = vmatprep.subr.mxu0 0.0
        %1448 = vmatpush2.msra.mxu0 0.0
        %1449 = vmatprep.subr.mxu0 0.0
        %1450 = vmatpush2.msra.mxu0 0.0
        %1451 = vmatprep.subr.mxu0 0.0
        %1452 = vmatpush2.msra.mxu0 0.0
        %1453 = vmatprep.subr.mxu0 0.0
        %1454 = vmatpush2.msra.mxu0 0.0
        %1455 = vmatprep.subr.mxu0 0.0
        %1456 = vmatpush2.msra.mxu0 0.0
        %1457 = vmatprep.subr.mxu0 0.0
        %1458 = vmatpush2.msra.mxu0 0.0
        %1459 = vmatprep.subr.mxu0 0.0
        %1460 = vmatpush2.msra.mxu0 0.0
        %1461 = vmatprep.mubr.f32.mxu0 0.0
        %1462 = vmatmul.mubr.f32.gmra.mxu0 %v498
        %v1463 = vpop.f32.mrf.mxu0
        %v1464 = vadd.f32 %v1239, %v1463
        %v1465 = vpop.f32.mrf.mxu0
        %1466 = vmatprep.mubr.f32.mxu0 0.0
        %1467 = vmatmul.mubr.f32.gmra.mxu0 %v499
        %v1468 = vpop.f32.mrf.mxu0
        %v1469 = vadd.f32 %v1244, %v1468
        %v1470 = vpop.f32.mrf.mxu0
        %1471 = vmatprep.mubr.f32.mxu0 0.0
        %1472 = vmatmul.mubr.f32.gmra.mxu0 %v500
        %v1473 = vpop.f32.mrf.mxu0
        %v1474 = vadd.f32 %v1249, %v1473
        %v1475 = vpop.f32.mrf.mxu0
        %1476 = vmatprep.mubr.f32.mxu0 0.0
        %1477 = vmatmul.mubr.f32.gmra.mxu0 %v501
        %v1478 = vpop.f32.mrf.mxu0
        %v1479 = vadd.f32 %v1254, %v1478
        %v1480 = vpop.f32.mrf.mxu0
        %1481 = vmatprep.mubr.f32.mxu0 0.0
        %1482 = vmatmul.mubr.f32.gmra.mxu0 %v502
        %v1483 = vpop.f32.mrf.mxu0
        %v1484 = vadd.f32 %v1259, %v1483
        %v1485 = vpop.f32.mrf.mxu0
        %1486 = vmatprep.mubr.f32.mxu0 0.0
        %1487 = vmatmul.mubr.f32.gmra.mxu0 %v503
        %v1488 = vpop.f32.mrf.mxu0
        %v1489 = vadd.f32 %v1264, %v1488
        %v1490 = vpop.f32.mrf.mxu0
        %1491 = vmatprep.mubr.f32.mxu0 0.0
        %1492 = vmatmul.mubr.f32.gmra.mxu0 %v504
        %v1493 = vpop.f32.mrf.mxu0
        %v1494 = vadd.f32 %v1269, %v1493
        %v1495 = vpop.f32.mrf.mxu0
        %1496 = vmatprep.mubr.f32.mxu0 0.0
        %1497 = vmatmul.mubr.f32.gmra.mxu0 %v505
        %v1498 = vpop.f32.mrf.mxu0
        %v1499 = vadd.f32 %v1274, %v1498
        %v1500 = vpop.f32.mrf.mxu0
        %1501 = vmatprep.mubr.f32.mxu0 0.0
        %1502 = vmatmul.mubr.f32.gmra.mxu0 %v506
        %v1503 = vpop.f32.mrf.mxu0
        %v1504 = vadd.f32 %v1279, %v1503
        %v1505 = vpop.f32.mrf.mxu0
        %1506 = vmatprep.mubr.f32.mxu0 0.0
        %1507 = vmatmul.mubr.f32.gmra.mxu0 %v507
        %v1508 = vpop.f32.mrf.mxu0
        %v1509 = vadd.f32 %v1284, %v1508
        %v1510 = vpop.f32.mrf.mxu0
        %1511 = vmatprep.mubr.f32.mxu0 0.0
        %1512 = vmatmul.mubr.f32.gmra.mxu0 %v508
        %v1513 = vpop.f32.mrf.mxu0
        %v1514 = vadd.f32 %v1289, %v1513
        %v1515 = vpop.f32.mrf.mxu0
        %1516 = vmatprep.mubr.f32.mxu0 0.0
        %1517 = vmatmul.mubr.f32.gmra.mxu0 %v509
        %v1518 = vpop.f32.mrf.mxu0
        %v1519 = vadd.f32 %v1294, %v1518
        %v1520 = vpop.f32.mrf.mxu0
        %1521 = vmatprep.mubr.f32.mxu0 0.0
        %1522 = vmatmul.mubr.f32.gmra.mxu0 %v510
        %v1523 = vpop.f32.mrf.mxu0
        %v1524 = vadd.f32 %v1299, %v1523
        %v1525 = vpop.f32.mrf.mxu0
        %1526 = vmatprep.mubr.f32.mxu0 0.0
        %1527 = vmatmul.mubr.f32.gmra.mxu0 %v511
        %v1528 = vpop.f32.mrf.mxu0
        %v1529 = vadd.f32 %v1304, %v1528
        %v1530 = vpop.f32.mrf.mxu0
        %1531 = vmatprep.mubr.f32.mxu0 0.0
        %1532 = vmatmul.mubr.f32.gmra.mxu0 %v512
        %v1533 = vpop.f32.mrf.mxu0
        %v1534 = vadd.f32 %v1309, %v1533
        %v1535 = vpop.f32.mrf.mxu0
        %1536 = vmatprep.mubr.f32.mxu0 0.0
        %1537 = vmatmul.mubr.f32.gmra.mxu0 %v513
        %v1538 = vpop.f32.mrf.mxu0
        %v1539 = vadd.f32 %v1314, %v1538
        %v1540 = vpop.f32.mrf.mxu0
        %1541 = vmatprep.mubr.f32.mxu0 0.0
        %1542 = vmatmul.mubr.f32.gmra.mxu0 %v514
        %v1543 = vpop.f32.mrf.mxu0
        %v1544 = vadd.f32 %v1319, %v1543
        %v1545 = vpop.f32.mrf.mxu0
        %1546 = vmatprep.mubr.f32.mxu0 0.0
        %1547 = vmatmul.mubr.f32.gmra.mxu0 %v515
        %v1548 = vpop.f32.mrf.mxu0
        %v1549 = vadd.f32 %v1324, %v1548
        %v1550 = vpop.f32.mrf.mxu0
        %1551 = vmatprep.mubr.f32.mxu0 0.0
        %1552 = vmatmul.mubr.f32.gmra.mxu0 %v516
        %v1553 = vpop.f32.mrf.mxu0
        %v1554 = vadd.f32 %v1329, %v1553
        %v1555 = vpop.f32.mrf.mxu0
        %1556 = vmatprep.mubr.f32.mxu0 0.0
        %1557 = vmatmul.mubr.f32.gmra.mxu0 %v517
        %v1558 = vpop.f32.mrf.mxu0
        %v1559 = vadd.f32 %v1334, %v1558
        %v1560 = vpop.f32.mrf.mxu0
        %1561 = vmatprep.mubr.f32.mxu0 0.0
        %1562 = vmatmul.mubr.f32.gmra.mxu0 %v518
        %v1563 = vpop.f32.mrf.mxu0
        %v1564 = vadd.f32 %v1339, %v1563
        %v1565 = vpop.f32.mrf.mxu0
        %1566 = vmatprep.mubr.f32.mxu0 0.0
        %1567 = vmatmul.mubr.f32.gmra.mxu0 %v519
        %v1568 = vpop.f32.mrf.mxu0
        %v1569 = vadd.f32 %v1344, %v1568
        %v1570 = vpop.f32.mrf.mxu0
        %1571 = vmatprep.mubr.f32.mxu0 0.0
        %1572 = vmatmul.mubr.f32.gmra.mxu0 %v520
        %v1573 = vpop.f32.mrf.mxu0
        %v1574 = vadd.f32 %v1349, %v1573
        %v1575 = vpop.f32.mrf.mxu0
        %1576 = vmatprep.mubr.f32.mxu0 0.0
        %1577 = vmatmul.mubr.f32.gmra.mxu0 %v521
        %v1578 = vpop.f32.mrf.mxu0
        %v1579 = vadd.f32 %v1354, %v1578
        %v1580 = vpop.f32.mrf.mxu0
        %1581 = vmatprep.mubr.f32.mxu0 0.0
        %1582 = vmatmul.mubr.f32.gmra.mxu0 %v522
        %v1583 = vpop.f32.mrf.mxu0
        %v1584 = vadd.f32 %v1359, %v1583
        %v1585 = vpop.f32.mrf.mxu0
        %1586 = vmatprep.mubr.f32.mxu0 0.0
        %1587 = vmatmul.mubr.f32.gmra.mxu0 %v523
        %v1588 = vpop.f32.mrf.mxu0
        %v1589 = vadd.f32 %v1364, %v1588
        %v1590 = vpop.f32.mrf.mxu0
        %1591 = vmatprep.mubr.f32.mxu0 0.0
        %1592 = vmatmul.mubr.f32.gmra.mxu0 %v524
        %v1593 = vpop.f32.mrf.mxu0
        %v1594 = vadd.f32 %v1369, %v1593
        %v1595 = vpop.f32.mrf.mxu0
        %1596 = vmatprep.mubr.f32.mxu0 0.0
        %1597 = vmatmul.mubr.f32.gmra.mxu0 %v525
        %v1598 = vpop.f32.mrf.mxu0
        %v1599 = vadd.f32 %v1374, %v1598
        %v1600 = vpop.f32.mrf.mxu0
        %1601 = vmatprep.mubr.f32.mxu0 0.0
        %1602 = vmatmul.mubr.f32.gmra.mxu0 %v526
        %v1603 = vpop.f32.mrf.mxu0
        %v1604 = vadd.f32 %v1379, %v1603
        %v1605 = vpop.f32.mrf.mxu0
        %1606 = vmatprep.mubr.f32.mxu0 0.0
        %1607 = vmatmul.mubr.f32.gmra.mxu0 %v527
        %v1608 = vpop.f32.mrf.mxu0
        %v1609 = vadd.f32 %v1384, %v1608
        %v1610 = vpop.f32.mrf.mxu0
        %1611 = vmatprep.mubr.f32.mxu0 0.0
        %1612 = vmatmul.mubr.f32.gmra.mxu0 %v528
        %v1613 = vpop.f32.mrf.mxu0
        %v1614 = vadd.f32 %v1389, %v1613
        %v1615 = vpop.f32.mrf.mxu0
        %1616 = vmatprep.mubr.f32.mxu0 0.0
        %1617 = vmatmul.mubr.f32.gmra.mxu0 %v529
        %v1618 = vpop.f32.mrf.mxu0
        %v1619 = vadd.f32 %v1394, %v1618
        %v1620 = vpop.f32.mrf.mxu0
        %1621 = vdwg.mxu0
        %s1622 = scalar_lea.vmem [#allocation2], 48
        %v1623 = vld [vmem:[%s1622] sm:$0xff]
        %v1624 = vld [vmem:[%s1622 + $0x8] sm:$0xff]
        %v1625 = vld [vmem:[%s1622 + $0x18] sm:$0xff]
        %v1626 = vld [vmem:[%s1622 + $0x20] sm:$0xff]
        %v1627 = vld [vmem:[%s1622 + $0x30] sm:$0xff]
        %v1628 = vld [vmem:[%s1622 + $0x38] sm:$0xff]
        %v1629 = vld [vmem:[%s1622 + $0x48] sm:$0xff]
        %v1630 = vld [vmem:[%s1622 + $0x50] sm:$0xff]
        %v1631 = vld [vmem:[%s1622 + $0x60] sm:$0xff]
        %v1632 = vld [vmem:[%s1622 + $0x68] sm:$0xff]
        %v1633 = vld [vmem:[%s1622 + $0x78] sm:$0xff]
        %v1634 = vld [vmem:[%s1622 + $0x80] sm:$0xff]
        %v1635 = vld [vmem:[%s1622 + $0x90] sm:$0xff]
        %v1636 = vld [vmem:[%s1622 + $0x98] sm:$0xff]
        %v1637 = vld [vmem:[%s1622 + $0xa8] sm:$0xff]
        %v1638 = vld [vmem:[%s1622 + $0xb0] sm:$0xff]
        %v1639 = vld [vmem:[%s1622 + $0xc0] sm:$0xff]
        %v1640 = vld [vmem:[%s1622 + $0xc8] sm:$0xff]
        %v1641 = vld [vmem:[%s1622 + $0xd8] sm:$0xff]
        %v1642 = vld [vmem:[%s1622 + $0xe0] sm:$0xff]
        %v1643 = vld [vmem:[%s1622 + $0xf0] sm:$0xff]
        %v1644 = vld [vmem:[%s1622 + $0xf8] sm:$0xff]
        %v1645 = vld [vmem:[%s1622 + $0x108] sm:$0xff]
        %v1646 = vld [vmem:[%s1622 + $0x110] sm:$0xff]
        %v1647 = vld [vmem:[%s1622 + $0x120] sm:$0xff]
        %v1648 = vld [vmem:[%s1622 + $0x128] sm:$0xff]
        %v1649 = vld [vmem:[%s1622 + $0x138] sm:$0xff]
        %v1650 = vld [vmem:[%s1622 + $0x140] sm:$0xff]
        %v1651 = vld [vmem:[%s1622 + $0x150] sm:$0xff]
        %v1652 = vld [vmem:[%s1622 + $0x158] sm:$0xff]
        %v1653 = vld [vmem:[%s1622 + $0x168] sm:$0xff]
        %v1654 = vld [vmem:[%s1622 + $0x170] sm:$0xff]
        %v1655 = vld [vmem:[%s1622 + $0x1] sm:$0xff]
        %v1656 = vld [vmem:[%s1622 + $0x9] sm:$0xff]
        %v1657 = vld [vmem:[%s1622 + $0x19] sm:$0xff]
        %v1658 = vld [vmem:[%s1622 + $0x21] sm:$0xff]
        %v1659 = vld [vmem:[%s1622 + $0x31] sm:$0xff]
        %v1660 = vld [vmem:[%s1622 + $0x39] sm:$0xff]
        %v1661 = vld [vmem:[%s1622 + $0x49] sm:$0xff]
        %v1662 = vld [vmem:[%s1622 + $0x51] sm:$0xff]
        %v1663 = vld [vmem:[%s1622 + $0x61] sm:$0xff]
        %v1664 = vld [vmem:[%s1622 + $0x69] sm:$0xff]
        %v1665 = vld [vmem:[%s1622 + $0x79] sm:$0xff]
        %v1666 = vld [vmem:[%s1622 + $0x81] sm:$0xff]
        %v1667 = vld [vmem:[%s1622 + $0x91] sm:$0xff]
        %v1668 = vld [vmem:[%s1622 + $0x99] sm:$0xff]
        %v1669 = vld [vmem:[%s1622 + $0xa9] sm:$0xff]
        %v1670 = vld [vmem:[%s1622 + $0xb1] sm:$0xff]
        %v1671 = vld [vmem:[%s1622 + $0xc1] sm:$0xff]
        %v1672 = vld [vmem:[%s1622 + $0xc9] sm:$0xff]
        %v1673 = vld [vmem:[%s1622 + $0xd9] sm:$0xff]
        %v1674 = vld [vmem:[%s1622 + $0xe1] sm:$0xff]
        %v1675 = vld [vmem:[%s1622 + $0xf1] sm:$0xff]
        %v1676 = vld [vmem:[%s1622 + $0xf9] sm:$0xff]
        %v1677 = vld [vmem:[%s1622 + $0x109] sm:$0xff]
        %v1678 = vld [vmem:[%s1622 + $0x111] sm:$0xff]
        %v1679 = vld [vmem:[%s1622 + $0x121] sm:$0xff]
        %v1680 = vld [vmem:[%s1622 + $0x129] sm:$0xff]
        %v1681 = vld [vmem:[%s1622 + $0x139] sm:$0xff]
        %v1682 = vld [vmem:[%s1622 + $0x141] sm:$0xff]
        %v1683 = vld [vmem:[%s1622 + $0x151] sm:$0xff]
        %v1684 = vld [vmem:[%s1622 + $0x159] sm:$0xff]
        %v1685 = vld [vmem:[%s1622 + $0x169] sm:$0xff]
        %v1686 = vld [vmem:[%s1622 + $0x171] sm:$0xff]
        %v1687 = vld [vmem:[%s1622 + $0x2] sm:$0xff]
        %v1688 = vld [vmem:[%s1622 + $0xa] sm:$0xff]
        %v1689 = vld [vmem:[%s1622 + $0x1a] sm:$0xff]
        %v1690 = vld [vmem:[%s1622 + $0x22] sm:$0xff]
        %v1691 = vld [vmem:[%s1622 + $0x32] sm:$0xff]
        %v1692 = vld [vmem:[%s1622 + $0x3a] sm:$0xff]
        %v1693 = vld [vmem:[%s1622 + $0x4a] sm:$0xff]
        %v1694 = vld [vmem:[%s1622 + $0x52] sm:$0xff]
        %v1695 = vld [vmem:[%s1622 + $0x62] sm:$0xff]
        %v1696 = vld [vmem:[%s1622 + $0x6a] sm:$0xff]
        %v1697 = vld [vmem:[%s1622 + $0x7a] sm:$0xff]
        %v1698 = vld [vmem:[%s1622 + $0x82] sm:$0xff]
        %v1699 = vld [vmem:[%s1622 + $0x92] sm:$0xff]
        %v1700 = vld [vmem:[%s1622 + $0x9a] sm:$0xff]
        %v1701 = vld [vmem:[%s1622 + $0xaa] sm:$0xff]
        %v1702 = vld [vmem:[%s1622 + $0xb2] sm:$0xff]
        %v1703 = vld [vmem:[%s1622 + $0xc2] sm:$0xff]
        %v1704 = vld [vmem:[%s1622 + $0xca] sm:$0xff]
        %v1705 = vld [vmem:[%s1622 + $0xda] sm:$0xff]
        %v1706 = vld [vmem:[%s1622 + $0xe2] sm:$0xff]
        %v1707 = vld [vmem:[%s1622 + $0xf2] sm:$0xff]
        %v1708 = vld [vmem:[%s1622 + $0xfa] sm:$0xff]
        %v1709 = vld [vmem:[%s1622 + $0x10a] sm:$0xff]
        %v1710 = vld [vmem:[%s1622 + $0x112] sm:$0xff]
        %v1711 = vld [vmem:[%s1622 + $0x122] sm:$0xff]
        %v1712 = vld [vmem:[%s1622 + $0x12a] sm:$0xff]
        %v1713 = vld [vmem:[%s1622 + $0x13a] sm:$0xff]
        %v1714 = vld [vmem:[%s1622 + $0x142] sm:$0xff]
        %v1715 = vld [vmem:[%s1622 + $0x152] sm:$0xff]
        %v1716 = vld [vmem:[%s1622 + $0x15a] sm:$0xff]
        %v1717 = vld [vmem:[%s1622 + $0x16a] sm:$0xff]
        %v1718 = vld [vmem:[%s1622 + $0x172] sm:$0xff]
        %v1719 = vld [vmem:[#allocation6 + $0x300] sm:$0xff]
        %v1720 = vld [vmem:[#allocation6 + $0x308] sm:$0xff]
        %v1721 = vld [vmem:[#allocation6 + $0x310] sm:$0xff]
        %v1722 = vld [vmem:[#allocation6 + $0x318] sm:$0xff]
        %v1723 = vld [vmem:[#allocation6 + $0x320] sm:$0xff]
        %v1724 = vld [vmem:[#allocation6 + $0x328] sm:$0xff]
        %v1725 = vld [vmem:[#allocation6 + $0x330] sm:$0xff]
        %v1726 = vld [vmem:[#allocation6 + $0x338] sm:$0xff]
        %v1727 = vld [vmem:[#allocation6 + $0x340] sm:$0xff]
        %v1728 = vld [vmem:[#allocation6 + $0x348] sm:$0xff]
        %v1729 = vld [vmem:[#allocation6 + $0x350] sm:$0xff]
        %v1730 = vld [vmem:[#allocation6 + $0x358] sm:$0xff]
        %v1731 = vld [vmem:[#allocation6 + $0x360] sm:$0xff]
        %v1732 = vld [vmem:[#allocation6 + $0x368] sm:$0xff]
        %v1733 = vld [vmem:[#allocation6 + $0x370] sm:$0xff]
        %v1734 = vld [vmem:[#allocation6 + $0x378] sm:$0xff]
        %v1735 = vld [vmem:[#allocation6 + $0x380] sm:$0xff]
        %v1736 = vld [vmem:[#allocation6 + $0x388] sm:$0xff]
        %v1737 = vld [vmem:[#allocation6 + $0x390] sm:$0xff]
        %v1738 = vld [vmem:[#allocation6 + $0x398] sm:$0xff]
        %v1739 = vld [vmem:[#allocation6 + $0x3a0] sm:$0xff]
        %v1740 = vld [vmem:[#allocation6 + $0x3a8] sm:$0xff]
        %v1741 = vld [vmem:[#allocation6 + $0x3b0] sm:$0xff]
        %v1742 = vld [vmem:[#allocation6 + $0x3b8] sm:$0xff]
        %v1743 = vld [vmem:[#allocation6 + $0x3c0] sm:$0xff]
        %v1744 = vld [vmem:[#allocation6 + $0x3c8] sm:$0xff]
        %v1745 = vld [vmem:[#allocation6 + $0x3d0] sm:$0xff]
        %v1746 = vld [vmem:[#allocation6 + $0x3d8] sm:$0xff]
        %v1747 = vld [vmem:[#allocation6 + $0x3e0] sm:$0xff]
        %v1748 = vld [vmem:[#allocation6 + $0x3e8] sm:$0xff]
        %v1749 = vld [vmem:[#allocation6 + $0x3f0] sm:$0xff]
        %v1750 = vld [vmem:[#allocation6 + $0x3f8] sm:$0xff]
        %v1751 = vld [vmem:[#allocation6 + $0x400] sm:$0xff]
        %v1752 = vld [vmem:[#allocation6 + $0x408] sm:$0xff]
        %v1753 = vld [vmem:[#allocation6 + $0x410] sm:$0xff]
        %v1754 = vld [vmem:[#allocation6 + $0x418] sm:$0xff]
        %v1755 = vld [vmem:[#allocation6 + $0x420] sm:$0xff]
        %v1756 = vld [vmem:[#allocation6 + $0x428] sm:$0xff]
        %v1757 = vld [vmem:[#allocation6 + $0x430] sm:$0xff]
        %v1758 = vld [vmem:[#allocation6 + $0x438] sm:$0xff]
        %v1759 = vld [vmem:[#allocation6 + $0x440] sm:$0xff]
        %v1760 = vld [vmem:[#allocation6 + $0x448] sm:$0xff]
        %v1761 = vld [vmem:[#allocation6 + $0x450] sm:$0xff]
        %v1762 = vld [vmem:[#allocation6 + $0x458] sm:$0xff]
        %v1763 = vld [vmem:[#allocation6 + $0x460] sm:$0xff]
        %v1764 = vld [vmem:[#allocation6 + $0x468] sm:$0xff]
        %v1765 = vld [vmem:[#allocation6 + $0x470] sm:$0xff]
        %v1766 = vld [vmem:[#allocation6 + $0x478] sm:$0xff]
        %1767 = vmatprep.subr.mxu0 0.0
        %1768 = vmatpush1.msra.mxu0 %v1734
        %1769 = vmatprep.subr.mxu0 0.0
        %1770 = vmatpush1.msra.mxu0 %v1733
        %1771 = vmatprep.subr.mxu0 0.0
        %1772 = vmatpush1.msra.mxu0 %v1732
        %1773 = vmatprep.subr.mxu0 0.0
        %1774 = vmatpush1.msra.mxu0 %v1731
        %1775 = vmatprep.subr.mxu0 0.0
        %1776 = vmatpush1.msra.mxu0 %v1730
        %1777 = vmatprep.subr.mxu0 0.0
        %1778 = vmatpush1.msra.mxu0 %v1729
        %1779 = vmatprep.subr.mxu0 0.0
        %1780 = vmatpush1.msra.mxu0 %v1728
        %1781 = vmatprep.subr.mxu0 0.0
        %1782 = vmatpush1.msra.mxu0 %v1727
        %1783 = vmatprep.subr.mxu0 0.0
        %1784 = vmatpush1.msra.mxu0 %v1726
        %1785 = vmatprep.subr.mxu0 0.0
        %1786 = vmatpush1.msra.mxu0 %v1725
        %1787 = vmatprep.subr.mxu0 0.0
        %1788 = vmatpush1.msra.mxu0 %v1724
        %1789 = vmatprep.subr.mxu0 0.0
        %1790 = vmatpush1.msra.mxu0 %v1723
        %1791 = vmatprep.subr.mxu0 0.0
        %1792 = vmatpush1.msra.mxu0 %v1722
        %1793 = vmatprep.subr.mxu0 0.0
        %1794 = vmatpush1.msra.mxu0 %v1721
        %1795 = vmatprep.subr.mxu0 0.0
        %1796 = vmatpush1.msra.mxu0 %v1720
        %1797 = vmatprep.subr.mxu0 0.0
        %1798 = vmatpush1.msra.mxu0 %v1719
        %1799 = vmatprep.subr.mxu0 0.0
        %1800 = vmatpush2.msra.mxu0 %v1750
        %1801 = vmatprep.subr.mxu0 0.0
        %1802 = vmatpush2.msra.mxu0 %v1749
        %1803 = vmatprep.subr.mxu0 0.0
        %1804 = vmatpush2.msra.mxu0 %v1748
        %1805 = vmatprep.subr.mxu0 0.0
        %1806 = vmatpush2.msra.mxu0 %v1747
        %1807 = vmatprep.subr.mxu0 0.0
        %1808 = vmatpush2.msra.mxu0 %v1746
        %1809 = vmatprep.subr.mxu0 0.0
        %1810 = vmatpush2.msra.mxu0 %v1745
        %1811 = vmatprep.subr.mxu0 0.0
        %1812 = vmatpush2.msra.mxu0 %v1744
        %1813 = vmatprep.subr.mxu0 0.0
        %1814 = vmatpush2.msra.mxu0 %v1743
        %1815 = vmatprep.subr.mxu0 0.0
        %1816 = vmatpush2.msra.mxu0 %v1742
        %1817 = vmatprep.subr.mxu0 0.0
        %1818 = vmatpush2.msra.mxu0 %v1741
        %1819 = vmatprep.subr.mxu0 0.0
        %1820 = vmatpush2.msra.mxu0 %v1740
        %1821 = vmatprep.subr.mxu0 0.0
        %1822 = vmatpush2.msra.mxu0 %v1739
        %1823 = vmatprep.subr.mxu0 0.0
        %1824 = vmatpush2.msra.mxu0 %v1738
        %1825 = vmatprep.subr.mxu0 0.0
        %1826 = vmatpush2.msra.mxu0 %v1737
        %1827 = vmatprep.subr.mxu0 0.0
        %1828 = vmatpush2.msra.mxu0 %v1736
        %1829 = vmatprep.subr.mxu0 0.0
        %1830 = vmatpush2.msra.mxu0 %v1735
        %1831 = vmatprep.mubr.f32.mxu0 %v1655
        %1832 = vmatmul.mubr.f32.gmra.mxu0 %v1623
        %v1833 = vpop.f32.mrf.mxu0
        %v1834 = vadd.f32 0.0, %v1833
        %v1835 = vpop.f32.mrf.mxu0
        %1836 = vmatprep.mubr.f32.mxu0 %v1656
        %1837 = vmatmul.mubr.f32.gmra.mxu0 %v1624
        %v1838 = vpop.f32.mrf.mxu0
        %v1839 = vadd.f32 0.0, %v1838
        %v1840 = vpop.f32.mrf.mxu0
        %1841 = vmatprep.mubr.f32.mxu0 %v1657
        %1842 = vmatmul.mubr.f32.gmra.mxu0 %v1625
        %v1843 = vpop.f32.mrf.mxu0
        %v1844 = vadd.f32 0.0, %v1843
        %v1845 = vpop.f32.mrf.mxu0
        %1846 = vmatprep.mubr.f32.mxu0 %v1658
        %1847 = vmatmul.mubr.f32.gmra.mxu0 %v1626
        %v1848 = vpop.f32.mrf.mxu0
        %v1849 = vadd.f32 0.0, %v1848
        %v1850 = vpop.f32.mrf.mxu0
        %1851 = vmatprep.mubr.f32.mxu0 %v1659
        %1852 = vmatmul.mubr.f32.gmra.mxu0 %v1627
        %v1853 = vpop.f32.mrf.mxu0
        %v1854 = vadd.f32 0.0, %v1853
        %v1855 = vpop.f32.mrf.mxu0
        %1856 = vmatprep.mubr.f32.mxu0 %v1660
        %1857 = vmatmul.mubr.f32.gmra.mxu0 %v1628
        %v1858 = vpop.f32.mrf.mxu0
        %v1859 = vadd.f32 0.0, %v1858
        %v1860 = vpop.f32.mrf.mxu0
        %1861 = vmatprep.mubr.f32.mxu0 %v1661
        %1862 = vmatmul.mubr.f32.gmra.mxu0 %v1629
        %v1863 = vpop.f32.mrf.mxu0
        %v1864 = vadd.f32 0.0, %v1863
        %v1865 = vpop.f32.mrf.mxu0
        %1866 = vmatprep.mubr.f32.mxu0 %v1662
        %1867 = vmatmul.mubr.f32.gmra.mxu0 %v1630
        %v1868 = vpop.f32.mrf.mxu0
        %v1869 = vadd.f32 0.0, %v1868
        %v1870 = vpop.f32.mrf.mxu0
        %1871 = vmatprep.mubr.f32.mxu0 %v1663
        %1872 = vmatmul.mubr.f32.gmra.mxu0 %v1631
        %v1873 = vpop.f32.mrf.mxu0
        %v1874 = vadd.f32 0.0, %v1873
        %v1875 = vpop.f32.mrf.mxu0
        %1876 = vmatprep.mubr.f32.mxu0 %v1664
        %1877 = vmatmul.mubr.f32.gmra.mxu0 %v1632
        %v1878 = vpop.f32.mrf.mxu0
        %v1879 = vadd.f32 0.0, %v1878
        %v1880 = vpop.f32.mrf.mxu0
        %1881 = vmatprep.mubr.f32.mxu0 %v1665
        %1882 = vmatmul.mubr.f32.gmra.mxu0 %v1633
        %v1883 = vpop.f32.mrf.mxu0
        %v1884 = vadd.f32 0.0, %v1883
        %v1885 = vpop.f32.mrf.mxu0
        %1886 = vmatprep.mubr.f32.mxu0 %v1666
        %1887 = vmatmul.mubr.f32.gmra.mxu0 %v1634
        %v1888 = vpop.f32.mrf.mxu0
        %v1889 = vadd.f32 0.0, %v1888
        %v1890 = vpop.f32.mrf.mxu0
        %1891 = vmatprep.mubr.f32.mxu0 %v1667
        %1892 = vmatmul.mubr.f32.gmra.mxu0 %v1635
        %v1893 = vpop.f32.mrf.mxu0
        %v1894 = vadd.f32 0.0, %v1893
        %v1895 = vpop.f32.mrf.mxu0
        %1896 = vmatprep.mubr.f32.mxu0 %v1668
        %1897 = vmatmul.mubr.f32.gmra.mxu0 %v1636
        %v1898 = vpop.f32.mrf.mxu0
        %v1899 = vadd.f32 0.0, %v1898
        %v1900 = vpop.f32.mrf.mxu0
        %1901 = vmatprep.mubr.f32.mxu0 %v1669
        %1902 = vmatmul.mubr.f32.gmra.mxu0 %v1637
        %v1903 = vpop.f32.mrf.mxu0
        %v1904 = vadd.f32 0.0, %v1903
        %v1905 = vpop.f32.mrf.mxu0
        %1906 = vmatprep.mubr.f32.mxu0 %v1670
        %1907 = vmatmul.mubr.f32.gmra.mxu0 %v1638
        %v1908 = vpop.f32.mrf.mxu0
        %v1909 = vadd.f32 0.0, %v1908
        %v1910 = vpop.f32.mrf.mxu0
        %1911 = vmatprep.mubr.f32.mxu0 %v1671
        %1912 = vmatmul.mubr.f32.gmra.mxu0 %v1639
        %v1913 = vpop.f32.mrf.mxu0
        %v1914 = vadd.f32 0.0, %v1913
        %v1915 = vpop.f32.mrf.mxu0
        %1916 = vmatprep.mubr.f32.mxu0 %v1672
        %1917 = vmatmul.mubr.f32.gmra.mxu0 %v1640
        %v1918 = vpop.f32.mrf.mxu0
        %v1919 = vadd.f32 0.0, %v1918
        %v1920 = vpop.f32.mrf.mxu0
        %1921 = vmatprep.mubr.f32.mxu0 %v1673
        %1922 = vmatmul.mubr.f32.gmra.mxu0 %v1641
        %v1923 = vpop.f32.mrf.mxu0
        %v1924 = vadd.f32 0.0, %v1923
        %v1925 = vpop.f32.mrf.mxu0
        %1926 = vmatprep.mubr.f32.mxu0 %v1674
        %1927 = vmatmul.mubr.f32.gmra.mxu0 %v1642
        %v1928 = vpop.f32.mrf.mxu0
        %v1929 = vadd.f32 0.0, %v1928
        %v1930 = vpop.f32.mrf.mxu0
        %1931 = vmatprep.mubr.f32.mxu0 %v1675
        %1932 = vmatmul.mubr.f32.gmra.mxu0 %v1643
        %v1933 = vpop.f32.mrf.mxu0
        %v1934 = vadd.f32 0.0, %v1933
        %v1935 = vpop.f32.mrf.mxu0
        %1936 = vmatprep.mubr.f32.mxu0 %v1676
        %1937 = vmatmul.mubr.f32.gmra.mxu0 %v1644
        %v1938 = vpop.f32.mrf.mxu0
        %v1939 = vadd.f32 0.0, %v1938
        %v1940 = vpop.f32.mrf.mxu0
        %1941 = vmatprep.mubr.f32.mxu0 %v1677
        %1942 = vmatmul.mubr.f32.gmra.mxu0 %v1645
        %v1943 = vpop.f32.mrf.mxu0
        %v1944 = vadd.f32 0.0, %v1943
        %v1945 = vpop.f32.mrf.mxu0
        %1946 = vmatprep.mubr.f32.mxu0 %v1678
        %1947 = vmatmul.mubr.f32.gmra.mxu0 %v1646
        %v1948 = vpop.f32.mrf.mxu0
        %v1949 = vadd.f32 0.0, %v1948
        %v1950 = vpop.f32.mrf.mxu0
        %1951 = vmatprep.mubr.f32.mxu0 %v1679
        %1952 = vmatmul.mubr.f32.gmra.mxu0 %v1647
        %v1953 = vpop.f32.mrf.mxu0
        %v1954 = vadd.f32 0.0, %v1953
        %v1955 = vpop.f32.mrf.mxu0
        %1956 = vmatprep.mubr.f32.mxu0 %v1680
        %1957 = vmatmul.mubr.f32.gmra.mxu0 %v1648
        %v1958 = vpop.f32.mrf.mxu0
        %v1959 = vadd.f32 0.0, %v1958
        %v1960 = vpop.f32.mrf.mxu0
        %1961 = vmatprep.mubr.f32.mxu0 %v1681
        %1962 = vmatmul.mubr.f32.gmra.mxu0 %v1649
        %v1963 = vpop.f32.mrf.mxu0
        %v1964 = vadd.f32 0.0, %v1963
        %v1965 = vpop.f32.mrf.mxu0
        %1966 = vmatprep.mubr.f32.mxu0 %v1682
        %1967 = vmatmul.mubr.f32.gmra.mxu0 %v1650
        %v1968 = vpop.f32.mrf.mxu0
        %v1969 = vadd.f32 0.0, %v1968
        %v1970 = vpop.f32.mrf.mxu0
        %1971 = vmatprep.mubr.f32.mxu0 %v1683
        %1972 = vmatmul.mubr.f32.gmra.mxu0 %v1651
        %v1973 = vpop.f32.mrf.mxu0
        %v1974 = vadd.f32 0.0, %v1973
        %v1975 = vpop.f32.mrf.mxu0
        %1976 = vmatprep.mubr.f32.mxu0 %v1684
        %1977 = vmatmul.mubr.f32.gmra.mxu0 %v1652
        %v1978 = vpop.f32.mrf.mxu0
        %v1979 = vadd.f32 0.0, %v1978
        %v1980 = vpop.f32.mrf.mxu0
        %1981 = vmatprep.mubr.f32.mxu0 %v1685
        %1982 = vmatmul.mubr.f32.gmra.mxu0 %v1653
        %v1983 = vpop.f32.mrf.mxu0
        %v1984 = vadd.f32 0.0, %v1983
        %v1985 = vpop.f32.mrf.mxu0
        %1986 = vmatprep.mubr.f32.mxu0 %v1686
        %1987 = vmatmul.mubr.f32.gmra.mxu0 %v1654
        %v1988 = vpop.f32.mrf.mxu0
        %v1989 = vadd.f32 0.0, %v1988
        %v1990 = vpop.f32.mrf.mxu0
        %1991 = vdwg.mxu0
        %1992 = vmatprep.subr.mxu0 0.0
        %1993 = vmatpush1.msra.mxu0 %v1766
        %1994 = vmatprep.subr.mxu0 0.0
        %1995 = vmatpush1.msra.mxu0 %v1765
        %1996 = vmatprep.subr.mxu0 0.0
        %1997 = vmatpush1.msra.mxu0 %v1764
        %1998 = vmatprep.subr.mxu0 0.0
        %1999 = vmatpush1.msra.mxu0 %v1763
        %2000 = vmatprep.subr.mxu0 0.0
        %2001 = vmatpush1.msra.mxu0 %v1762
        %2002 = vmatprep.subr.mxu0 0.0
        %2003 = vmatpush1.msra.mxu0 %v1761
        %2004 = vmatprep.subr.mxu0 0.0
        %2005 = vmatpush1.msra.mxu0 %v1760
        %2006 = vmatprep.subr.mxu0 0.0
        %2007 = vmatpush1.msra.mxu0 %v1759
        %2008 = vmatprep.subr.mxu0 0.0
        %2009 = vmatpush1.msra.mxu0 %v1758
        %2010 = vmatprep.subr.mxu0 0.0
        %2011 = vmatpush1.msra.mxu0 %v1757
        %2012 = vmatprep.subr.mxu0 0.0
        %2013 = vmatpush1.msra.mxu0 %v1756
        %2014 = vmatprep.subr.mxu0 0.0
        %2015 = vmatpush1.msra.mxu0 %v1755
        %2016 = vmatprep.subr.mxu0 0.0
        %2017 = vmatpush1.msra.mxu0 %v1754
        %2018 = vmatprep.subr.mxu0 0.0
        %2019 = vmatpush1.msra.mxu0 %v1753
        %2020 = vmatprep.subr.mxu0 0.0
        %2021 = vmatpush1.msra.mxu0 %v1752
        %2022 = vmatprep.subr.mxu0 0.0
        %2023 = vmatpush1.msra.mxu0 %v1751
        %2024 = vmatprep.subr.mxu0 0.0
        %2025 = vmatpush2.msra.mxu0 0.0
        %2026 = vmatprep.subr.mxu0 0.0
        %2027 = vmatpush2.msra.mxu0 0.0
        %2028 = vmatprep.subr.mxu0 0.0
        %2029 = vmatpush2.msra.mxu0 0.0
        %2030 = vmatprep.subr.mxu0 0.0
        %2031 = vmatpush2.msra.mxu0 0.0
        %2032 = vmatprep.subr.mxu0 0.0
        %2033 = vmatpush2.msra.mxu0 0.0
        %2034 = vmatprep.subr.mxu0 0.0
        %2035 = vmatpush2.msra.mxu0 0.0
        %2036 = vmatprep.subr.mxu0 0.0
        %2037 = vmatpush2.msra.mxu0 0.0
        %2038 = vmatprep.subr.mxu0 0.0
        %2039 = vmatpush2.msra.mxu0 0.0
        %2040 = vmatprep.subr.mxu0 0.0
        %2041 = vmatpush2.msra.mxu0 0.0
        %2042 = vmatprep.subr.mxu0 0.0
        %2043 = vmatpush2.msra.mxu0 0.0
        %2044 = vmatprep.subr.mxu0 0.0
        %2045 = vmatpush2.msra.mxu0 0.0
        %2046 = vmatprep.subr.mxu0 0.0
        %2047 = vmatpush2.msra.mxu0 0.0
        %2048 = vmatprep.subr.mxu0 0.0
        %2049 = vmatpush2.msra.mxu0 0.0
        %2050 = vmatprep.subr.mxu0 0.0
        %2051 = vmatpush2.msra.mxu0 0.0
        %2052 = vmatprep.subr.mxu0 0.0
        %2053 = vmatpush2.msra.mxu0 0.0
        %2054 = vmatprep.subr.mxu0 0.0
        %2055 = vmatpush2.msra.mxu0 0.0
        %2056 = vmatprep.mubr.f32.mxu0 0.0
        %2057 = vmatmul.mubr.f32.gmra.mxu0 %v1687
        %v2058 = vpop.f32.mrf.mxu0
        %v2059 = vadd.f32 %v1834, %v2058
        %v2060 = vpop.f32.mrf.mxu0
        %2061 = vmatprep.mubr.f32.mxu0 0.0
        %2062 = vmatmul.mubr.f32.gmra.mxu0 %v1688
        %v2063 = vpop.f32.mrf.mxu0
        %v2064 = vadd.f32 %v1839, %v2063
        %v2065 = vpop.f32.mrf.mxu0
        %2066 = vmatprep.mubr.f32.mxu0 0.0
        %2067 = vmatmul.mubr.f32.gmra.mxu0 %v1689
        %v2068 = vpop.f32.mrf.mxu0
        %v2069 = vadd.f32 %v1844, %v2068
        %v2070 = vpop.f32.mrf.mxu0
        %2071 = vmatprep.mubr.f32.mxu0 0.0
        %2072 = vmatmul.mubr.f32.gmra.mxu0 %v1690
        %v2073 = vpop.f32.mrf.mxu0
        %v2074 = vadd.f32 %v1849, %v2073
        %v2075 = vpop.f32.mrf.mxu0
        %2076 = vmatprep.mubr.f32.mxu0 0.0
        %2077 = vmatmul.mubr.f32.gmra.mxu0 %v1691
        %v2078 = vpop.f32.mrf.mxu0
        %v2079 = vadd.f32 %v1854, %v2078
        %v2080 = vpop.f32.mrf.mxu0
        %2081 = vmatprep.mubr.f32.mxu0 0.0
        %2082 = vmatmul.mubr.f32.gmra.mxu0 %v1692
        %v2083 = vpop.f32.mrf.mxu0
        %v2084 = vadd.f32 %v1859, %v2083
        %v2085 = vpop.f32.mrf.mxu0
        %2086 = vmatprep.mubr.f32.mxu0 0.0
        %2087 = vmatmul.mubr.f32.gmra.mxu0 %v1693
        %v2088 = vpop.f32.mrf.mxu0
        %v2089 = vadd.f32 %v1864, %v2088
        %v2090 = vpop.f32.mrf.mxu0
        %2091 = vmatprep.mubr.f32.mxu0 0.0
        %2092 = vmatmul.mubr.f32.gmra.mxu0 %v1694
        %v2093 = vpop.f32.mrf.mxu0
        %v2094 = vadd.f32 %v1869, %v2093
        %v2095 = vpop.f32.mrf.mxu0
        %2096 = vmatprep.mubr.f32.mxu0 0.0
        %2097 = vmatmul.mubr.f32.gmra.mxu0 %v1695
        %v2098 = vpop.f32.mrf.mxu0
        %v2099 = vadd.f32 %v1874, %v2098
        %v2100 = vpop.f32.mrf.mxu0
        %2101 = vmatprep.mubr.f32.mxu0 0.0
        %2102 = vmatmul.mubr.f32.gmra.mxu0 %v1696
        %v2103 = vpop.f32.mrf.mxu0
        %v2104 = vadd.f32 %v1879, %v2103
        %v2105 = vpop.f32.mrf.mxu0
        %2106 = vmatprep.mubr.f32.mxu0 0.0
        %2107 = vmatmul.mubr.f32.gmra.mxu0 %v1697
        %v2108 = vpop.f32.mrf.mxu0
        %v2109 = vadd.f32 %v1884, %v2108
        %v2110 = vpop.f32.mrf.mxu0
        %2111 = vmatprep.mubr.f32.mxu0 0.0
        %2112 = vmatmul.mubr.f32.gmra.mxu0 %v1698
        %v2113 = vpop.f32.mrf.mxu0
        %v2114 = vadd.f32 %v1889, %v2113
        %v2115 = vpop.f32.mrf.mxu0
        %2116 = vmatprep.mubr.f32.mxu0 0.0
        %2117 = vmatmul.mubr.f32.gmra.mxu0 %v1699
        %v2118 = vpop.f32.mrf.mxu0
        %v2119 = vadd.f32 %v1894, %v2118
        %v2120 = vpop.f32.mrf.mxu0
        %2121 = vmatprep.mubr.f32.mxu0 0.0
        %2122 = vmatmul.mubr.f32.gmra.mxu0 %v1700
        %v2123 = vpop.f32.mrf.mxu0
        %v2124 = vadd.f32 %v1899, %v2123
        %v2125 = vpop.f32.mrf.mxu0
        %2126 = vmatprep.mubr.f32.mxu0 0.0
        %2127 = vmatmul.mubr.f32.gmra.mxu0 %v1701
        %v2128 = vpop.f32.mrf.mxu0
        %v2129 = vadd.f32 %v1904, %v2128
        %v2130 = vpop.f32.mrf.mxu0
        %2131 = vmatprep.mubr.f32.mxu0 0.0
        %2132 = vmatmul.mubr.f32.gmra.mxu0 %v1702
        %v2133 = vpop.f32.mrf.mxu0
        %v2134 = vadd.f32 %v1909, %v2133
        %v2135 = vpop.f32.mrf.mxu0
        %2136 = vmatprep.mubr.f32.mxu0 0.0
        %2137 = vmatmul.mubr.f32.gmra.mxu0 %v1703
        %v2138 = vpop.f32.mrf.mxu0
        %v2139 = vadd.f32 %v1914, %v2138
        %v2140 = vpop.f32.mrf.mxu0
        %2141 = vmatprep.mubr.f32.mxu0 0.0
        %2142 = vmatmul.mubr.f32.gmra.mxu0 %v1704
        %v2143 = vpop.f32.mrf.mxu0
        %v2144 = vadd.f32 %v1919, %v2143
        %v2145 = vpop.f32.mrf.mxu0
        %2146 = vmatprep.mubr.f32.mxu0 0.0
        %2147 = vmatmul.mubr.f32.gmra.mxu0 %v1705
        %v2148 = vpop.f32.mrf.mxu0
        %v2149 = vadd.f32 %v1924, %v2148
        %v2150 = vpop.f32.mrf.mxu0
        %2151 = vmatprep.mubr.f32.mxu0 0.0
        %2152 = vmatmul.mubr.f32.gmra.mxu0 %v1706
        %v2153 = vpop.f32.mrf.mxu0
        %v2154 = vadd.f32 %v1929, %v2153
        %v2155 = vpop.f32.mrf.mxu0
        %2156 = vmatprep.mubr.f32.mxu0 0.0
        %2157 = vmatmul.mubr.f32.gmra.mxu0 %v1707
        %v2158 = vpop.f32.mrf.mxu0
        %v2159 = vadd.f32 %v1934, %v2158
        %v2160 = vpop.f32.mrf.mxu0
        %2161 = vmatprep.mubr.f32.mxu0 0.0
        %2162 = vmatmul.mubr.f32.gmra.mxu0 %v1708
        %v2163 = vpop.f32.mrf.mxu0
        %v2164 = vadd.f32 %v1939, %v2163
        %v2165 = vpop.f32.mrf.mxu0
        %2166 = vmatprep.mubr.f32.mxu0 0.0
        %2167 = vmatmul.mubr.f32.gmra.mxu0 %v1709
        %v2168 = vpop.f32.mrf.mxu0
        %v2169 = vadd.f32 %v1944, %v2168
        %v2170 = vpop.f32.mrf.mxu0
        %2171 = vmatprep.mubr.f32.mxu0 0.0
        %2172 = vmatmul.mubr.f32.gmra.mxu0 %v1710
        %v2173 = vpop.f32.mrf.mxu0
        %v2174 = vadd.f32 %v1949, %v2173
        %v2175 = vpop.f32.mrf.mxu0
        %2176 = vmatprep.mubr.f32.mxu0 0.0
        %2177 = vmatmul.mubr.f32.gmra.mxu0 %v1711
        %v2178 = vpop.f32.mrf.mxu0
        %v2179 = vadd.f32 %v1954, %v2178
        %v2180 = vpop.f32.mrf.mxu0
        %2181 = vmatprep.mubr.f32.mxu0 0.0
        %2182 = vmatmul.mubr.f32.gmra.mxu0 %v1712
        %v2183 = vpop.f32.mrf.mxu0
        %v2184 = vadd.f32 %v1959, %v2183
        %v2185 = vpop.f32.mrf.mxu0
        %2186 = vmatprep.mubr.f32.mxu0 0.0
        %2187 = vmatmul.mubr.f32.gmra.mxu0 %v1713
        %v2188 = vpop.f32.mrf.mxu0
        %v2189 = vadd.f32 %v1964, %v2188
        %v2190 = vpop.f32.mrf.mxu0
        %2191 = vmatprep.mubr.f32.mxu0 0.0
        %2192 = vmatmul.mubr.f32.gmra.mxu0 %v1714
        %v2193 = vpop.f32.mrf.mxu0
        %v2194 = vadd.f32 %v1969, %v2193
        %v2195 = vpop.f32.mrf.mxu0
        %2196 = vmatprep.mubr.f32.mxu0 0.0
        %2197 = vmatmul.mubr.f32.gmra.mxu0 %v1715
        %v2198 = vpop.f32.mrf.mxu0
        %v2199 = vadd.f32 %v1974, %v2198
        %v2200 = vpop.f32.mrf.mxu0
        %2201 = vmatprep.mubr.f32.mxu0 0.0
        %2202 = vmatmul.mubr.f32.gmra.mxu0 %v1716
        %v2203 = vpop.f32.mrf.mxu0
        %v2204 = vadd.f32 %v1979, %v2203
        %v2205 = vpop.f32.mrf.mxu0
        %2206 = vmatprep.mubr.f32.mxu0 0.0
        %2207 = vmatmul.mubr.f32.gmra.mxu0 %v1717
        %v2208 = vpop.f32.mrf.mxu0
        %v2209 = vadd.f32 %v1984, %v2208
        %v2210 = vpop.f32.mrf.mxu0
        %2211 = vmatprep.mubr.f32.mxu0 0.0
        %2212 = vmatmul.mubr.f32.gmra.mxu0 %v1718
        %v2213 = vpop.f32.mrf.mxu0
        %v2214 = vadd.f32 %v1989, %v2213
        %v2215 = vpop.f32.mrf.mxu0
        %2216 = vdwg.mxu0
        %v2217 = vadd.f32 %v1464, %v2059
        %v2218 = vadd.f32 %v1469, %v2064
        %v2219 = vadd.f32 %v1474, %v2069
        %v2220 = vadd.f32 %v1479, %v2074
        %v2221 = vadd.f32 %v1484, %v2079
        %v2222 = vadd.f32 %v1489, %v2084
        %v2223 = vadd.f32 %v1494, %v2089
        %v2224 = vadd.f32 %v1499, %v2094
        %v2225 = vadd.f32 %v1504, %v2099
        %v2226 = vadd.f32 %v1509, %v2104
        %v2227 = vadd.f32 %v1514, %v2109
        %v2228 = vadd.f32 %v1519, %v2114
        %v2229 = vadd.f32 %v1524, %v2119
        %v2230 = vadd.f32 %v1529, %v2124
        %v2231 = vadd.f32 %v1534, %v2129
        %v2232 = vadd.f32 %v1539, %v2134
        %v2233 = vadd.f32 %v1544, %v2139
        %v2234 = vadd.f32 %v1549, %v2144
        %v2235 = vadd.f32 %v1554, %v2149
        %v2236 = vadd.f32 %v1559, %v2154
        %v2237 = vadd.f32 %v1564, %v2159
        %v2238 = vadd.f32 %v1569, %v2164
        %v2239 = vadd.f32 %v1574, %v2169
        %v2240 = vadd.f32 %v1579, %v2174
        %v2241 = vadd.f32 %v1584, %v2179
        %v2242 = vadd.f32 %v1589, %v2184
        %v2243 = vadd.f32 %v1594, %v2189
        %v2244 = vadd.f32 %v1599, %v2194
        %v2245 = vadd.f32 %v1604, %v2199
        %v2246 = vadd.f32 %v1609, %v2204
        %v2247 = vadd.f32 %v1614, %v2209
        %v2248 = vadd.f32 %v1619, %v2214
        %v2249 = vld [vmem:[%s3] sm:$0x1]
        %v2251 = vlaneseq
        %v2252 = vshrl.u32 %v2251, 7
        %v2253 = vsub.s32 0, %v2252
        %v2254 = vrot.slane %v2249, %v2253
        %v2256 = vmul.f32 %v2217, %v2254
        %v2257 = vmul.f32 %v2218, %v2254
        %v2258 = vmul.f32 %v2219, %v2254
        %v2259 = vmul.f32 %v2220, %v2254
        %v2260 = vmul.f32 %v2221, %v2254
        %v2261 = vmul.f32 %v2222, %v2254
        %v2262 = vmul.f32 %v2223, %v2254
        %v2263 = vmul.f32 %v2224, %v2254
        %v2264 = vmul.f32 %v2225, %v2254
        %v2265 = vmul.f32 %v2226, %v2254
        %v2266 = vmul.f32 %v2227, %v2254
        %v2267 = vmul.f32 %v2228, %v2254
        %v2268 = vmul.f32 %v2229, %v2254
        %v2269 = vmul.f32 %v2230, %v2254
        %v2270 = vmul.f32 %v2231, %v2254
        %v2271 = vmul.f32 %v2232, %v2254
        %v2272 = vmul.f32 %v2233, %v2254
        %v2273 = vmul.f32 %v2234, %v2254
        %v2274 = vmul.f32 %v2235, %v2254
        %v2275 = vmul.f32 %v2236, %v2254
        %v2276 = vmul.f32 %v2237, %v2254
        %v2277 = vmul.f32 %v2238, %v2254
        %v2278 = vmul.f32 %v2239, %v2254
        %v2279 = vmul.f32 %v2240, %v2254
        %v2280 = vmul.f32 %v2241, %v2254
        %v2281 = vmul.f32 %v2242, %v2254
        %v2282 = vmul.f32 %v2243, %v2254
        %v2283 = vmul.f32 %v2244, %v2254
        %v2284 = vmul.f32 %v2245, %v2254
        %v2285 = vmul.f32 %v2246, %v2254
        %v2286 = vmul.f32 %v2247, %v2254
        %v2287 = vmul.f32 %v2248, %v2254
        %v2288 = vld [vmem:[%s4] sm:$0x1]
        %v2290 = vlaneseq
        %v2291 = vshrl.u32 %v2290, 7
        %v2292 = vsub.s32 0, %v2291
        %v2293 = vrot.slane %v2288, %v2292
        %v2295 = vadd.f32 %v2256, %v2293
        %v2296 = vadd.f32 %v2257, %v2293
        %v2297 = vadd.f32 %v2258, %v2293
        %v2298 = vadd.f32 %v2259, %v2293
        %v2299 = vadd.f32 %v2260, %v2293
        %v2300 = vadd.f32 %v2261, %v2293
        %v2301 = vadd.f32 %v2262, %v2293
        %v2302 = vadd.f32 %v2263, %v2293
        %v2303 = vadd.f32 %v2264, %v2293
        %v2304 = vadd.f32 %v2265, %v2293
        %v2305 = vadd.f32 %v2266, %v2293
        %v2306 = vadd.f32 %v2267, %v2293
        %v2307 = vadd.f32 %v2268, %v2293
        %v2308 = vadd.f32 %v2269, %v2293
        %v2309 = vadd.f32 %v2270, %v2293
        %v2310 = vadd.f32 %v2271, %v2293
        %v2311 = vadd.f32 %v2272, %v2293
        %v2312 = vadd.f32 %v2273, %v2293
        %v2313 = vadd.f32 %v2274, %v2293
        %v2314 = vadd.f32 %v2275, %v2293
        %v2315 = vadd.f32 %v2276, %v2293
        %v2316 = vadd.f32 %v2277, %v2293
        %v2317 = vadd.f32 %v2278, %v2293
        %v2318 = vadd.f32 %v2279, %v2293
        %v2319 = vadd.f32 %v2280, %v2293
        %v2320 = vadd.f32 %v2281, %v2293
        %v2321 = vadd.f32 %v2282, %v2293
        %v2322 = vadd.f32 %v2283, %v2293
        %v2323 = vadd.f32 %v2284, %v2293
        %v2324 = vadd.f32 %v2285, %v2293
        %v2325 = vadd.f32 %v2286, %v2293
        %v2326 = vadd.f32 %v2287, %v2293
        %v2327 = vmax.f32 %v2295, 0.0
        %v2328 = vmax.f32 %v2296, 0.0
        %v2329 = vmax.f32 %v2297, 0.0
        %v2330 = vmax.f32 %v2298, 0.0
        %v2331 = vmax.f32 %v2299, 0.0
        %v2332 = vmax.f32 %v2300, 0.0
        %v2333 = vmax.f32 %v2301, 0.0
        %v2334 = vmax.f32 %v2302, 0.0
        %v2335 = vmax.f32 %v2303, 0.0
        %v2336 = vmax.f32 %v2304, 0.0
        %v2337 = vmax.f32 %v2305, 0.0
        %v2338 = vmax.f32 %v2306, 0.0
        %v2339 = vmax.f32 %v2307, 0.0
        %v2340 = vmax.f32 %v2308, 0.0
        %v2341 = vmax.f32 %v2309, 0.0
        %v2342 = vmax.f32 %v2310, 0.0
        %v2343 = vmax.f32 %v2311, 0.0
        %v2344 = vmax.f32 %v2312, 0.0
        %v2345 = vmax.f32 %v2313, 0.0
        %v2346 = vmax.f32 %v2314, 0.0
        %v2347 = vmax.f32 %v2315, 0.0
        %v2348 = vmax.f32 %v2316, 0.0
        %v2349 = vmax.f32 %v2317, 0.0
        %v2350 = vmax.f32 %v2318, 0.0
        %v2351 = vmax.f32 %v2319, 0.0
        %v2352 = vmax.f32 %v2320, 0.0
        %v2353 = vmax.f32 %v2321, 0.0
        %v2354 = vmax.f32 %v2322, 0.0
        %v2355 = vmax.f32 %v2323, 0.0
        %v2356 = vmax.f32 %v2324, 0.0
        %v2357 = vmax.f32 %v2325, 0.0
        %v2358 = vmax.f32 %v2326, 0.0
        %2359 = vst [vmem:[%s401 + $0x1] sm:$0xff] %v2327
        %2360 = vst [vmem:[%s401 + $0x9] sm:$0xff] %v2328
        %2361 = vst [vmem:[%s401 + $0x19] sm:$0xff] %v2329
        %2362 = vst [vmem:[%s401 + $0x21] sm:$0xff] %v2330
        %2363 = vst [vmem:[%s401 + $0x31] sm:$0xff] %v2331
        %2364 = vst [vmem:[%s401 + $0x39] sm:$0xff] %v2332
        %2365 = vst [vmem:[%s401 + $0x49] sm:$0xff] %v2333
        %2366 = vst [vmem:[%s401 + $0x51] sm:$0xff] %v2334
        %2367 = vst [vmem:[%s401 + $0x61] sm:$0xff] %v2335
        %2368 = vst [vmem:[%s401 + $0x69] sm:$0xff] %v2336
        %2369 = vst [vmem:[%s401 + $0x79] sm:$0xff] %v2337
        %2370 = vst [vmem:[%s401 + $0x81] sm:$0xff] %v2338
        %2371 = vst [vmem:[%s401 + $0x91] sm:$0xff] %v2339
        %2372 = vst [vmem:[%s401 + $0x99] sm:$0xff] %v2340
        %2373 = vst [vmem:[%s401 + $0xa9] sm:$0xff] %v2341
        %2374 = vst [vmem:[%s401 + $0xb1] sm:$0xff] %v2342
        %2375 = vst [vmem:[%s401 + $0xc1] sm:$0xff] %v2343
        %2376 = vst [vmem:[%s401 + $0xc9] sm:$0xff] %v2344
        %2377 = vst [vmem:[%s401 + $0xd9] sm:$0xff] %v2345
        %2378 = vst [vmem:[%s401 + $0xe1] sm:$0xff] %v2346
        %2379 = vst [vmem:[%s401 + $0xf1] sm:$0xff] %v2347
        %2380 = vst [vmem:[%s401 + $0xf9] sm:$0xff] %v2348
        %2381 = vst [vmem:[%s401 + $0x109] sm:$0xff] %v2349
        %2382 = vst [vmem:[%s401 + $0x111] sm:$0xff] %v2350
        %2383 = vst [vmem:[%s401 + $0x121] sm:$0xff] %v2351
        %2384 = vst [vmem:[%s401 + $0x129] sm:$0xff] %v2352
        %2385 = vst [vmem:[%s401 + $0x139] sm:$0xff] %v2353
        %2386 = vst [vmem:[%s401 + $0x141] sm:$0xff] %v2354
        %2387 = vst [vmem:[%s401 + $0x151] sm:$0xff] %v2355
        %2388 = vst [vmem:[%s401 + $0x159] sm:$0xff] %v2356
        %2389 = vst [vmem:[%s401 + $0x169] sm:$0xff] %v2357
        %2390 = vst [vmem:[%s401 + $0x171] sm:$0xff] %v2358
        %v2391 = vld [vmem:[#allocation2] sm:$0xff]
        %v2392 = vld [vmem:[#allocation2 + $0x8] sm:$0xff]
        %v2393 = vld [vmem:[#allocation2 + $0x18] sm:$0xff]
        %v2394 = vld [vmem:[#allocation2 + $0x20] sm:$0xff]
        %v2395 = vld [vmem:[#allocation2 + $0x30] sm:$0xff]
        %v2396 = vld [vmem:[#allocation2 + $0x38] sm:$0xff]
        %v2397 = vld [vmem:[#allocation2 + $0x48] sm:$0xff]
        %v2398 = vld [vmem:[#allocation2 + $0x50] sm:$0xff]
        %v2399 = vld [vmem:[#allocation2 + $0x60] sm:$0xff]
        %v2400 = vld [vmem:[#allocation2 + $0x68] sm:$0xff]
        %v2401 = vld [vmem:[#allocation2 + $0x78] sm:$0xff]
        %v2402 = vld [vmem:[#allocation2 + $0x80] sm:$0xff]
        %v2403 = vld [vmem:[#allocation2 + $0x90] sm:$0xff]
        %v2404 = vld [vmem:[#allocation2 + $0x98] sm:$0xff]
        %v2405 = vld [vmem:[#allocation2 + $0xa8] sm:$0xff]
        %v2406 = vld [vmem:[#allocation2 + $0xb0] sm:$0xff]
        %v2407 = vld [vmem:[#allocation2 + $0xc0] sm:$0xff]
        %v2408 = vld [vmem:[#allocation2 + $0xc8] sm:$0xff]
        %v2409 = vld [vmem:[#allocation2 + $0xd8] sm:$0xff]
        %v2410 = vld [vmem:[#allocation2 + $0xe0] sm:$0xff]
        %v2411 = vld [vmem:[#allocation2 + $0xf0] sm:$0xff]
        %v2412 = vld [vmem:[#allocation2 + $0xf8] sm:$0xff]
        %v2413 = vld [vmem:[#allocation2 + $0x108] sm:$0xff]
        %v2414 = vld [vmem:[#allocation2 + $0x110] sm:$0xff]
        %v2415 = vld [vmem:[#allocation2 + $0x120] sm:$0xff]
        %v2416 = vld [vmem:[#allocation2 + $0x128] sm:$0xff]
        %v2417 = vld [vmem:[#allocation2 + $0x138] sm:$0xff]
        %v2418 = vld [vmem:[#allocation2 + $0x140] sm:$0xff]
        %v2419 = vld [vmem:[#allocation2 + $0x150] sm:$0xff]
        %v2420 = vld [vmem:[#allocation2 + $0x158] sm:$0xff]
        %v2421 = vld [vmem:[#allocation2 + $0x168] sm:$0xff]
        %v2422 = vld [vmem:[#allocation2 + $0x170] sm:$0xff]
        %v2423 = vld [vmem:[#allocation2 + $0x1] sm:$0xff]
        %v2424 = vld [vmem:[#allocation2 + $0x9] sm:$0xff]
        %v2425 = vld [vmem:[#allocation2 + $0x19] sm:$0xff]
        %v2426 = vld [vmem:[#allocation2 + $0x21] sm:$0xff]
        %v2427 = vld [vmem:[#allocation2 + $0x31] sm:$0xff]
        %v2428 = vld [vmem:[#allocation2 + $0x39] sm:$0xff]
        %v2429 = vld [vmem:[#allocation2 + $0x49] sm:$0xff]
        %v2430 = vld [vmem:[#allocation2 + $0x51] sm:$0xff]
        %v2431 = vld [vmem:[#allocation2 + $0x61] sm:$0xff]
        %v2432 = vld [vmem:[#allocation2 + $0x69] sm:$0xff]
        %v2433 = vld [vmem:[#allocation2 + $0x79] sm:$0xff]
        %v2434 = vld [vmem:[#allocation2 + $0x81] sm:$0xff]
        %v2435 = vld [vmem:[#allocation2 + $0x91] sm:$0xff]
        %v2436 = vld [vmem:[#allocation2 + $0x99] sm:$0xff]
        %v2437 = vld [vmem:[#allocation2 + $0xa9] sm:$0xff]
        %v2438 = vld [vmem:[#allocation2 + $0xb1] sm:$0xff]
        %v2439 = vld [vmem:[#allocation2 + $0xc1] sm:$0xff]
        %v2440 = vld [vmem:[#allocation2 + $0xc9] sm:$0xff]
        %v2441 = vld [vmem:[#allocation2 + $0xd9] sm:$0xff]
        %v2442 = vld [vmem:[#allocation2 + $0xe1] sm:$0xff]
        %v2443 = vld [vmem:[#allocation2 + $0xf1] sm:$0xff]
        %v2444 = vld [vmem:[#allocation2 + $0xf9] sm:$0xff]
        %v2445 = vld [vmem:[#allocation2 + $0x109] sm:$0xff]
        %v2446 = vld [vmem:[#allocation2 + $0x111] sm:$0xff]
        %v2447 = vld [vmem:[#allocation2 + $0x121] sm:$0xff]
        %v2448 = vld [vmem:[#allocation2 + $0x129] sm:$0xff]
        %v2449 = vld [vmem:[#allocation2 + $0x139] sm:$0xff]
        %v2450 = vld [vmem:[#allocation2 + $0x141] sm:$0xff]
        %v2451 = vld [vmem:[#allocation2 + $0x151] sm:$0xff]
        %v2452 = vld [vmem:[#allocation2 + $0x159] sm:$0xff]
        %v2453 = vld [vmem:[#allocation2 + $0x169] sm:$0xff]
        %v2454 = vld [vmem:[#allocation2 + $0x171] sm:$0xff]
        %v2455 = vld [vmem:[#allocation2 + $0x2] sm:$0xff]
        %v2456 = vld [vmem:[#allocation2 + $0xa] sm:$0xff]
        %v2457 = vld [vmem:[#allocation2 + $0x1a] sm:$0xff]
        %v2458 = vld [vmem:[#allocation2 + $0x22] sm:$0xff]
        %v2459 = vld [vmem:[#allocation2 + $0x32] sm:$0xff]
        %v2460 = vld [vmem:[#allocation2 + $0x3a] sm:$0xff]
        %v2461 = vld [vmem:[#allocation2 + $0x4a] sm:$0xff]
        %v2462 = vld [vmem:[#allocation2 + $0x52] sm:$0xff]
        %v2463 = vld [vmem:[#allocation2 + $0x62] sm:$0xff]
        %v2464 = vld [vmem:[#allocation2 + $0x6a] sm:$0xff]
        %v2465 = vld [vmem:[#allocation2 + $0x7a] sm:$0xff]
        %v2466 = vld [vmem:[#allocation2 + $0x82] sm:$0xff]
        %v2467 = vld [vmem:[#allocation2 + $0x92] sm:$0xff]
        %v2468 = vld [vmem:[#allocation2 + $0x9a] sm:$0xff]
        %v2469 = vld [vmem:[#allocation2 + $0xaa] sm:$0xff]
        %v2470 = vld [vmem:[#allocation2 + $0xb2] sm:$0xff]
        %v2471 = vld [vmem:[#allocation2 + $0xc2] sm:$0xff]
        %v2472 = vld [vmem:[#allocation2 + $0xca] sm:$0xff]
        %v2473 = vld [vmem:[#allocation2 + $0xda] sm:$0xff]
        %v2474 = vld [vmem:[#allocation2 + $0xe2] sm:$0xff]
        %v2475 = vld [vmem:[#allocation2 + $0xf2] sm:$0xff]
        %v2476 = vld [vmem:[#allocation2 + $0xfa] sm:$0xff]
        %v2477 = vld [vmem:[#allocation2 + $0x10a] sm:$0xff]
        %v2478 = vld [vmem:[#allocation2 + $0x112] sm:$0xff]
        %v2479 = vld [vmem:[#allocation2 + $0x122] sm:$0xff]
        %v2480 = vld [vmem:[#allocation2 + $0x12a] sm:$0xff]
        %v2481 = vld [vmem:[#allocation2 + $0x13a] sm:$0xff]
        %v2482 = vld [vmem:[#allocation2 + $0x142] sm:$0xff]
        %v2483 = vld [vmem:[#allocation2 + $0x152] sm:$0xff]
        %v2484 = vld [vmem:[#allocation2 + $0x15a] sm:$0xff]
        %v2485 = vld [vmem:[#allocation2 + $0x16a] sm:$0xff]
        %v2486 = vld [vmem:[#allocation2 + $0x172] sm:$0xff]
        %v2487 = vld [vmem:[#allocation8] sm:$0xff]
        %v2488 = vld [vmem:[#allocation8 + $0x8] sm:$0xff]
        %v2489 = vld [vmem:[#allocation8 + $0x10] sm:$0xff]
        %v2490 = vld [vmem:[#allocation8 + $0x18] sm:$0xff]
        %v2491 = vld [vmem:[#allocation8 + $0x20] sm:$0xff]
        %v2492 = vld [vmem:[#allocation8 + $0x28] sm:$0xff]
        %v2493 = vld [vmem:[#allocation8 + $0x30] sm:$0xff]
        %v2494 = vld [vmem:[#allocation8 + $0x38] sm:$0xff]
        %v2495 = vld [vmem:[#allocation8 + $0x40] sm:$0xff]
        %v2496 = vld [vmem:[#allocation8 + $0x48] sm:$0xff]
        %v2497 = vld [vmem:[#allocation8 + $0x50] sm:$0xff]
        %v2498 = vld [vmem:[#allocation8 + $0x58] sm:$0xff]
        %v2499 = vld [vmem:[#allocation8 + $0x60] sm:$0xff]
        %v2500 = vld [vmem:[#allocation8 + $0x68] sm:$0xff]
        %v2501 = vld [vmem:[#allocation8 + $0x70] sm:$0xff]
        %v2502 = vld [vmem:[#allocation8 + $0x78] sm:$0xff]
        %v2503 = vld [vmem:[#allocation8 + $0x80] sm:$0xff]
        %v2504 = vld [vmem:[#allocation8 + $0x88] sm:$0xff]
        %v2505 = vld [vmem:[#allocation8 + $0x90] sm:$0xff]
        %v2506 = vld [vmem:[#allocation8 + $0x98] sm:$0xff]
        %v2507 = vld [vmem:[#allocation8 + $0xa0] sm:$0xff]
        %v2508 = vld [vmem:[#allocation8 + $0xa8] sm:$0xff]
        %v2509 = vld [vmem:[#allocation8 + $0xb0] sm:$0xff]
        %v2510 = vld [vmem:[#allocation8 + $0xb8] sm:$0xff]
        %v2511 = vld [vmem:[#allocation8 + $0xc0] sm:$0xff]
        %v2512 = vld [vmem:[#allocation8 + $0xc8] sm:$0xff]
        %v2513 = vld [vmem:[#allocation8 + $0xd0] sm:$0xff]
        %v2514 = vld [vmem:[#allocation8 + $0xd8] sm:$0xff]
        %v2515 = vld [vmem:[#allocation8 + $0xe0] sm:$0xff]
        %v2516 = vld [vmem:[#allocation8 + $0xe8] sm:$0xff]
        %v2517 = vld [vmem:[#allocation8 + $0xf0] sm:$0xff]
        %v2518 = vld [vmem:[#allocation8 + $0xf8] sm:$0xff]
        %v2519 = vld [vmem:[#allocation8 + $0x100] sm:$0xff]
        %v2520 = vld [vmem:[#allocation8 + $0x108] sm:$0xff]
        %v2521 = vld [vmem:[#allocation8 + $0x110] sm:$0xff]
        %v2522 = vld [vmem:[#allocation8 + $0x118] sm:$0xff]
        %v2523 = vld [vmem:[#allocation8 + $0x120] sm:$0xff]
        %v2524 = vld [vmem:[#allocation8 + $0x128] sm:$0xff]
        %v2525 = vld [vmem:[#allocation8 + $0x130] sm:$0xff]
        %v2526 = vld [vmem:[#allocation8 + $0x138] sm:$0xff]
        %v2527 = vld [vmem:[#allocation8 + $0x140] sm:$0xff]
        %v2528 = vld [vmem:[#allocation8 + $0x148] sm:$0xff]
        %v2529 = vld [vmem:[#allocation8 + $0x150] sm:$0xff]
        %v2530 = vld [vmem:[#allocation8 + $0x158] sm:$0xff]
        %v2531 = vld [vmem:[#allocation8 + $0x160] sm:$0xff]
        %v2532 = vld [vmem:[#allocation8 + $0x168] sm:$0xff]
        %v2533 = vld [vmem:[#allocation8 + $0x170] sm:$0xff]
        %v2534 = vld [vmem:[#allocation8 + $0x178] sm:$0xff]
        %v2535 = vld [vmem:[%s401] sm:$0xff]
        %v2536 = vld [vmem:[%s401 + $0x8] sm:$0xff]
        %v2537 = vld [vmem:[%s401 + $0x18] sm:$0xff]
        %v2538 = vld [vmem:[%s401 + $0x20] sm:$0xff]
        %v2539 = vld [vmem:[%s401 + $0x30] sm:$0xff]
        %v2540 = vld [vmem:[%s401 + $0x38] sm:$0xff]
        %v2541 = vld [vmem:[%s401 + $0x48] sm:$0xff]
        %v2542 = vld [vmem:[%s401 + $0x50] sm:$0xff]
        %v2543 = vld [vmem:[%s401 + $0x60] sm:$0xff]
        %v2544 = vld [vmem:[%s401 + $0x68] sm:$0xff]
        %v2545 = vld [vmem:[%s401 + $0x78] sm:$0xff]
        %v2546 = vld [vmem:[%s401 + $0x80] sm:$0xff]
        %v2547 = vld [vmem:[%s401 + $0x90] sm:$0xff]
        %v2548 = vld [vmem:[%s401 + $0x98] sm:$0xff]
        %v2549 = vld [vmem:[%s401 + $0xa8] sm:$0xff]
        %v2550 = vld [vmem:[%s401 + $0xb0] sm:$0xff]
        %v2551 = vld [vmem:[%s401 + $0xc0] sm:$0xff]
        %v2552 = vld [vmem:[%s401 + $0xc8] sm:$0xff]
        %v2553 = vld [vmem:[%s401 + $0xd8] sm:$0xff]
        %v2554 = vld [vmem:[%s401 + $0xe0] sm:$0xff]
        %v2555 = vld [vmem:[%s401 + $0xf0] sm:$0xff]
        %v2556 = vld [vmem:[%s401 + $0xf8] sm:$0xff]
        %v2557 = vld [vmem:[%s401 + $0x108] sm:$0xff]
        %v2558 = vld [vmem:[%s401 + $0x110] sm:$0xff]
        %v2559 = vld [vmem:[%s401 + $0x120] sm:$0xff]
        %v2560 = vld [vmem:[%s401 + $0x128] sm:$0xff]
        %v2561 = vld [vmem:[%s401 + $0x138] sm:$0xff]
        %v2562 = vld [vmem:[%s401 + $0x140] sm:$0xff]
        %v2563 = vld [vmem:[%s401 + $0x150] sm:$0xff]
        %v2564 = vld [vmem:[%s401 + $0x158] sm:$0xff]
        %v2565 = vld [vmem:[%s401 + $0x168] sm:$0xff]
        %v2566 = vld [vmem:[%s401 + $0x170] sm:$0xff]
        %v2567 = vld [vmem:[%s401 + $0x1] sm:$0xff]
        %v2568 = vld [vmem:[%s401 + $0x9] sm:$0xff]
        %v2569 = vld [vmem:[%s401 + $0x19] sm:$0xff]
        %v2570 = vld [vmem:[%s401 + $0x21] sm:$0xff]
        %v2571 = vld [vmem:[%s401 + $0x31] sm:$0xff]
        %v2572 = vld [vmem:[%s401 + $0x39] sm:$0xff]
        %v2573 = vld [vmem:[%s401 + $0x49] sm:$0xff]
        %v2574 = vld [vmem:[%s401 + $0x51] sm:$0xff]
        %v2575 = vld [vmem:[%s401 + $0x61] sm:$0xff]
        %v2576 = vld [vmem:[%s401 + $0x69] sm:$0xff]
        %v2577 = vld [vmem:[%s401 + $0x79] sm:$0xff]
        %v2578 = vld [vmem:[%s401 + $0x81] sm:$0xff]
        %v2579 = vld [vmem:[%s401 + $0x91] sm:$0xff]
        %v2580 = vld [vmem:[%s401 + $0x99] sm:$0xff]
        %v2581 = vld [vmem:[%s401 + $0xa9] sm:$0xff]
        %v2582 = vld [vmem:[%s401 + $0xb1] sm:$0xff]
        %v2583 = vld [vmem:[%s401 + $0xc1] sm:$0xff]
        %v2584 = vld [vmem:[%s401 + $0xc9] sm:$0xff]
        %v2585 = vld [vmem:[%s401 + $0xd9] sm:$0xff]
        %v2586 = vld [vmem:[%s401 + $0xe1] sm:$0xff]
        %v2587 = vld [vmem:[%s401 + $0xf1] sm:$0xff]
        %v2588 = vld [vmem:[%s401 + $0xf9] sm:$0xff]
        %v2589 = vld [vmem:[%s401 + $0x109] sm:$0xff]
        %v2590 = vld [vmem:[%s401 + $0x111] sm:$0xff]
        %v2591 = vld [vmem:[%s401 + $0x121] sm:$0xff]
        %v2592 = vld [vmem:[%s401 + $0x129] sm:$0xff]
        %v2593 = vld [vmem:[%s401 + $0x139] sm:$0xff]
        %v2594 = vld [vmem:[%s401 + $0x141] sm:$0xff]
        %v2595 = vld [vmem:[%s401 + $0x151] sm:$0xff]
        %v2596 = vld [vmem:[%s401 + $0x159] sm:$0xff]
        %v2597 = vld [vmem:[%s401 + $0x169] sm:$0xff]
        %v2598 = vld [vmem:[%s401 + $0x171] sm:$0xff]
        %v2599 = vld [vmem:[%s401 + $0x2] sm:$0xff]
        %v2600 = vld [vmem:[%s401 + $0xa] sm:$0xff]
        %v2601 = vld [vmem:[%s401 + $0x1a] sm:$0xff]
        %v2602 = vld [vmem:[%s401 + $0x22] sm:$0xff]
        %v2603 = vld [vmem:[%s401 + $0x32] sm:$0xff]
        %v2604 = vld [vmem:[%s401 + $0x3a] sm:$0xff]
        %v2605 = vld [vmem:[%s401 + $0x4a] sm:$0xff]
        %v2606 = vld [vmem:[%s401 + $0x52] sm:$0xff]
        %v2607 = vld [vmem:[%s401 + $0x62] sm:$0xff]
        %v2608 = vld [vmem:[%s401 + $0x6a] sm:$0xff]
        %v2609 = vld [vmem:[%s401 + $0x7a] sm:$0xff]
        %v2610 = vld [vmem:[%s401 + $0x82] sm:$0xff]
        %v2611 = vld [vmem:[%s401 + $0x92] sm:$0xff]
        %v2612 = vld [vmem:[%s401 + $0x9a] sm:$0xff]
        %v2613 = vld [vmem:[%s401 + $0xaa] sm:$0xff]
        %v2614 = vld [vmem:[%s401 + $0xb2] sm:$0xff]
        %v2615 = vld [vmem:[%s401 + $0xc2] sm:$0xff]
        %v2616 = vld [vmem:[%s401 + $0xca] sm:$0xff]
        %v2617 = vld [vmem:[%s401 + $0xda] sm:$0xff]
        %v2618 = vld [vmem:[%s401 + $0xe2] sm:$0xff]
        %v2619 = vld [vmem:[%s401 + $0xf2] sm:$0xff]
        %v2620 = vld [vmem:[%s401 + $0xfa] sm:$0xff]
        %v2621 = vld [vmem:[%s401 + $0x10a] sm:$0xff]
        %v2622 = vld [vmem:[%s401 + $0x112] sm:$0xff]
        %v2623 = vld [vmem:[%s401 + $0x122] sm:$0xff]
        %v2624 = vld [vmem:[%s401 + $0x12a] sm:$0xff]
        %v2625 = vld [vmem:[%s401 + $0x13a] sm:$0xff]
        %v2626 = vld [vmem:[%s401 + $0x142] sm:$0xff]
        %v2627 = vld [vmem:[%s401 + $0x152] sm:$0xff]
        %v2628 = vld [vmem:[%s401 + $0x15a] sm:$0xff]
        %v2629 = vld [vmem:[%s401 + $0x16a] sm:$0xff]
        %v2630 = vld [vmem:[%s401 + $0x172] sm:$0xff]
        %v2631 = vld [vmem:[#allocation8 + $0x180] sm:$0xff]
        %v2632 = vld [vmem:[#allocation8 + $0x188] sm:$0xff]
        %v2633 = vld [vmem:[#allocation8 + $0x190] sm:$0xff]
        %v2634 = vld [vmem:[#allocation8 + $0x198] sm:$0xff]
        %v2635 = vld [vmem:[#allocation8 + $0x1a0] sm:$0xff]
        %v2636 = vld [vmem:[#allocation8 + $0x1a8] sm:$0xff]
        %v2637 = vld [vmem:[#allocation8 + $0x1b0] sm:$0xff]
        %v2638 = vld [vmem:[#allocation8 + $0x1b8] sm:$0xff]
        %v2639 = vld [vmem:[#allocation8 + $0x1c0] sm:$0xff]
        %v2640 = vld [vmem:[#allocation8 + $0x1c8] sm:$0xff]
        %v2641 = vld [vmem:[#allocation8 + $0x1d0] sm:$0xff]
        %v2642 = vld [vmem:[#allocation8 + $0x1d8] sm:$0xff]
        %v2643 = vld [vmem:[#allocation8 + $0x1e0] sm:$0xff]
        %v2644 = vld [vmem:[#allocation8 + $0x1e8] sm:$0xff]
        %v2645 = vld [vmem:[#allocation8 + $0x1f0] sm:$0xff]
        %v2646 = vld [vmem:[#allocation8 + $0x1f8] sm:$0xff]
        %v2647 = vld [vmem:[#allocation8 + $0x200] sm:$0xff]
        %v2648 = vld [vmem:[#allocation8 + $0x208] sm:$0xff]
        %v2649 = vld [vmem:[#allocation8 + $0x210] sm:$0xff]
        %v2650 = vld [vmem:[#allocation8 + $0x218] sm:$0xff]
        %v2651 = vld [vmem:[#allocation8 + $0x220] sm:$0xff]
        %v2652 = vld [vmem:[#allocation8 + $0x228] sm:$0xff]
        %v2653 = vld [vmem:[#allocation8 + $0x230] sm:$0xff]
        %v2654 = vld [vmem:[#allocation8 + $0x238] sm:$0xff]
        %v2655 = vld [vmem:[#allocation8 + $0x240] sm:$0xff]
        %v2656 = vld [vmem:[#allocation8 + $0x248] sm:$0xff]
        %v2657 = vld [vmem:[#allocation8 + $0x250] sm:$0xff]
        %v2658 = vld [vmem:[#allocation8 + $0x258] sm:$0xff]
        %v2659 = vld [vmem:[#allocation8 + $0x260] sm:$0xff]
        %v2660 = vld [vmem:[#allocation8 + $0x268] sm:$0xff]
        %v2661 = vld [vmem:[#allocation8 + $0x270] sm:$0xff]
        %v2662 = vld [vmem:[#allocation8 + $0x278] sm:$0xff]
        %v2663 = vld [vmem:[#allocation8 + $0x280] sm:$0xff]
        %v2664 = vld [vmem:[#allocation8 + $0x288] sm:$0xff]
        %v2665 = vld [vmem:[#allocation8 + $0x290] sm:$0xff]
        %v2666 = vld [vmem:[#allocation8 + $0x298] sm:$0xff]
        %v2667 = vld [vmem:[#allocation8 + $0x2a0] sm:$0xff]
        %v2668 = vld [vmem:[#allocation8 + $0x2a8] sm:$0xff]
        %v2669 = vld [vmem:[#allocation8 + $0x2b0] sm:$0xff]
        %v2670 = vld [vmem:[#allocation8 + $0x2b8] sm:$0xff]
        %v2671 = vld [vmem:[#allocation8 + $0x2c0] sm:$0xff]
        %v2672 = vld [vmem:[#allocation8 + $0x2c8] sm:$0xff]
        %v2673 = vld [vmem:[#allocation8 + $0x2d0] sm:$0xff]
        %v2674 = vld [vmem:[#allocation8 + $0x2d8] sm:$0xff]
        %v2675 = vld [vmem:[#allocation8 + $0x2e0] sm:$0xff]
        %v2676 = vld [vmem:[#allocation8 + $0x2e8] sm:$0xff]
        %v2677 = vld [vmem:[#allocation8 + $0x2f0] sm:$0xff]
        %v2678 = vld [vmem:[#allocation8 + $0x2f8] sm:$0xff]
        %2679 = vmatprep.subr.mxu0 0.0
        %2680 = vmatpush1.msra.mxu0 %v2646
        %2681 = vmatprep.subr.mxu0 0.0
        %2682 = vmatpush1.msra.mxu0 %v2645
        %2683 = vmatprep.subr.mxu0 0.0
        %2684 = vmatpush1.msra.mxu0 %v2644
        %2685 = vmatprep.subr.mxu0 0.0
        %2686 = vmatpush1.msra.mxu0 %v2643
        %2687 = vmatprep.subr.mxu0 0.0
        %2688 = vmatpush1.msra.mxu0 %v2642
        %2689 = vmatprep.subr.mxu0 0.0
        %2690 = vmatpush1.msra.mxu0 %v2641
        %2691 = vmatprep.subr.mxu0 0.0
        %2692 = vmatpush1.msra.mxu0 %v2640
        %2693 = vmatprep.subr.mxu0 0.0
        %2694 = vmatpush1.msra.mxu0 %v2639
        %2695 = vmatprep.subr.mxu0 0.0
        %2696 = vmatpush1.msra.mxu0 %v2638
        %2697 = vmatprep.subr.mxu0 0.0
        %2698 = vmatpush1.msra.mxu0 %v2637
        %2699 = vmatprep.subr.mxu0 0.0
        %2700 = vmatpush1.msra.mxu0 %v2636
        %2701 = vmatprep.subr.mxu0 0.0
        %2702 = vmatpush1.msra.mxu0 %v2635
        %2703 = vmatprep.subr.mxu0 0.0
        %2704 = vmatpush1.msra.mxu0 %v2634
        %2705 = vmatprep.subr.mxu0 0.0
        %2706 = vmatpush1.msra.mxu0 %v2633
        %2707 = vmatprep.subr.mxu0 0.0
        %2708 = vmatpush1.msra.mxu0 %v2632
        %2709 = vmatprep.subr.mxu0 0.0
        %2710 = vmatpush1.msra.mxu0 %v2631
        %2711 = vmatprep.subr.mxu0 0.0
        %2712 = vmatpush2.msra.mxu0 %v2662
        %2713 = vmatprep.subr.mxu0 0.0
        %2714 = vmatpush2.msra.mxu0 %v2661
        %2715 = vmatprep.subr.mxu0 0.0
        %2716 = vmatpush2.msra.mxu0 %v2660
        %2717 = vmatprep.subr.mxu0 0.0
        %2718 = vmatpush2.msra.mxu0 %v2659
        %2719 = vmatprep.subr.mxu0 0.0
        %2720 = vmatpush2.msra.mxu0 %v2658
        %2721 = vmatprep.subr.mxu0 0.0
        %2722 = vmatpush2.msra.mxu0 %v2657
        %2723 = vmatprep.subr.mxu0 0.0
        %2724 = vmatpush2.msra.mxu0 %v2656
        %2725 = vmatprep.subr.mxu0 0.0
        %2726 = vmatpush2.msra.mxu0 %v2655
        %2727 = vmatprep.subr.mxu0 0.0
        %2728 = vmatpush2.msra.mxu0 %v2654
        %2729 = vmatprep.subr.mxu0 0.0
        %2730 = vmatpush2.msra.mxu0 %v2653
        %2731 = vmatprep.subr.mxu0 0.0
        %2732 = vmatpush2.msra.mxu0 %v2652
        %2733 = vmatprep.subr.mxu0 0.0
        %2734 = vmatpush2.msra.mxu0 %v2651
        %2735 = vmatprep.subr.mxu0 0.0
        %2736 = vmatpush2.msra.mxu0 %v2650
        %2737 = vmatprep.subr.mxu0 0.0
        %2738 = vmatpush2.msra.mxu0 %v2649
        %2739 = vmatprep.subr.mxu0 0.0
        %2740 = vmatpush2.msra.mxu0 %v2648
        %2741 = vmatprep.subr.mxu0 0.0
        %2742 = vmatpush2.msra.mxu0 %v2647
        %2743 = vmatprep.mubr.f32.mxu0 %v2567
        %2744 = vmatmul.mubr.f32.gmra.mxu0 %v2535
        %v2745 = vpop.f32.mrf.mxu0
        %v2746 = vadd.f32 0.0, %v2745
        %v2747 = vpop.f32.mrf.mxu0
        %2748 = vmatprep.mubr.f32.mxu0 %v2568
        %2749 = vmatmul.mubr.f32.gmra.mxu0 %v2536
        %v2750 = vpop.f32.mrf.mxu0
        %v2751 = vadd.f32 0.0, %v2750
        %v2752 = vpop.f32.mrf.mxu0
        %2753 = vmatprep.mubr.f32.mxu0 %v2569
        %2754 = vmatmul.mubr.f32.gmra.mxu0 %v2537
        %v2755 = vpop.f32.mrf.mxu0
        %v2756 = vadd.f32 0.0, %v2755
        %v2757 = vpop.f32.mrf.mxu0
        %2758 = vmatprep.mubr.f32.mxu0 %v2570
        %2759 = vmatmul.mubr.f32.gmra.mxu0 %v2538
        %v2760 = vpop.f32.mrf.mxu0
        %v2761 = vadd.f32 0.0, %v2760
        %v2762 = vpop.f32.mrf.mxu0
        %2763 = vmatprep.mubr.f32.mxu0 %v2571
        %2764 = vmatmul.mubr.f32.gmra.mxu0 %v2539
        %v2765 = vpop.f32.mrf.mxu0
        %v2766 = vadd.f32 0.0, %v2765
        %v2767 = vpop.f32.mrf.mxu0
        %2768 = vmatprep.mubr.f32.mxu0 %v2572
        %2769 = vmatmul.mubr.f32.gmra.mxu0 %v2540
        %v2770 = vpop.f32.mrf.mxu0
        %v2771 = vadd.f32 0.0, %v2770
        %v2772 = vpop.f32.mrf.mxu0
        %2773 = vmatprep.mubr.f32.mxu0 %v2573
        %2774 = vmatmul.mubr.f32.gmra.mxu0 %v2541
        %v2775 = vpop.f32.mrf.mxu0
        %v2776 = vadd.f32 0.0, %v2775
        %v2777 = vpop.f32.mrf.mxu0
        %2778 = vmatprep.mubr.f32.mxu0 %v2574
        %2779 = vmatmul.mubr.f32.gmra.mxu0 %v2542
        %v2780 = vpop.f32.mrf.mxu0
        %v2781 = vadd.f32 0.0, %v2780
        %v2782 = vpop.f32.mrf.mxu0
        %2783 = vmatprep.mubr.f32.mxu0 %v2575
        %2784 = vmatmul.mubr.f32.gmra.mxu0 %v2543
        %v2785 = vpop.f32.mrf.mxu0
        %v2786 = vadd.f32 0.0, %v2785
        %v2787 = vpop.f32.mrf.mxu0
        %2788 = vmatprep.mubr.f32.mxu0 %v2576
        %2789 = vmatmul.mubr.f32.gmra.mxu0 %v2544
        %v2790 = vpop.f32.mrf.mxu0
        %v2791 = vadd.f32 0.0, %v2790
        %v2792 = vpop.f32.mrf.mxu0
        %2793 = vmatprep.mubr.f32.mxu0 %v2577
        %2794 = vmatmul.mubr.f32.gmra.mxu0 %v2545
        %v2795 = vpop.f32.mrf.mxu0
        %v2796 = vadd.f32 0.0, %v2795
        %v2797 = vpop.f32.mrf.mxu0
        %2798 = vmatprep.mubr.f32.mxu0 %v2578
        %2799 = vmatmul.mubr.f32.gmra.mxu0 %v2546
        %v2800 = vpop.f32.mrf.mxu0
        %v2801 = vadd.f32 0.0, %v2800
        %v2802 = vpop.f32.mrf.mxu0
        %2803 = vmatprep.mubr.f32.mxu0 %v2579
        %2804 = vmatmul.mubr.f32.gmra.mxu0 %v2547
        %v2805 = vpop.f32.mrf.mxu0
        %v2806 = vadd.f32 0.0, %v2805
        %v2807 = vpop.f32.mrf.mxu0
        %2808 = vmatprep.mubr.f32.mxu0 %v2580
        %2809 = vmatmul.mubr.f32.gmra.mxu0 %v2548
        %v2810 = vpop.f32.mrf.mxu0
        %v2811 = vadd.f32 0.0, %v2810
        %v2812 = vpop.f32.mrf.mxu0
        %2813 = vmatprep.mubr.f32.mxu0 %v2581
        %2814 = vmatmul.mubr.f32.gmra.mxu0 %v2549
        %v2815 = vpop.f32.mrf.mxu0
        %v2816 = vadd.f32 0.0, %v2815
        %v2817 = vpop.f32.mrf.mxu0
        %2818 = vmatprep.mubr.f32.mxu0 %v2582
        %2819 = vmatmul.mubr.f32.gmra.mxu0 %v2550
        %v2820 = vpop.f32.mrf.mxu0
        %v2821 = vadd.f32 0.0, %v2820
        %v2822 = vpop.f32.mrf.mxu0
        %2823 = vmatprep.mubr.f32.mxu0 %v2583
        %2824 = vmatmul.mubr.f32.gmra.mxu0 %v2551
        %v2825 = vpop.f32.mrf.mxu0
        %v2826 = vadd.f32 0.0, %v2825
        %v2827 = vpop.f32.mrf.mxu0
        %2828 = vmatprep.mubr.f32.mxu0 %v2584
        %2829 = vmatmul.mubr.f32.gmra.mxu0 %v2552
        %v2830 = vpop.f32.mrf.mxu0
        %v2831 = vadd.f32 0.0, %v2830
        %v2832 = vpop.f32.mrf.mxu0
        %2833 = vmatprep.mubr.f32.mxu0 %v2585
        %2834 = vmatmul.mubr.f32.gmra.mxu0 %v2553
        %v2835 = vpop.f32.mrf.mxu0
        %v2836 = vadd.f32 0.0, %v2835
        %v2837 = vpop.f32.mrf.mxu0
        %2838 = vmatprep.mubr.f32.mxu0 %v2586
        %2839 = vmatmul.mubr.f32.gmra.mxu0 %v2554
        %v2840 = vpop.f32.mrf.mxu0
        %v2841 = vadd.f32 0.0, %v2840
        %v2842 = vpop.f32.mrf.mxu0
        %2843 = vmatprep.mubr.f32.mxu0 %v2587
        %2844 = vmatmul.mubr.f32.gmra.mxu0 %v2555
        %v2845 = vpop.f32.mrf.mxu0
        %v2846 = vadd.f32 0.0, %v2845
        %v2847 = vpop.f32.mrf.mxu0
        %2848 = vmatprep.mubr.f32.mxu0 %v2588
        %2849 = vmatmul.mubr.f32.gmra.mxu0 %v2556
        %v2850 = vpop.f32.mrf.mxu0
        %v2851 = vadd.f32 0.0, %v2850
        %v2852 = vpop.f32.mrf.mxu0
        %2853 = vmatprep.mubr.f32.mxu0 %v2589
        %2854 = vmatmul.mubr.f32.gmra.mxu0 %v2557
        %v2855 = vpop.f32.mrf.mxu0
        %v2856 = vadd.f32 0.0, %v2855
        %v2857 = vpop.f32.mrf.mxu0
        %2858 = vmatprep.mubr.f32.mxu0 %v2590
        %2859 = vmatmul.mubr.f32.gmra.mxu0 %v2558
        %v2860 = vpop.f32.mrf.mxu0
        %v2861 = vadd.f32 0.0, %v2860
        %v2862 = vpop.f32.mrf.mxu0
        %2863 = vmatprep.mubr.f32.mxu0 %v2591
        %2864 = vmatmul.mubr.f32.gmra.mxu0 %v2559
        %v2865 = vpop.f32.mrf.mxu0
        %v2866 = vadd.f32 0.0, %v2865
        %v2867 = vpop.f32.mrf.mxu0
        %2868 = vmatprep.mubr.f32.mxu0 %v2592
        %2869 = vmatmul.mubr.f32.gmra.mxu0 %v2560
        %v2870 = vpop.f32.mrf.mxu0
        %v2871 = vadd.f32 0.0, %v2870
        %v2872 = vpop.f32.mrf.mxu0
        %2873 = vmatprep.mubr.f32.mxu0 %v2593
        %2874 = vmatmul.mubr.f32.gmra.mxu0 %v2561
        %v2875 = vpop.f32.mrf.mxu0
        %v2876 = vadd.f32 0.0, %v2875
        %v2877 = vpop.f32.mrf.mxu0
        %2878 = vmatprep.mubr.f32.mxu0 %v2594
        %2879 = vmatmul.mubr.f32.gmra.mxu0 %v2562
        %v2880 = vpop.f32.mrf.mxu0
        %v2881 = vadd.f32 0.0, %v2880
        %v2882 = vpop.f32.mrf.mxu0
        %2883 = vmatprep.mubr.f32.mxu0 %v2595
        %2884 = vmatmul.mubr.f32.gmra.mxu0 %v2563
        %v2885 = vpop.f32.mrf.mxu0
        %v2886 = vadd.f32 0.0, %v2885
        %v2887 = vpop.f32.mrf.mxu0
        %2888 = vmatprep.mubr.f32.mxu0 %v2596
        %2889 = vmatmul.mubr.f32.gmra.mxu0 %v2564
        %v2890 = vpop.f32.mrf.mxu0
        %v2891 = vadd.f32 0.0, %v2890
        %v2892 = vpop.f32.mrf.mxu0
        %2893 = vmatprep.mubr.f32.mxu0 %v2597
        %2894 = vmatmul.mubr.f32.gmra.mxu0 %v2565
        %v2895 = vpop.f32.mrf.mxu0
        %v2896 = vadd.f32 0.0, %v2895
        %v2897 = vpop.f32.mrf.mxu0
        %2898 = vmatprep.mubr.f32.mxu0 %v2598
        %2899 = vmatmul.mubr.f32.gmra.mxu0 %v2566
        %v2900 = vpop.f32.mrf.mxu0
        %v2901 = vadd.f32 0.0, %v2900
        %v2902 = vpop.f32.mrf.mxu0
        %2903 = vdwg.mxu0
        %2904 = vmatprep.subr.mxu0 0.0
        %2905 = vmatpush1.msra.mxu0 %v2678
        %2906 = vmatprep.subr.mxu0 0.0
        %2907 = vmatpush1.msra.mxu0 %v2677
        %2908 = vmatprep.subr.mxu0 0.0
        %2909 = vmatpush1.msra.mxu0 %v2676
        %2910 = vmatprep.subr.mxu0 0.0
        %2911 = vmatpush1.msra.mxu0 %v2675
        %2912 = vmatprep.subr.mxu0 0.0
        %2913 = vmatpush1.msra.mxu0 %v2674
        %2914 = vmatprep.subr.mxu0 0.0
        %2915 = vmatpush1.msra.mxu0 %v2673
        %2916 = vmatprep.subr.mxu0 0.0
        %2917 = vmatpush1.msra.mxu0 %v2672
        %2918 = vmatprep.subr.mxu0 0.0
        %2919 = vmatpush1.msra.mxu0 %v2671
        %2920 = vmatprep.subr.mxu0 0.0
        %2921 = vmatpush1.msra.mxu0 %v2670
        %2922 = vmatprep.subr.mxu0 0.0
        %2923 = vmatpush1.msra.mxu0 %v2669
        %2924 = vmatprep.subr.mxu0 0.0
        %2925 = vmatpush1.msra.mxu0 %v2668
        %2926 = vmatprep.subr.mxu0 0.0
        %2927 = vmatpush1.msra.mxu0 %v2667
        %2928 = vmatprep.subr.mxu0 0.0
        %2929 = vmatpush1.msra.mxu0 %v2666
        %2930 = vmatprep.subr.mxu0 0.0
        %2931 = vmatpush1.msra.mxu0 %v2665
        %2932 = vmatprep.subr.mxu0 0.0
        %2933 = vmatpush1.msra.mxu0 %v2664
        %2934 = vmatprep.subr.mxu0 0.0
        %2935 = vmatpush1.msra.mxu0 %v2663
        %2936 = vmatprep.subr.mxu0 0.0
        %2937 = vmatpush2.msra.mxu0 0.0
        %2938 = vmatprep.subr.mxu0 0.0
        %2939 = vmatpush2.msra.mxu0 0.0
        %2940 = vmatprep.subr.mxu0 0.0
        %2941 = vmatpush2.msra.mxu0 0.0
        %2942 = vmatprep.subr.mxu0 0.0
        %2943 = vmatpush2.msra.mxu0 0.0
        %2944 = vmatprep.subr.mxu0 0.0
        %2945 = vmatpush2.msra.mxu0 0.0
        %2946 = vmatprep.subr.mxu0 0.0
        %2947 = vmatpush2.msra.mxu0 0.0
        %2948 = vmatprep.subr.mxu0 0.0
        %2949 = vmatpush2.msra.mxu0 0.0
        %2950 = vmatprep.subr.mxu0 0.0
        %2951 = vmatpush2.msra.mxu0 0.0
        %2952 = vmatprep.subr.mxu0 0.0
        %2953 = vmatpush2.msra.mxu0 0.0
        %2954 = vmatprep.subr.mxu0 0.0
        %2955 = vmatpush2.msra.mxu0 0.0
        %2956 = vmatprep.subr.mxu0 0.0
        %2957 = vmatpush2.msra.mxu0 0.0
        %2958 = vmatprep.subr.mxu0 0.0
        %2959 = vmatpush2.msra.mxu0 0.0
        %2960 = vmatprep.subr.mxu0 0.0
        %2961 = vmatpush2.msra.mxu0 0.0
        %2962 = vmatprep.subr.mxu0 0.0
        %2963 = vmatpush2.msra.mxu0 0.0
        %2964 = vmatprep.subr.mxu0 0.0
        %2965 = vmatpush2.msra.mxu0 0.0
        %2966 = vmatprep.subr.mxu0 0.0
        %2967 = vmatpush2.msra.mxu0 0.0
        %2968 = vmatprep.mubr.f32.mxu0 0.0
        %2969 = vmatmul.mubr.f32.gmra.mxu0 %v2599
        %v2970 = vpop.f32.mrf.mxu0
        %v2971 = vadd.f32 %v2746, %v2970
        %v2972 = vpop.f32.mrf.mxu0
        %2973 = vmatprep.mubr.f32.mxu0 0.0
        %2974 = vmatmul.mubr.f32.gmra.mxu0 %v2600
        %v2975 = vpop.f32.mrf.mxu0
        %v2976 = vadd.f32 %v2751, %v2975
        %v2977 = vpop.f32.mrf.mxu0
        %2978 = vmatprep.mubr.f32.mxu0 0.0
        %2979 = vmatmul.mubr.f32.gmra.mxu0 %v2601
        %v2980 = vpop.f32.mrf.mxu0
        %v2981 = vadd.f32 %v2756, %v2980
        %v2982 = vpop.f32.mrf.mxu0
        %2983 = vmatprep.mubr.f32.mxu0 0.0
        %2984 = vmatmul.mubr.f32.gmra.mxu0 %v2602
        %v2985 = vpop.f32.mrf.mxu0
        %v2986 = vadd.f32 %v2761, %v2985
        %v2987 = vpop.f32.mrf.mxu0
        %2988 = vmatprep.mubr.f32.mxu0 0.0
        %2989 = vmatmul.mubr.f32.gmra.mxu0 %v2603
        %v2990 = vpop.f32.mrf.mxu0
        %v2991 = vadd.f32 %v2766, %v2990
        %v2992 = vpop.f32.mrf.mxu0
        %2993 = vmatprep.mubr.f32.mxu0 0.0
        %2994 = vmatmul.mubr.f32.gmra.mxu0 %v2604
        %v2995 = vpop.f32.mrf.mxu0
        %v2996 = vadd.f32 %v2771, %v2995
        %v2997 = vpop.f32.mrf.mxu0
        %2998 = vmatprep.mubr.f32.mxu0 0.0
        %2999 = vmatmul.mubr.f32.gmra.mxu0 %v2605
        %v3000 = vpop.f32.mrf.mxu0
        %v3001 = vadd.f32 %v2776, %v3000
        %v3002 = vpop.f32.mrf.mxu0
        %3003 = vmatprep.mubr.f32.mxu0 0.0
        %3004 = vmatmul.mubr.f32.gmra.mxu0 %v2606
        %v3005 = vpop.f32.mrf.mxu0
        %v3006 = vadd.f32 %v2781, %v3005
        %v3007 = vpop.f32.mrf.mxu0
        %3008 = vmatprep.mubr.f32.mxu0 0.0
        %3009 = vmatmul.mubr.f32.gmra.mxu0 %v2607
        %v3010 = vpop.f32.mrf.mxu0
        %v3011 = vadd.f32 %v2786, %v3010
        %v3012 = vpop.f32.mrf.mxu0
        %3013 = vmatprep.mubr.f32.mxu0 0.0
        %3014 = vmatmul.mubr.f32.gmra.mxu0 %v2608
        %v3015 = vpop.f32.mrf.mxu0
        %v3016 = vadd.f32 %v2791, %v3015
        %v3017 = vpop.f32.mrf.mxu0
        %3018 = vmatprep.mubr.f32.mxu0 0.0
        %3019 = vmatmul.mubr.f32.gmra.mxu0 %v2609
        %v3020 = vpop.f32.mrf.mxu0
        %v3021 = vadd.f32 %v2796, %v3020
        %v3022 = vpop.f32.mrf.mxu0
        %3023 = vmatprep.mubr.f32.mxu0 0.0
        %3024 = vmatmul.mubr.f32.gmra.mxu0 %v2610
        %v3025 = vpop.f32.mrf.mxu0
        %v3026 = vadd.f32 %v2801, %v3025
        %v3027 = vpop.f32.mrf.mxu0
        %3028 = vmatprep.mubr.f32.mxu0 0.0
        %3029 = vmatmul.mubr.f32.gmra.mxu0 %v2611
        %v3030 = vpop.f32.mrf.mxu0
        %v3031 = vadd.f32 %v2806, %v3030
        %v3032 = vpop.f32.mrf.mxu0
        %3033 = vmatprep.mubr.f32.mxu0 0.0
        %3034 = vmatmul.mubr.f32.gmra.mxu0 %v2612
        %v3035 = vpop.f32.mrf.mxu0
        %v3036 = vadd.f32 %v2811, %v3035
        %v3037 = vpop.f32.mrf.mxu0
        %3038 = vmatprep.mubr.f32.mxu0 0.0
        %3039 = vmatmul.mubr.f32.gmra.mxu0 %v2613
        %v3040 = vpop.f32.mrf.mxu0
        %v3041 = vadd.f32 %v2816, %v3040
        %v3042 = vpop.f32.mrf.mxu0
        %3043 = vmatprep.mubr.f32.mxu0 0.0
        %3044 = vmatmul.mubr.f32.gmra.mxu0 %v2614
        %v3045 = vpop.f32.mrf.mxu0
        %v3046 = vadd.f32 %v2821, %v3045
        %v3047 = vpop.f32.mrf.mxu0
        %3048 = vmatprep.mubr.f32.mxu0 0.0
        %3049 = vmatmul.mubr.f32.gmra.mxu0 %v2615
        %v3050 = vpop.f32.mrf.mxu0
        %v3051 = vadd.f32 %v2826, %v3050
        %v3052 = vpop.f32.mrf.mxu0
        %3053 = vmatprep.mubr.f32.mxu0 0.0
        %3054 = vmatmul.mubr.f32.gmra.mxu0 %v2616
        %v3055 = vpop.f32.mrf.mxu0
        %v3056 = vadd.f32 %v2831, %v3055
        %v3057 = vpop.f32.mrf.mxu0
        %3058 = vmatprep.mubr.f32.mxu0 0.0
        %3059 = vmatmul.mubr.f32.gmra.mxu0 %v2617
        %v3060 = vpop.f32.mrf.mxu0
        %v3061 = vadd.f32 %v2836, %v3060
        %v3062 = vpop.f32.mrf.mxu0
        %3063 = vmatprep.mubr.f32.mxu0 0.0
        %3064 = vmatmul.mubr.f32.gmra.mxu0 %v2618
        %v3065 = vpop.f32.mrf.mxu0
        %v3066 = vadd.f32 %v2841, %v3065
        %v3067 = vpop.f32.mrf.mxu0
        %3068 = vmatprep.mubr.f32.mxu0 0.0
        %3069 = vmatmul.mubr.f32.gmra.mxu0 %v2619
        %v3070 = vpop.f32.mrf.mxu0
        %v3071 = vadd.f32 %v2846, %v3070
        %v3072 = vpop.f32.mrf.mxu0
        %3073 = vmatprep.mubr.f32.mxu0 0.0
        %3074 = vmatmul.mubr.f32.gmra.mxu0 %v2620
        %v3075 = vpop.f32.mrf.mxu0
        %v3076 = vadd.f32 %v2851, %v3075
        %v3077 = vpop.f32.mrf.mxu0
        %3078 = vmatprep.mubr.f32.mxu0 0.0
        %3079 = vmatmul.mubr.f32.gmra.mxu0 %v2621
        %v3080 = vpop.f32.mrf.mxu0
        %v3081 = vadd.f32 %v2856, %v3080
        %v3082 = vpop.f32.mrf.mxu0
        %3083 = vmatprep.mubr.f32.mxu0 0.0
        %3084 = vmatmul.mubr.f32.gmra.mxu0 %v2622
        %v3085 = vpop.f32.mrf.mxu0
        %v3086 = vadd.f32 %v2861, %v3085
        %v3087 = vpop.f32.mrf.mxu0
        %3088 = vmatprep.mubr.f32.mxu0 0.0
        %3089 = vmatmul.mubr.f32.gmra.mxu0 %v2623
        %v3090 = vpop.f32.mrf.mxu0
        %v3091 = vadd.f32 %v2866, %v3090
        %v3092 = vpop.f32.mrf.mxu0
        %3093 = vmatprep.mubr.f32.mxu0 0.0
        %3094 = vmatmul.mubr.f32.gmra.mxu0 %v2624
        %v3095 = vpop.f32.mrf.mxu0
        %v3096 = vadd.f32 %v2871, %v3095
        %v3097 = vpop.f32.mrf.mxu0
        %3098 = vmatprep.mubr.f32.mxu0 0.0
        %3099 = vmatmul.mubr.f32.gmra.mxu0 %v2625
        %v3100 = vpop.f32.mrf.mxu0
        %v3101 = vadd.f32 %v2876, %v3100
        %v3102 = vpop.f32.mrf.mxu0
        %3103 = vmatprep.mubr.f32.mxu0 0.0
        %3104 = vmatmul.mubr.f32.gmra.mxu0 %v2626
        %v3105 = vpop.f32.mrf.mxu0
        %v3106 = vadd.f32 %v2881, %v3105
        %v3107 = vpop.f32.mrf.mxu0
        %3108 = vmatprep.mubr.f32.mxu0 0.0
        %3109 = vmatmul.mubr.f32.gmra.mxu0 %v2627
        %v3110 = vpop.f32.mrf.mxu0
        %v3111 = vadd.f32 %v2886, %v3110
        %v3112 = vpop.f32.mrf.mxu0
        %3113 = vmatprep.mubr.f32.mxu0 0.0
        %3114 = vmatmul.mubr.f32.gmra.mxu0 %v2628
        %v3115 = vpop.f32.mrf.mxu0
        %v3116 = vadd.f32 %v2891, %v3115
        %v3117 = vpop.f32.mrf.mxu0
        %3118 = vmatprep.mubr.f32.mxu0 0.0
        %3119 = vmatmul.mubr.f32.gmra.mxu0 %v2629
        %v3120 = vpop.f32.mrf.mxu0
        %v3121 = vadd.f32 %v2896, %v3120
        %v3122 = vpop.f32.mrf.mxu0
        %3123 = vmatprep.mubr.f32.mxu0 0.0
        %3124 = vmatmul.mubr.f32.gmra.mxu0 %v2630
        %v3125 = vpop.f32.mrf.mxu0
        %v3126 = vadd.f32 %v2901, %v3125
        %v3127 = vpop.f32.mrf.mxu0
        %3128 = vdwg.mxu0
        %3129 = vmatprep.subr.mxu0 0.0
        %3130 = vmatpush1.msra.mxu0 %v2502
        %3131 = vmatprep.subr.mxu0 0.0
        %3132 = vmatpush1.msra.mxu0 %v2501
        %3133 = vmatprep.subr.mxu0 0.0
        %3134 = vmatpush1.msra.mxu0 %v2500
        %3135 = vmatprep.subr.mxu0 0.0
        %3136 = vmatpush1.msra.mxu0 %v2499
        %3137 = vmatprep.subr.mxu0 0.0
        %3138 = vmatpush1.msra.mxu0 %v2498
        %3139 = vmatprep.subr.mxu0 0.0
        %3140 = vmatpush1.msra.mxu0 %v2497
        %3141 = vmatprep.subr.mxu0 0.0
        %3142 = vmatpush1.msra.mxu0 %v2496
        %3143 = vmatprep.subr.mxu0 0.0
        %3144 = vmatpush1.msra.mxu0 %v2495
        %3145 = vmatprep.subr.mxu0 0.0
        %3146 = vmatpush1.msra.mxu0 %v2494
        %3147 = vmatprep.subr.mxu0 0.0
        %3148 = vmatpush1.msra.mxu0 %v2493
        %3149 = vmatprep.subr.mxu0 0.0
        %3150 = vmatpush1.msra.mxu0 %v2492
        %3151 = vmatprep.subr.mxu0 0.0
        %3152 = vmatpush1.msra.mxu0 %v2491
        %3153 = vmatprep.subr.mxu0 0.0
        %3154 = vmatpush1.msra.mxu0 %v2490
        %3155 = vmatprep.subr.mxu0 0.0
        %3156 = vmatpush1.msra.mxu0 %v2489
        %3157 = vmatprep.subr.mxu0 0.0
        %3158 = vmatpush1.msra.mxu0 %v2488
        %3159 = vmatprep.subr.mxu0 0.0
        %3160 = vmatpush1.msra.mxu0 %v2487
        %3161 = vmatprep.subr.mxu0 0.0
        %3162 = vmatpush2.msra.mxu0 %v2518
        %3163 = vmatprep.subr.mxu0 0.0
        %3164 = vmatpush2.msra.mxu0 %v2517
        %3165 = vmatprep.subr.mxu0 0.0
        %3166 = vmatpush2.msra.mxu0 %v2516
        %3167 = vmatprep.subr.mxu0 0.0
        %3168 = vmatpush2.msra.mxu0 %v2515
        %3169 = vmatprep.subr.mxu0 0.0
        %3170 = vmatpush2.msra.mxu0 %v2514
        %3171 = vmatprep.subr.mxu0 0.0
        %3172 = vmatpush2.msra.mxu0 %v2513
        %3173 = vmatprep.subr.mxu0 0.0
        %3174 = vmatpush2.msra.mxu0 %v2512
        %3175 = vmatprep.subr.mxu0 0.0
        %3176 = vmatpush2.msra.mxu0 %v2511
        %3177 = vmatprep.subr.mxu0 0.0
        %3178 = vmatpush2.msra.mxu0 %v2510
        %3179 = vmatprep.subr.mxu0 0.0
        %3180 = vmatpush2.msra.mxu0 %v2509
        %3181 = vmatprep.subr.mxu0 0.0
        %3182 = vmatpush2.msra.mxu0 %v2508
        %3183 = vmatprep.subr.mxu0 0.0
        %3184 = vmatpush2.msra.mxu0 %v2507
        %3185 = vmatprep.subr.mxu0 0.0
        %3186 = vmatpush2.msra.mxu0 %v2506
        %3187 = vmatprep.subr.mxu0 0.0
        %3188 = vmatpush2.msra.mxu0 %v2505
        %3189 = vmatprep.subr.mxu0 0.0
        %3190 = vmatpush2.msra.mxu0 %v2504
        %3191 = vmatprep.subr.mxu0 0.0
        %3192 = vmatpush2.msra.mxu0 %v2503
        %3193 = vmatprep.mubr.f32.mxu0 %v2423
        %3194 = vmatmul.mubr.f32.gmra.mxu0 %v2391
        %v3195 = vpop.f32.mrf.mxu0
        %v3196 = vadd.f32 %v2971, %v3195
        %v3197 = vpop.f32.mrf.mxu0
        %3198 = vmatprep.mubr.f32.mxu0 %v2424
        %3199 = vmatmul.mubr.f32.gmra.mxu0 %v2392
        %v3200 = vpop.f32.mrf.mxu0
        %v3201 = vadd.f32 %v2976, %v3200
        %v3202 = vpop.f32.mrf.mxu0
        %3203 = vmatprep.mubr.f32.mxu0 %v2425
        %3204 = vmatmul.mubr.f32.gmra.mxu0 %v2393
        %v3205 = vpop.f32.mrf.mxu0
        %v3206 = vadd.f32 %v2981, %v3205
        %v3207 = vpop.f32.mrf.mxu0
        %3208 = vmatprep.mubr.f32.mxu0 %v2426
        %3209 = vmatmul.mubr.f32.gmra.mxu0 %v2394
        %v3210 = vpop.f32.mrf.mxu0
        %v3211 = vadd.f32 %v2986, %v3210
        %v3212 = vpop.f32.mrf.mxu0
        %3213 = vmatprep.mubr.f32.mxu0 %v2427
        %3214 = vmatmul.mubr.f32.gmra.mxu0 %v2395
        %v3215 = vpop.f32.mrf.mxu0
        %v3216 = vadd.f32 %v2991, %v3215
        %v3217 = vpop.f32.mrf.mxu0
        %3218 = vmatprep.mubr.f32.mxu0 %v2428
        %3219 = vmatmul.mubr.f32.gmra.mxu0 %v2396
        %v3220 = vpop.f32.mrf.mxu0
        %v3221 = vadd.f32 %v2996, %v3220
        %v3222 = vpop.f32.mrf.mxu0
        %3223 = vmatprep.mubr.f32.mxu0 %v2429
        %3224 = vmatmul.mubr.f32.gmra.mxu0 %v2397
        %v3225 = vpop.f32.mrf.mxu0
        %v3226 = vadd.f32 %v3001, %v3225
        %v3227 = vpop.f32.mrf.mxu0
        %3228 = vmatprep.mubr.f32.mxu0 %v2430
        %3229 = vmatmul.mubr.f32.gmra.mxu0 %v2398
        %v3230 = vpop.f32.mrf.mxu0
        %v3231 = vadd.f32 %v3006, %v3230
        %v3232 = vpop.f32.mrf.mxu0
        %3233 = vmatprep.mubr.f32.mxu0 %v2431
        %3234 = vmatmul.mubr.f32.gmra.mxu0 %v2399
        %v3235 = vpop.f32.mrf.mxu0
        %v3236 = vadd.f32 %v3011, %v3235
        %v3237 = vpop.f32.mrf.mxu0
        %3238 = vmatprep.mubr.f32.mxu0 %v2432
        %3239 = vmatmul.mubr.f32.gmra.mxu0 %v2400
        %v3240 = vpop.f32.mrf.mxu0
        %v3241 = vadd.f32 %v3016, %v3240
        %v3242 = vpop.f32.mrf.mxu0
        %3243 = vmatprep.mubr.f32.mxu0 %v2433
        %3244 = vmatmul.mubr.f32.gmra.mxu0 %v2401
        %v3245 = vpop.f32.mrf.mxu0
        %v3246 = vadd.f32 %v3021, %v3245
        %v3247 = vpop.f32.mrf.mxu0
        %3248 = vmatprep.mubr.f32.mxu0 %v2434
        %3249 = vmatmul.mubr.f32.gmra.mxu0 %v2402
        %v3250 = vpop.f32.mrf.mxu0
        %v3251 = vadd.f32 %v3026, %v3250
        %v3252 = vpop.f32.mrf.mxu0
        %3253 = vmatprep.mubr.f32.mxu0 %v2435
        %3254 = vmatmul.mubr.f32.gmra.mxu0 %v2403
        %v3255 = vpop.f32.mrf.mxu0
        %v3256 = vadd.f32 %v3031, %v3255
        %v3257 = vpop.f32.mrf.mxu0
        %3258 = vmatprep.mubr.f32.mxu0 %v2436
        %3259 = vmatmul.mubr.f32.gmra.mxu0 %v2404
        %v3260 = vpop.f32.mrf.mxu0
        %v3261 = vadd.f32 %v3036, %v3260
        %v3262 = vpop.f32.mrf.mxu0
        %3263 = vmatprep.mubr.f32.mxu0 %v2437
        %3264 = vmatmul.mubr.f32.gmra.mxu0 %v2405
        %v3265 = vpop.f32.mrf.mxu0
        %v3266 = vadd.f32 %v3041, %v3265
        %v3267 = vpop.f32.mrf.mxu0
        %3268 = vmatprep.mubr.f32.mxu0 %v2438
        %3269 = vmatmul.mubr.f32.gmra.mxu0 %v2406
        %v3270 = vpop.f32.mrf.mxu0
        %v3271 = vadd.f32 %v3046, %v3270
        %v3272 = vpop.f32.mrf.mxu0
        %3273 = vmatprep.mubr.f32.mxu0 %v2439
        %3274 = vmatmul.mubr.f32.gmra.mxu0 %v2407
        %v3275 = vpop.f32.mrf.mxu0
        %v3276 = vadd.f32 %v3051, %v3275
        %v3277 = vpop.f32.mrf.mxu0
        %3278 = vmatprep.mubr.f32.mxu0 %v2440
        %3279 = vmatmul.mubr.f32.gmra.mxu0 %v2408
        %v3280 = vpop.f32.mrf.mxu0
        %v3281 = vadd.f32 %v3056, %v3280
        %v3282 = vpop.f32.mrf.mxu0
        %3283 = vmatprep.mubr.f32.mxu0 %v2441
        %3284 = vmatmul.mubr.f32.gmra.mxu0 %v2409
        %v3285 = vpop.f32.mrf.mxu0
        %v3286 = vadd.f32 %v3061, %v3285
        %v3287 = vpop.f32.mrf.mxu0
        %3288 = vmatprep.mubr.f32.mxu0 %v2442
        %3289 = vmatmul.mubr.f32.gmra.mxu0 %v2410
        %v3290 = vpop.f32.mrf.mxu0
        %v3291 = vadd.f32 %v3066, %v3290
        %v3292 = vpop.f32.mrf.mxu0
        %3293 = vmatprep.mubr.f32.mxu0 %v2443
        %3294 = vmatmul.mubr.f32.gmra.mxu0 %v2411
        %v3295 = vpop.f32.mrf.mxu0
        %v3296 = vadd.f32 %v3071, %v3295
        %v3297 = vpop.f32.mrf.mxu0
        %3298 = vmatprep.mubr.f32.mxu0 %v2444
        %3299 = vmatmul.mubr.f32.gmra.mxu0 %v2412
        %v3300 = vpop.f32.mrf.mxu0
        %v3301 = vadd.f32 %v3076, %v3300
        %v3302 = vpop.f32.mrf.mxu0
        %3303 = vmatprep.mubr.f32.mxu0 %v2445
        %3304 = vmatmul.mubr.f32.gmra.mxu0 %v2413
        %v3305 = vpop.f32.mrf.mxu0
        %v3306 = vadd.f32 %v3081, %v3305
        %v3307 = vpop.f32.mrf.mxu0
        %3308 = vmatprep.mubr.f32.mxu0 %v2446
        %3309 = vmatmul.mubr.f32.gmra.mxu0 %v2414
        %v3310 = vpop.f32.mrf.mxu0
        %v3311 = vadd.f32 %v3086, %v3310
        %v3312 = vpop.f32.mrf.mxu0
        %3313 = vmatprep.mubr.f32.mxu0 %v2447
        %3314 = vmatmul.mubr.f32.gmra.mxu0 %v2415
        %v3315 = vpop.f32.mrf.mxu0
        %v3316 = vadd.f32 %v3091, %v3315
        %v3317 = vpop.f32.mrf.mxu0
        %3318 = vmatprep.mubr.f32.mxu0 %v2448
        %3319 = vmatmul.mubr.f32.gmra.mxu0 %v2416
        %v3320 = vpop.f32.mrf.mxu0
        %v3321 = vadd.f32 %v3096, %v3320
        %v3322 = vpop.f32.mrf.mxu0
        %3323 = vmatprep.mubr.f32.mxu0 %v2449
        %3324 = vmatmul.mubr.f32.gmra.mxu0 %v2417
        %v3325 = vpop.f32.mrf.mxu0
        %v3326 = vadd.f32 %v3101, %v3325
        %v3327 = vpop.f32.mrf.mxu0
        %3328 = vmatprep.mubr.f32.mxu0 %v2450
        %3329 = vmatmul.mubr.f32.gmra.mxu0 %v2418
        %v3330 = vpop.f32.mrf.mxu0
        %v3331 = vadd.f32 %v3106, %v3330
        %v3332 = vpop.f32.mrf.mxu0
        %3333 = vmatprep.mubr.f32.mxu0 %v2451
        %3334 = vmatmul.mubr.f32.gmra.mxu0 %v2419
        %v3335 = vpop.f32.mrf.mxu0
        %v3336 = vadd.f32 %v3111, %v3335
        %v3337 = vpop.f32.mrf.mxu0
        %3338 = vmatprep.mubr.f32.mxu0 %v2452
        %3339 = vmatmul.mubr.f32.gmra.mxu0 %v2420
        %v3340 = vpop.f32.mrf.mxu0
        %v3341 = vadd.f32 %v3116, %v3340
        %v3342 = vpop.f32.mrf.mxu0
        %3343 = vmatprep.mubr.f32.mxu0 %v2453
        %3344 = vmatmul.mubr.f32.gmra.mxu0 %v2421
        %v3345 = vpop.f32.mrf.mxu0
        %v3346 = vadd.f32 %v3121, %v3345
        %v3347 = vpop.f32.mrf.mxu0
        %3348 = vmatprep.mubr.f32.mxu0 %v2454
        %3349 = vmatmul.mubr.f32.gmra.mxu0 %v2422
        %v3350 = vpop.f32.mrf.mxu0
        %v3351 = vadd.f32 %v3126, %v3350
        %v3352 = vpop.f32.mrf.mxu0
        %3353 = vdwg.mxu0
        %3354 = vmatprep.subr.mxu0 0.0
        %3355 = vmatpush1.msra.mxu0 %v2534
        %3356 = vmatprep.subr.mxu0 0.0
        %3357 = vmatpush1.msra.mxu0 %v2533
        %3358 = vmatprep.subr.mxu0 0.0
        %3359 = vmatpush1.msra.mxu0 %v2532
        %3360 = vmatprep.subr.mxu0 0.0
        %3361 = vmatpush1.msra.mxu0 %v2531
        %3362 = vmatprep.subr.mxu0 0.0
        %3363 = vmatpush1.msra.mxu0 %v2530
        %3364 = vmatprep.subr.mxu0 0.0
        %3365 = vmatpush1.msra.mxu0 %v2529
        %3366 = vmatprep.subr.mxu0 0.0
        %3367 = vmatpush1.msra.mxu0 %v2528
        %3368 = vmatprep.subr.mxu0 0.0
        %3369 = vmatpush1.msra.mxu0 %v2527
        %3370 = vmatprep.subr.mxu0 0.0
        %3371 = vmatpush1.msra.mxu0 %v2526
        %3372 = vmatprep.subr.mxu0 0.0
        %3373 = vmatpush1.msra.mxu0 %v2525
        %3374 = vmatprep.subr.mxu0 0.0
        %3375 = vmatpush1.msra.mxu0 %v2524
        %3376 = vmatprep.subr.mxu0 0.0
        %3377 = vmatpush1.msra.mxu0 %v2523
        %3378 = vmatprep.subr.mxu0 0.0
        %3379 = vmatpush1.msra.mxu0 %v2522
        %3380 = vmatprep.subr.mxu0 0.0
        %3381 = vmatpush1.msra.mxu0 %v2521
        %3382 = vmatprep.subr.mxu0 0.0
        %3383 = vmatpush1.msra.mxu0 %v2520
        %3384 = vmatprep.subr.mxu0 0.0
        %3385 = vmatpush1.msra.mxu0 %v2519
        %3386 = vmatprep.subr.mxu0 0.0
        %3387 = vmatpush2.msra.mxu0 0.0
        %3388 = vmatprep.subr.mxu0 0.0
        %3389 = vmatpush2.msra.mxu0 0.0
        %3390 = vmatprep.subr.mxu0 0.0
        %3391 = vmatpush2.msra.mxu0 0.0
        %3392 = vmatprep.subr.mxu0 0.0
        %3393 = vmatpush2.msra.mxu0 0.0
        %3394 = vmatprep.subr.mxu0 0.0
        %3395 = vmatpush2.msra.mxu0 0.0
        %3396 = vmatprep.subr.mxu0 0.0
        %3397 = vmatpush2.msra.mxu0 0.0
        %3398 = vmatprep.subr.mxu0 0.0
        %3399 = vmatpush2.msra.mxu0 0.0
        %3400 = vmatprep.subr.mxu0 0.0
        %3401 = vmatpush2.msra.mxu0 0.0
        %3402 = vmatprep.subr.mxu0 0.0
        %3403 = vmatpush2.msra.mxu0 0.0
        %3404 = vmatprep.subr.mxu0 0.0
        %3405 = vmatpush2.msra.mxu0 0.0
        %3406 = vmatprep.subr.mxu0 0.0
        %3407 = vmatpush2.msra.mxu0 0.0
        %3408 = vmatprep.subr.mxu0 0.0
        %3409 = vmatpush2.msra.mxu0 0.0
        %3410 = vmatprep.subr.mxu0 0.0
        %3411 = vmatpush2.msra.mxu0 0.0
        %3412 = vmatprep.subr.mxu0 0.0
        %3413 = vmatpush2.msra.mxu0 0.0
        %3414 = vmatprep.subr.mxu0 0.0
        %3415 = vmatpush2.msra.mxu0 0.0
        %3416 = vmatprep.subr.mxu0 0.0
        %3417 = vmatpush2.msra.mxu0 0.0
        %3418 = vmatprep.mubr.f32.mxu0 0.0
        %3419 = vmatmul.mubr.f32.gmra.mxu0 %v2455
        %v3420 = vpop.f32.mrf.mxu0
        %v3421 = vadd.f32 %v3196, %v3420
        %v3422 = vpop.f32.mrf.mxu0
        %3423 = vmatprep.mubr.f32.mxu0 0.0
        %3424 = vmatmul.mubr.f32.gmra.mxu0 %v2456
        %v3425 = vpop.f32.mrf.mxu0
        %v3426 = vadd.f32 %v3201, %v3425
        %v3427 = vpop.f32.mrf.mxu0
        %3428 = vmatprep.mubr.f32.mxu0 0.0
        %3429 = vmatmul.mubr.f32.gmra.mxu0 %v2457
        %v3430 = vpop.f32.mrf.mxu0
        %v3431 = vadd.f32 %v3206, %v3430
        %v3432 = vpop.f32.mrf.mxu0
        %3433 = vmatprep.mubr.f32.mxu0 0.0
        %3434 = vmatmul.mubr.f32.gmra.mxu0 %v2458
        %v3435 = vpop.f32.mrf.mxu0
        %v3436 = vadd.f32 %v3211, %v3435
        %v3437 = vpop.f32.mrf.mxu0
        %3438 = vmatprep.mubr.f32.mxu0 0.0
        %3439 = vmatmul.mubr.f32.gmra.mxu0 %v2459
        %v3440 = vpop.f32.mrf.mxu0
        %v3441 = vadd.f32 %v3216, %v3440
        %v3442 = vpop.f32.mrf.mxu0
        %3443 = vmatprep.mubr.f32.mxu0 0.0
        %3444 = vmatmul.mubr.f32.gmra.mxu0 %v2460
        %v3445 = vpop.f32.mrf.mxu0
        %v3446 = vadd.f32 %v3221, %v3445
        %v3447 = vpop.f32.mrf.mxu0
        %3448 = vmatprep.mubr.f32.mxu0 0.0
        %3449 = vmatmul.mubr.f32.gmra.mxu0 %v2461
        %v3450 = vpop.f32.mrf.mxu0
        %v3451 = vadd.f32 %v3226, %v3450
        %v3452 = vpop.f32.mrf.mxu0
        %3453 = vmatprep.mubr.f32.mxu0 0.0
        %3454 = vmatmul.mubr.f32.gmra.mxu0 %v2462
        %v3455 = vpop.f32.mrf.mxu0
        %v3456 = vadd.f32 %v3231, %v3455
        %v3457 = vpop.f32.mrf.mxu0
        %3458 = vmatprep.mubr.f32.mxu0 0.0
        %3459 = vmatmul.mubr.f32.gmra.mxu0 %v2463
        %v3460 = vpop.f32.mrf.mxu0
        %v3461 = vadd.f32 %v3236, %v3460
        %v3462 = vpop.f32.mrf.mxu0
        %3463 = vmatprep.mubr.f32.mxu0 0.0
        %3464 = vmatmul.mubr.f32.gmra.mxu0 %v2464
        %v3465 = vpop.f32.mrf.mxu0
        %v3466 = vadd.f32 %v3241, %v3465
        %v3467 = vpop.f32.mrf.mxu0
        %3468 = vmatprep.mubr.f32.mxu0 0.0
        %3469 = vmatmul.mubr.f32.gmra.mxu0 %v2465
        %v3470 = vpop.f32.mrf.mxu0
        %v3471 = vadd.f32 %v3246, %v3470
        %v3472 = vpop.f32.mrf.mxu0
        %3473 = vmatprep.mubr.f32.mxu0 0.0
        %3474 = vmatmul.mubr.f32.gmra.mxu0 %v2466
        %v3475 = vpop.f32.mrf.mxu0
        %v3476 = vadd.f32 %v3251, %v3475
        %v3477 = vpop.f32.mrf.mxu0
        %3478 = vmatprep.mubr.f32.mxu0 0.0
        %3479 = vmatmul.mubr.f32.gmra.mxu0 %v2467
        %v3480 = vpop.f32.mrf.mxu0
        %v3481 = vadd.f32 %v3256, %v3480
        %v3482 = vpop.f32.mrf.mxu0
        %3483 = vmatprep.mubr.f32.mxu0 0.0
        %3484 = vmatmul.mubr.f32.gmra.mxu0 %v2468
        %v3485 = vpop.f32.mrf.mxu0
        %v3486 = vadd.f32 %v3261, %v3485
        %v3487 = vpop.f32.mrf.mxu0
        %3488 = vmatprep.mubr.f32.mxu0 0.0
        %3489 = vmatmul.mubr.f32.gmra.mxu0 %v2469
        %v3490 = vpop.f32.mrf.mxu0
        %v3491 = vadd.f32 %v3266, %v3490
        %v3492 = vpop.f32.mrf.mxu0
        %3493 = vmatprep.mubr.f32.mxu0 0.0
        %3494 = vmatmul.mubr.f32.gmra.mxu0 %v2470
        %v3495 = vpop.f32.mrf.mxu0
        %v3496 = vadd.f32 %v3271, %v3495
        %v3497 = vpop.f32.mrf.mxu0
        %3498 = vmatprep.mubr.f32.mxu0 0.0
        %3499 = vmatmul.mubr.f32.gmra.mxu0 %v2471
        %v3500 = vpop.f32.mrf.mxu0
        %v3501 = vadd.f32 %v3276, %v3500
        %v3502 = vpop.f32.mrf.mxu0
        %3503 = vmatprep.mubr.f32.mxu0 0.0
        %3504 = vmatmul.mubr.f32.gmra.mxu0 %v2472
        %v3505 = vpop.f32.mrf.mxu0
        %v3506 = vadd.f32 %v3281, %v3505
        %v3507 = vpop.f32.mrf.mxu0
        %3508 = vmatprep.mubr.f32.mxu0 0.0
        %3509 = vmatmul.mubr.f32.gmra.mxu0 %v2473
        %v3510 = vpop.f32.mrf.mxu0
        %v3511 = vadd.f32 %v3286, %v3510
        %v3512 = vpop.f32.mrf.mxu0
        %3513 = vmatprep.mubr.f32.mxu0 0.0
        %3514 = vmatmul.mubr.f32.gmra.mxu0 %v2474
        %v3515 = vpop.f32.mrf.mxu0
        %v3516 = vadd.f32 %v3291, %v3515
        %v3517 = vpop.f32.mrf.mxu0
        %3518 = vmatprep.mubr.f32.mxu0 0.0
        %3519 = vmatmul.mubr.f32.gmra.mxu0 %v2475
        %v3520 = vpop.f32.mrf.mxu0
        %v3521 = vadd.f32 %v3296, %v3520
        %v3522 = vpop.f32.mrf.mxu0
        %3523 = vmatprep.mubr.f32.mxu0 0.0
        %3524 = vmatmul.mubr.f32.gmra.mxu0 %v2476
        %v3525 = vpop.f32.mrf.mxu0
        %v3526 = vadd.f32 %v3301, %v3525
        %v3527 = vpop.f32.mrf.mxu0
        %3528 = vmatprep.mubr.f32.mxu0 0.0
        %3529 = vmatmul.mubr.f32.gmra.mxu0 %v2477
        %v3530 = vpop.f32.mrf.mxu0
        %v3531 = vadd.f32 %v3306, %v3530
        %v3532 = vpop.f32.mrf.mxu0
        %3533 = vmatprep.mubr.f32.mxu0 0.0
        %3534 = vmatmul.mubr.f32.gmra.mxu0 %v2478
        %v3535 = vpop.f32.mrf.mxu0
        %v3536 = vadd.f32 %v3311, %v3535
        %v3537 = vpop.f32.mrf.mxu0
        %3538 = vmatprep.mubr.f32.mxu0 0.0
        %3539 = vmatmul.mubr.f32.gmra.mxu0 %v2479
        %v3540 = vpop.f32.mrf.mxu0
        %v3541 = vadd.f32 %v3316, %v3540
        %v3542 = vpop.f32.mrf.mxu0
        %3543 = vmatprep.mubr.f32.mxu0 0.0
        %3544 = vmatmul.mubr.f32.gmra.mxu0 %v2480
        %v3545 = vpop.f32.mrf.mxu0
        %v3546 = vadd.f32 %v3321, %v3545
        %v3547 = vpop.f32.mrf.mxu0
        %3548 = vmatprep.mubr.f32.mxu0 0.0
        %3549 = vmatmul.mubr.f32.gmra.mxu0 %v2481
        %v3550 = vpop.f32.mrf.mxu0
        %v3551 = vadd.f32 %v3326, %v3550
        %v3552 = vpop.f32.mrf.mxu0
        %3553 = vmatprep.mubr.f32.mxu0 0.0
        %3554 = vmatmul.mubr.f32.gmra.mxu0 %v2482
        %v3555 = vpop.f32.mrf.mxu0
        %v3556 = vadd.f32 %v3331, %v3555
        %v3557 = vpop.f32.mrf.mxu0
        %3558 = vmatprep.mubr.f32.mxu0 0.0
        %3559 = vmatmul.mubr.f32.gmra.mxu0 %v2483
        %v3560 = vpop.f32.mrf.mxu0
        %v3561 = vadd.f32 %v3336, %v3560
        %v3562 = vpop.f32.mrf.mxu0
        %3563 = vmatprep.mubr.f32.mxu0 0.0
        %3564 = vmatmul.mubr.f32.gmra.mxu0 %v2484
        %v3565 = vpop.f32.mrf.mxu0
        %v3566 = vadd.f32 %v3341, %v3565
        %v3567 = vpop.f32.mrf.mxu0
        %3568 = vmatprep.mubr.f32.mxu0 0.0
        %3569 = vmatmul.mubr.f32.gmra.mxu0 %v2485
        %v3570 = vpop.f32.mrf.mxu0
        %v3571 = vadd.f32 %v3346, %v3570
        %v3572 = vpop.f32.mrf.mxu0
        %3573 = vmatprep.mubr.f32.mxu0 0.0
        %3574 = vmatmul.mubr.f32.gmra.mxu0 %v2486
        %v3575 = vpop.f32.mrf.mxu0
        %v3576 = vadd.f32 %v3351, %v3575
        %v3577 = vpop.f32.mrf.mxu0
        %3578 = vdwg.mxu0
        %v3579 = vld [vmem:[%s1622] sm:$0xff]
        %v3580 = vld [vmem:[%s1622 + $0x8] sm:$0xff]
        %v3581 = vld [vmem:[%s1622 + $0x18] sm:$0xff]
        %v3582 = vld [vmem:[%s1622 + $0x20] sm:$0xff]
        %v3583 = vld [vmem:[%s1622 + $0x30] sm:$0xff]
        %v3584 = vld [vmem:[%s1622 + $0x38] sm:$0xff]
        %v3585 = vld [vmem:[%s1622 + $0x48] sm:$0xff]
        %v3586 = vld [vmem:[%s1622 + $0x50] sm:$0xff]
        %v3587 = vld [vmem:[%s1622 + $0x60] sm:$0xff]
        %v3588 = vld [vmem:[%s1622 + $0x68] sm:$0xff]
        %v3589 = vld [vmem:[%s1622 + $0x78] sm:$0xff]
        %v3590 = vld [vmem:[%s1622 + $0x80] sm:$0xff]
        %v3591 = vld [vmem:[%s1622 + $0x90] sm:$0xff]
        %v3592 = vld [vmem:[%s1622 + $0x98] sm:$0xff]
        %v3593 = vld [vmem:[%s1622 + $0xa8] sm:$0xff]
        %v3594 = vld [vmem:[%s1622 + $0xb0] sm:$0xff]
        %v3595 = vld [vmem:[%s1622 + $0xc0] sm:$0xff]
        %v3596 = vld [vmem:[%s1622 + $0xc8] sm:$0xff]
        %v3597 = vld [vmem:[%s1622 + $0xd8] sm:$0xff]
        %v3598 = vld [vmem:[%s1622 + $0xe0] sm:$0xff]
        %v3599 = vld [vmem:[%s1622 + $0xf0] sm:$0xff]
        %v3600 = vld [vmem:[%s1622 + $0xf8] sm:$0xff]
        %v3601 = vld [vmem:[%s1622 + $0x108] sm:$0xff]
        %v3602 = vld [vmem:[%s1622 + $0x110] sm:$0xff]
        %v3603 = vld [vmem:[%s1622 + $0x120] sm:$0xff]
        %v3604 = vld [vmem:[%s1622 + $0x128] sm:$0xff]
        %v3605 = vld [vmem:[%s1622 + $0x138] sm:$0xff]
        %v3606 = vld [vmem:[%s1622 + $0x140] sm:$0xff]
        %v3607 = vld [vmem:[%s1622 + $0x150] sm:$0xff]
        %v3608 = vld [vmem:[%s1622 + $0x158] sm:$0xff]
        %v3609 = vld [vmem:[%s1622 + $0x168] sm:$0xff]
        %v3610 = vld [vmem:[%s1622 + $0x170] sm:$0xff]
        %v3611 = vld [vmem:[%s1622 + $0x1] sm:$0xff]
        %v3612 = vld [vmem:[%s1622 + $0x9] sm:$0xff]
        %v3613 = vld [vmem:[%s1622 + $0x19] sm:$0xff]
        %v3614 = vld [vmem:[%s1622 + $0x21] sm:$0xff]
        %v3615 = vld [vmem:[%s1622 + $0x31] sm:$0xff]
        %v3616 = vld [vmem:[%s1622 + $0x39] sm:$0xff]
        %v3617 = vld [vmem:[%s1622 + $0x49] sm:$0xff]
        %v3618 = vld [vmem:[%s1622 + $0x51] sm:$0xff]
        %v3619 = vld [vmem:[%s1622 + $0x61] sm:$0xff]
        %v3620 = vld [vmem:[%s1622 + $0x69] sm:$0xff]
        %v3621 = vld [vmem:[%s1622 + $0x79] sm:$0xff]
        %v3622 = vld [vmem:[%s1622 + $0x81] sm:$0xff]
        %v3623 = vld [vmem:[%s1622 + $0x91] sm:$0xff]
        %v3624 = vld [vmem:[%s1622 + $0x99] sm:$0xff]
        %v3625 = vld [vmem:[%s1622 + $0xa9] sm:$0xff]
        %v3626 = vld [vmem:[%s1622 + $0xb1] sm:$0xff]
        %v3627 = vld [vmem:[%s1622 + $0xc1] sm:$0xff]
        %v3628 = vld [vmem:[%s1622 + $0xc9] sm:$0xff]
        %v3629 = vld [vmem:[%s1622 + $0xd9] sm:$0xff]
        %v3630 = vld [vmem:[%s1622 + $0xe1] sm:$0xff]
        %v3631 = vld [vmem:[%s1622 + $0xf1] sm:$0xff]
        %v3632 = vld [vmem:[%s1622 + $0xf9] sm:$0xff]
        %v3633 = vld [vmem:[%s1622 + $0x109] sm:$0xff]
        %v3634 = vld [vmem:[%s1622 + $0x111] sm:$0xff]
        %v3635 = vld [vmem:[%s1622 + $0x121] sm:$0xff]
        %v3636 = vld [vmem:[%s1622 + $0x129] sm:$0xff]
        %v3637 = vld [vmem:[%s1622 + $0x139] sm:$0xff]
        %v3638 = vld [vmem:[%s1622 + $0x141] sm:$0xff]
        %v3639 = vld [vmem:[%s1622 + $0x151] sm:$0xff]
        %v3640 = vld [vmem:[%s1622 + $0x159] sm:$0xff]
        %v3641 = vld [vmem:[%s1622 + $0x169] sm:$0xff]
        %v3642 = vld [vmem:[%s1622 + $0x171] sm:$0xff]
        %v3643 = vld [vmem:[%s1622 + $0x2] sm:$0xff]
        %v3644 = vld [vmem:[%s1622 + $0xa] sm:$0xff]
        %v3645 = vld [vmem:[%s1622 + $0x1a] sm:$0xff]
        %v3646 = vld [vmem:[%s1622 + $0x22] sm:$0xff]
        %v3647 = vld [vmem:[%s1622 + $0x32] sm:$0xff]
        %v3648 = vld [vmem:[%s1622 + $0x3a] sm:$0xff]
        %v3649 = vld [vmem:[%s1622 + $0x4a] sm:$0xff]
        %v3650 = vld [vmem:[%s1622 + $0x52] sm:$0xff]
        %v3651 = vld [vmem:[%s1622 + $0x62] sm:$0xff]
        %v3652 = vld [vmem:[%s1622 + $0x6a] sm:$0xff]
        %v3653 = vld [vmem:[%s1622 + $0x7a] sm:$0xff]
        %v3654 = vld [vmem:[%s1622 + $0x82] sm:$0xff]
        %v3655 = vld [vmem:[%s1622 + $0x92] sm:$0xff]
        %v3656 = vld [vmem:[%s1622 + $0x9a] sm:$0xff]
        %v3657 = vld [vmem:[%s1622 + $0xaa] sm:$0xff]
        %v3658 = vld [vmem:[%s1622 + $0xb2] sm:$0xff]
        %v3659 = vld [vmem:[%s1622 + $0xc2] sm:$0xff]
        %v3660 = vld [vmem:[%s1622 + $0xca] sm:$0xff]
        %v3661 = vld [vmem:[%s1622 + $0xda] sm:$0xff]
        %v3662 = vld [vmem:[%s1622 + $0xe2] sm:$0xff]
        %v3663 = vld [vmem:[%s1622 + $0xf2] sm:$0xff]
        %v3664 = vld [vmem:[%s1622 + $0xfa] sm:$0xff]
        %v3665 = vld [vmem:[%s1622 + $0x10a] sm:$0xff]
        %v3666 = vld [vmem:[%s1622 + $0x112] sm:$0xff]
        %v3667 = vld [vmem:[%s1622 + $0x122] sm:$0xff]
        %v3668 = vld [vmem:[%s1622 + $0x12a] sm:$0xff]
        %v3669 = vld [vmem:[%s1622 + $0x13a] sm:$0xff]
        %v3670 = vld [vmem:[%s1622 + $0x142] sm:$0xff]
        %v3671 = vld [vmem:[%s1622 + $0x152] sm:$0xff]
        %v3672 = vld [vmem:[%s1622 + $0x15a] sm:$0xff]
        %v3673 = vld [vmem:[%s1622 + $0x16a] sm:$0xff]
        %v3674 = vld [vmem:[%s1622 + $0x172] sm:$0xff]
        %v3675 = vld [vmem:[#allocation8 + $0x300] sm:$0xff]
        %v3676 = vld [vmem:[#allocation8 + $0x308] sm:$0xff]
        %v3677 = vld [vmem:[#allocation8 + $0x310] sm:$0xff]
        %v3678 = vld [vmem:[#allocation8 + $0x318] sm:$0xff]
        %v3679 = vld [vmem:[#allocation8 + $0x320] sm:$0xff]
        %v3680 = vld [vmem:[#allocation8 + $0x328] sm:$0xff]
        %v3681 = vld [vmem:[#allocation8 + $0x330] sm:$0xff]
        %v3682 = vld [vmem:[#allocation8 + $0x338] sm:$0xff]
        %v3683 = vld [vmem:[#allocation8 + $0x340] sm:$0xff]
        %v3684 = vld [vmem:[#allocation8 + $0x348] sm:$0xff]
        %v3685 = vld [vmem:[#allocation8 + $0x350] sm:$0xff]
        %v3686 = vld [vmem:[#allocation8 + $0x358] sm:$0xff]
        %v3687 = vld [vmem:[#allocation8 + $0x360] sm:$0xff]
        %v3688 = vld [vmem:[#allocation8 + $0x368] sm:$0xff]
        %v3689 = vld [vmem:[#allocation8 + $0x370] sm:$0xff]
        %v3690 = vld [vmem:[#allocation8 + $0x378] sm:$0xff]
        %v3691 = vld [vmem:[#allocation8 + $0x380] sm:$0xff]
        %v3692 = vld [vmem:[#allocation8 + $0x388] sm:$0xff]
        %v3693 = vld [vmem:[#allocation8 + $0x390] sm:$0xff]
        %v3694 = vld [vmem:[#allocation8 + $0x398] sm:$0xff]
        %v3695 = vld [vmem:[#allocation8 + $0x3a0] sm:$0xff]
        %v3696 = vld [vmem:[#allocation8 + $0x3a8] sm:$0xff]
        %v3697 = vld [vmem:[#allocation8 + $0x3b0] sm:$0xff]
        %v3698 = vld [vmem:[#allocation8 + $0x3b8] sm:$0xff]
        %v3699 = vld [vmem:[#allocation8 + $0x3c0] sm:$0xff]
        %v3700 = vld [vmem:[#allocation8 + $0x3c8] sm:$0xff]
        %v3701 = vld [vmem:[#allocation8 + $0x3d0] sm:$0xff]
        %v3702 = vld [vmem:[#allocation8 + $0x3d8] sm:$0xff]
        %v3703 = vld [vmem:[#allocation8 + $0x3e0] sm:$0xff]
        %v3704 = vld [vmem:[#allocation8 + $0x3e8] sm:$0xff]
        %v3705 = vld [vmem:[#allocation8 + $0x3f0] sm:$0xff]
        %v3706 = vld [vmem:[#allocation8 + $0x3f8] sm:$0xff]
        %v3707 = vld [vmem:[#allocation8 + $0x400] sm:$0xff]
        %v3708 = vld [vmem:[#allocation8 + $0x408] sm:$0xff]
        %v3709 = vld [vmem:[#allocation8 + $0x410] sm:$0xff]
        %v3710 = vld [vmem:[#allocation8 + $0x418] sm:$0xff]
        %v3711 = vld [vmem:[#allocation8 + $0x420] sm:$0xff]
        %v3712 = vld [vmem:[#allocation8 + $0x428] sm:$0xff]
        %v3713 = vld [vmem:[#allocation8 + $0x430] sm:$0xff]
        %v3714 = vld [vmem:[#allocation8 + $0x438] sm:$0xff]
        %v3715 = vld [vmem:[#allocation8 + $0x440] sm:$0xff]
        %v3716 = vld [vmem:[#allocation8 + $0x448] sm:$0xff]
        %v3717 = vld [vmem:[#allocation8 + $0x450] sm:$0xff]
        %v3718 = vld [vmem:[#allocation8 + $0x458] sm:$0xff]
        %v3719 = vld [vmem:[#allocation8 + $0x460] sm:$0xff]
        %v3720 = vld [vmem:[#allocation8 + $0x468] sm:$0xff]
        %v3721 = vld [vmem:[#allocation8 + $0x470] sm:$0xff]
        %v3722 = vld [vmem:[#allocation8 + $0x478] sm:$0xff]
        %3723 = vmatprep.subr.mxu0 0.0
        %3724 = vmatpush1.msra.mxu0 %v3690
        %3725 = vmatprep.subr.mxu0 0.0
        %3726 = vmatpush1.msra.mxu0 %v3689
        %3727 = vmatprep.subr.mxu0 0.0
        %3728 = vmatpush1.msra.mxu0 %v3688
        %3729 = vmatprep.subr.mxu0 0.0
        %3730 = vmatpush1.msra.mxu0 %v3687
        %3731 = vmatprep.subr.mxu0 0.0
        %3732 = vmatpush1.msra.mxu0 %v3686
        %3733 = vmatprep.subr.mxu0 0.0
        %3734 = vmatpush1.msra.mxu0 %v3685
        %3735 = vmatprep.subr.mxu0 0.0
        %3736 = vmatpush1.msra.mxu0 %v3684
        %3737 = vmatprep.subr.mxu0 0.0
        %3738 = vmatpush1.msra.mxu0 %v3683
        %3739 = vmatprep.subr.mxu0 0.0
        %3740 = vmatpush1.msra.mxu0 %v3682
        %3741 = vmatprep.subr.mxu0 0.0
        %3742 = vmatpush1.msra.mxu0 %v3681
        %3743 = vmatprep.subr.mxu0 0.0
        %3744 = vmatpush1.msra.mxu0 %v3680
        %3745 = vmatprep.subr.mxu0 0.0
        %3746 = vmatpush1.msra.mxu0 %v3679
        %3747 = vmatprep.subr.mxu0 0.0
        %3748 = vmatpush1.msra.mxu0 %v3678
        %3749 = vmatprep.subr.mxu0 0.0
        %3750 = vmatpush1.msra.mxu0 %v3677
        %3751 = vmatprep.subr.mxu0 0.0
        %3752 = vmatpush1.msra.mxu0 %v3676
        %3753 = vmatprep.subr.mxu0 0.0
        %3754 = vmatpush1.msra.mxu0 %v3675
        %3755 = vmatprep.subr.mxu0 0.0
        %3756 = vmatpush2.msra.mxu0 %v3706
        %3757 = vmatprep.subr.mxu0 0.0
        %3758 = vmatpush2.msra.mxu0 %v3705
        %3759 = vmatprep.subr.mxu0 0.0
        %3760 = vmatpush2.msra.mxu0 %v3704
        %3761 = vmatprep.subr.mxu0 0.0
        %3762 = vmatpush2.msra.mxu0 %v3703
        %3763 = vmatprep.subr.mxu0 0.0
        %3764 = vmatpush2.msra.mxu0 %v3702
        %3765 = vmatprep.subr.mxu0 0.0
        %3766 = vmatpush2.msra.mxu0 %v3701
        %3767 = vmatprep.subr.mxu0 0.0
        %3768 = vmatpush2.msra.mxu0 %v3700
        %3769 = vmatprep.subr.mxu0 0.0
        %3770 = vmatpush2.msra.mxu0 %v3699
        %3771 = vmatprep.subr.mxu0 0.0
        %3772 = vmatpush2.msra.mxu0 %v3698
        %3773 = vmatprep.subr.mxu0 0.0
        %3774 = vmatpush2.msra.mxu0 %v3697
        %3775 = vmatprep.subr.mxu0 0.0
        %3776 = vmatpush2.msra.mxu0 %v3696
        %3777 = vmatprep.subr.mxu0 0.0
        %3778 = vmatpush2.msra.mxu0 %v3695
        %3779 = vmatprep.subr.mxu0 0.0
        %3780 = vmatpush2.msra.mxu0 %v3694
        %3781 = vmatprep.subr.mxu0 0.0
        %3782 = vmatpush2.msra.mxu0 %v3693
        %3783 = vmatprep.subr.mxu0 0.0
        %3784 = vmatpush2.msra.mxu0 %v3692
        %3785 = vmatprep.subr.mxu0 0.0
        %3786 = vmatpush2.msra.mxu0 %v3691
        %3787 = vmatprep.mubr.f32.mxu0 %v3611
        %3788 = vmatmul.mubr.f32.gmra.mxu0 %v3579
        %v3789 = vpop.f32.mrf.mxu0
        %v3790 = vadd.f32 0.0, %v3789
        %v3791 = vpop.f32.mrf.mxu0
        %3792 = vmatprep.mubr.f32.mxu0 %v3612
        %3793 = vmatmul.mubr.f32.gmra.mxu0 %v3580
        %v3794 = vpop.f32.mrf.mxu0
        %v3795 = vadd.f32 0.0, %v3794
        %v3796 = vpop.f32.mrf.mxu0
        %3797 = vmatprep.mubr.f32.mxu0 %v3613
        %3798 = vmatmul.mubr.f32.gmra.mxu0 %v3581
        %v3799 = vpop.f32.mrf.mxu0
        %v3800 = vadd.f32 0.0, %v3799
        %v3801 = vpop.f32.mrf.mxu0
        %3802 = vmatprep.mubr.f32.mxu0 %v3614
        %3803 = vmatmul.mubr.f32.gmra.mxu0 %v3582
        %v3804 = vpop.f32.mrf.mxu0
        %v3805 = vadd.f32 0.0, %v3804
        %v3806 = vpop.f32.mrf.mxu0
        %3807 = vmatprep.mubr.f32.mxu0 %v3615
        %3808 = vmatmul.mubr.f32.gmra.mxu0 %v3583
        %v3809 = vpop.f32.mrf.mxu0
        %v3810 = vadd.f32 0.0, %v3809
        %v3811 = vpop.f32.mrf.mxu0
        %3812 = vmatprep.mubr.f32.mxu0 %v3616
        %3813 = vmatmul.mubr.f32.gmra.mxu0 %v3584
        %v3814 = vpop.f32.mrf.mxu0
        %v3815 = vadd.f32 0.0, %v3814
        %v3816 = vpop.f32.mrf.mxu0
        %3817 = vmatprep.mubr.f32.mxu0 %v3617
        %3818 = vmatmul.mubr.f32.gmra.mxu0 %v3585
        %v3819 = vpop.f32.mrf.mxu0
        %v3820 = vadd.f32 0.0, %v3819
        %v3821 = vpop.f32.mrf.mxu0
        %3822 = vmatprep.mubr.f32.mxu0 %v3618
        %3823 = vmatmul.mubr.f32.gmra.mxu0 %v3586
        %v3824 = vpop.f32.mrf.mxu0
        %v3825 = vadd.f32 0.0, %v3824
        %v3826 = vpop.f32.mrf.mxu0
        %3827 = vmatprep.mubr.f32.mxu0 %v3619
        %3828 = vmatmul.mubr.f32.gmra.mxu0 %v3587
        %v3829 = vpop.f32.mrf.mxu0
        %v3830 = vadd.f32 0.0, %v3829
        %v3831 = vpop.f32.mrf.mxu0
        %3832 = vmatprep.mubr.f32.mxu0 %v3620
        %3833 = vmatmul.mubr.f32.gmra.mxu0 %v3588
        %v3834 = vpop.f32.mrf.mxu0
        %v3835 = vadd.f32 0.0, %v3834
        %v3836 = vpop.f32.mrf.mxu0
        %3837 = vmatprep.mubr.f32.mxu0 %v3621
        %3838 = vmatmul.mubr.f32.gmra.mxu0 %v3589
        %v3839 = vpop.f32.mrf.mxu0
        %v3840 = vadd.f32 0.0, %v3839
        %v3841 = vpop.f32.mrf.mxu0
        %3842 = vmatprep.mubr.f32.mxu0 %v3622
        %3843 = vmatmul.mubr.f32.gmra.mxu0 %v3590
        %v3844 = vpop.f32.mrf.mxu0
        %v3845 = vadd.f32 0.0, %v3844
        %v3846 = vpop.f32.mrf.mxu0
        %3847 = vmatprep.mubr.f32.mxu0 %v3623
        %3848 = vmatmul.mubr.f32.gmra.mxu0 %v3591
        %v3849 = vpop.f32.mrf.mxu0
        %v3850 = vadd.f32 0.0, %v3849
        %v3851 = vpop.f32.mrf.mxu0
        %3852 = vmatprep.mubr.f32.mxu0 %v3624
        %3853 = vmatmul.mubr.f32.gmra.mxu0 %v3592
        %v3854 = vpop.f32.mrf.mxu0
        %v3855 = vadd.f32 0.0, %v3854
        %v3856 = vpop.f32.mrf.mxu0
        %3857 = vmatprep.mubr.f32.mxu0 %v3625
        %3858 = vmatmul.mubr.f32.gmra.mxu0 %v3593
        %v3859 = vpop.f32.mrf.mxu0
        %v3860 = vadd.f32 0.0, %v3859
        %v3861 = vpop.f32.mrf.mxu0
        %3862 = vmatprep.mubr.f32.mxu0 %v3626
        %3863 = vmatmul.mubr.f32.gmra.mxu0 %v3594
        %v3864 = vpop.f32.mrf.mxu0
        %v3865 = vadd.f32 0.0, %v3864
        %v3866 = vpop.f32.mrf.mxu0
        %3867 = vmatprep.mubr.f32.mxu0 %v3627
        %3868 = vmatmul.mubr.f32.gmra.mxu0 %v3595
        %v3869 = vpop.f32.mrf.mxu0
        %v3870 = vadd.f32 0.0, %v3869
        %v3871 = vpop.f32.mrf.mxu0
        %3872 = vmatprep.mubr.f32.mxu0 %v3628
        %3873 = vmatmul.mubr.f32.gmra.mxu0 %v3596
        %v3874 = vpop.f32.mrf.mxu0
        %v3875 = vadd.f32 0.0, %v3874
        %v3876 = vpop.f32.mrf.mxu0
        %3877 = vmatprep.mubr.f32.mxu0 %v3629
        %3878 = vmatmul.mubr.f32.gmra.mxu0 %v3597
        %v3879 = vpop.f32.mrf.mxu0
        %v3880 = vadd.f32 0.0, %v3879
        %v3881 = vpop.f32.mrf.mxu0
        %3882 = vmatprep.mubr.f32.mxu0 %v3630
        %3883 = vmatmul.mubr.f32.gmra.mxu0 %v3598
        %v3884 = vpop.f32.mrf.mxu0
        %v3885 = vadd.f32 0.0, %v3884
        %v3886 = vpop.f32.mrf.mxu0
        %3887 = vmatprep.mubr.f32.mxu0 %v3631
        %3888 = vmatmul.mubr.f32.gmra.mxu0 %v3599
        %v3889 = vpop.f32.mrf.mxu0
        %v3890 = vadd.f32 0.0, %v3889
        %v3891 = vpop.f32.mrf.mxu0
        %3892 = vmatprep.mubr.f32.mxu0 %v3632
        %3893 = vmatmul.mubr.f32.gmra.mxu0 %v3600
        %v3894 = vpop.f32.mrf.mxu0
        %v3895 = vadd.f32 0.0, %v3894
        %v3896 = vpop.f32.mrf.mxu0
        %3897 = vmatprep.mubr.f32.mxu0 %v3633
        %3898 = vmatmul.mubr.f32.gmra.mxu0 %v3601
        %v3899 = vpop.f32.mrf.mxu0
        %v3900 = vadd.f32 0.0, %v3899
        %v3901 = vpop.f32.mrf.mxu0
        %3902 = vmatprep.mubr.f32.mxu0 %v3634
        %3903 = vmatmul.mubr.f32.gmra.mxu0 %v3602
        %v3904 = vpop.f32.mrf.mxu0
        %v3905 = vadd.f32 0.0, %v3904
        %v3906 = vpop.f32.mrf.mxu0
        %3907 = vmatprep.mubr.f32.mxu0 %v3635
        %3908 = vmatmul.mubr.f32.gmra.mxu0 %v3603
        %v3909 = vpop.f32.mrf.mxu0
        %v3910 = vadd.f32 0.0, %v3909
        %v3911 = vpop.f32.mrf.mxu0
        %3912 = vmatprep.mubr.f32.mxu0 %v3636
        %3913 = vmatmul.mubr.f32.gmra.mxu0 %v3604
        %v3914 = vpop.f32.mrf.mxu0
        %v3915 = vadd.f32 0.0, %v3914
        %v3916 = vpop.f32.mrf.mxu0
        %3917 = vmatprep.mubr.f32.mxu0 %v3637
        %3918 = vmatmul.mubr.f32.gmra.mxu0 %v3605
        %v3919 = vpop.f32.mrf.mxu0
        %v3920 = vadd.f32 0.0, %v3919
        %v3921 = vpop.f32.mrf.mxu0
        %3922 = vmatprep.mubr.f32.mxu0 %v3638
        %3923 = vmatmul.mubr.f32.gmra.mxu0 %v3606
        %v3924 = vpop.f32.mrf.mxu0
        %v3925 = vadd.f32 0.0, %v3924
        %v3926 = vpop.f32.mrf.mxu0
        %3927 = vmatprep.mubr.f32.mxu0 %v3639
        %3928 = vmatmul.mubr.f32.gmra.mxu0 %v3607
        %v3929 = vpop.f32.mrf.mxu0
        %v3930 = vadd.f32 0.0, %v3929
        %v3931 = vpop.f32.mrf.mxu0
        %3932 = vmatprep.mubr.f32.mxu0 %v3640
        %3933 = vmatmul.mubr.f32.gmra.mxu0 %v3608
        %v3934 = vpop.f32.mrf.mxu0
        %v3935 = vadd.f32 0.0, %v3934
        %v3936 = vpop.f32.mrf.mxu0
        %3937 = vmatprep.mubr.f32.mxu0 %v3641
        %3938 = vmatmul.mubr.f32.gmra.mxu0 %v3609
        %v3939 = vpop.f32.mrf.mxu0
        %v3940 = vadd.f32 0.0, %v3939
        %v3941 = vpop.f32.mrf.mxu0
        %3942 = vmatprep.mubr.f32.mxu0 %v3642
        %3943 = vmatmul.mubr.f32.gmra.mxu0 %v3610
        %v3944 = vpop.f32.mrf.mxu0
        %v3945 = vadd.f32 0.0, %v3944
        %v3946 = vpop.f32.mrf.mxu0
        %3947 = vdwg.mxu0
        %3948 = vmatprep.subr.mxu0 0.0
        %3949 = vmatpush1.msra.mxu0 %v3722
        %3950 = vmatprep.subr.mxu0 0.0
        %3951 = vmatpush1.msra.mxu0 %v3721
        %3952 = vmatprep.subr.mxu0 0.0
        %3953 = vmatpush1.msra.mxu0 %v3720
        %3954 = vmatprep.subr.mxu0 0.0
        %3955 = vmatpush1.msra.mxu0 %v3719
        %3956 = vmatprep.subr.mxu0 0.0
        %3957 = vmatpush1.msra.mxu0 %v3718
        %3958 = vmatprep.subr.mxu0 0.0
        %3959 = vmatpush1.msra.mxu0 %v3717
        %3960 = vmatprep.subr.mxu0 0.0
        %3961 = vmatpush1.msra.mxu0 %v3716
        %3962 = vmatprep.subr.mxu0 0.0
        %3963 = vmatpush1.msra.mxu0 %v3715
        %3964 = vmatprep.subr.mxu0 0.0
        %3965 = vmatpush1.msra.mxu0 %v3714
        %3966 = vmatprep.subr.mxu0 0.0
        %3967 = vmatpush1.msra.mxu0 %v3713
        %3968 = vmatprep.subr.mxu0 0.0
        %3969 = vmatpush1.msra.mxu0 %v3712
        %3970 = vmatprep.subr.mxu0 0.0
        %3971 = vmatpush1.msra.mxu0 %v3711
        %3972 = vmatprep.subr.mxu0 0.0
        %3973 = vmatpush1.msra.mxu0 %v3710
        %3974 = vmatprep.subr.mxu0 0.0
        %3975 = vmatpush1.msra.mxu0 %v3709
        %3976 = vmatprep.subr.mxu0 0.0
        %3977 = vmatpush1.msra.mxu0 %v3708
        %3978 = vmatprep.subr.mxu0 0.0
        %3979 = vmatpush1.msra.mxu0 %v3707
        %3980 = vmatprep.subr.mxu0 0.0
        %3981 = vmatpush2.msra.mxu0 0.0
        %3982 = vmatprep.subr.mxu0 0.0
        %3983 = vmatpush2.msra.mxu0 0.0
        %3984 = vmatprep.subr.mxu0 0.0
        %3985 = vmatpush2.msra.mxu0 0.0
        %3986 = vmatprep.subr.mxu0 0.0
        %3987 = vmatpush2.msra.mxu0 0.0
        %3988 = vmatprep.subr.mxu0 0.0
        %3989 = vmatpush2.msra.mxu0 0.0
        %3990 = vmatprep.subr.mxu0 0.0
        %3991 = vmatpush2.msra.mxu0 0.0
        %3992 = vmatprep.subr.mxu0 0.0
        %3993 = vmatpush2.msra.mxu0 0.0
        %3994 = vmatprep.subr.mxu0 0.0
        %3995 = vmatpush2.msra.mxu0 0.0
        %3996 = vmatprep.subr.mxu0 0.0
        %3997 = vmatpush2.msra.mxu0 0.0
        %3998 = vmatprep.subr.mxu0 0.0
        %3999 = vmatpush2.msra.mxu0 0.0
        %4000 = vmatprep.subr.mxu0 0.0
        %4001 = vmatpush2.msra.mxu0 0.0
        %4002 = vmatprep.subr.mxu0 0.0
        %4003 = vmatpush2.msra.mxu0 0.0
        %4004 = vmatprep.subr.mxu0 0.0
        %4005 = vmatpush2.msra.mxu0 0.0
        %4006 = vmatprep.subr.mxu0 0.0
        %4007 = vmatpush2.msra.mxu0 0.0
        %4008 = vmatprep.subr.mxu0 0.0
        %4009 = vmatpush2.msra.mxu0 0.0
        %4010 = vmatprep.subr.mxu0 0.0
        %4011 = vmatpush2.msra.mxu0 0.0
        %4012 = vmatprep.mubr.f32.mxu0 0.0
        %4013 = vmatmul.mubr.f32.gmra.mxu0 %v3643
        %v4014 = vpop.f32.mrf.mxu0
        %v4015 = vadd.f32 %v3790, %v4014
        %v4016 = vpop.f32.mrf.mxu0
        %4017 = vmatprep.mubr.f32.mxu0 0.0
        %4018 = vmatmul.mubr.f32.gmra.mxu0 %v3644
        %v4019 = vpop.f32.mrf.mxu0
        %v4020 = vadd.f32 %v3795, %v4019
        %v4021 = vpop.f32.mrf.mxu0
        %4022 = vmatprep.mubr.f32.mxu0 0.0
        %4023 = vmatmul.mubr.f32.gmra.mxu0 %v3645
        %v4024 = vpop.f32.mrf.mxu0
        %v4025 = vadd.f32 %v3800, %v4024
        %v4026 = vpop.f32.mrf.mxu0
        %4027 = vmatprep.mubr.f32.mxu0 0.0
        %4028 = vmatmul.mubr.f32.gmra.mxu0 %v3646
        %v4029 = vpop.f32.mrf.mxu0
        %v4030 = vadd.f32 %v3805, %v4029
        %v4031 = vpop.f32.mrf.mxu0
        %4032 = vmatprep.mubr.f32.mxu0 0.0
        %4033 = vmatmul.mubr.f32.gmra.mxu0 %v3647
        %v4034 = vpop.f32.mrf.mxu0
        %v4035 = vadd.f32 %v3810, %v4034
        %v4036 = vpop.f32.mrf.mxu0
        %4037 = vmatprep.mubr.f32.mxu0 0.0
        %4038 = vmatmul.mubr.f32.gmra.mxu0 %v3648
        %v4039 = vpop.f32.mrf.mxu0
        %v4040 = vadd.f32 %v3815, %v4039
        %v4041 = vpop.f32.mrf.mxu0
        %4042 = vmatprep.mubr.f32.mxu0 0.0
        %4043 = vmatmul.mubr.f32.gmra.mxu0 %v3649
        %v4044 = vpop.f32.mrf.mxu0
        %v4045 = vadd.f32 %v3820, %v4044
        %v4046 = vpop.f32.mrf.mxu0
        %4047 = vmatprep.mubr.f32.mxu0 0.0
        %4048 = vmatmul.mubr.f32.gmra.mxu0 %v3650
        %v4049 = vpop.f32.mrf.mxu0
        %v4050 = vadd.f32 %v3825, %v4049
        %v4051 = vpop.f32.mrf.mxu0
        %4052 = vmatprep.mubr.f32.mxu0 0.0
        %4053 = vmatmul.mubr.f32.gmra.mxu0 %v3651
        %v4054 = vpop.f32.mrf.mxu0
        %v4055 = vadd.f32 %v3830, %v4054
        %v4056 = vpop.f32.mrf.mxu0
        %4057 = vmatprep.mubr.f32.mxu0 0.0
        %4058 = vmatmul.mubr.f32.gmra.mxu0 %v3652
        %v4059 = vpop.f32.mrf.mxu0
        %v4060 = vadd.f32 %v3835, %v4059
        %v4061 = vpop.f32.mrf.mxu0
        %4062 = vmatprep.mubr.f32.mxu0 0.0
        %4063 = vmatmul.mubr.f32.gmra.mxu0 %v3653
        %v4064 = vpop.f32.mrf.mxu0
        %v4065 = vadd.f32 %v3840, %v4064
        %v4066 = vpop.f32.mrf.mxu0
        %4067 = vmatprep.mubr.f32.mxu0 0.0
        %4068 = vmatmul.mubr.f32.gmra.mxu0 %v3654
        %v4069 = vpop.f32.mrf.mxu0
        %v4070 = vadd.f32 %v3845, %v4069
        %v4071 = vpop.f32.mrf.mxu0
        %4072 = vmatprep.mubr.f32.mxu0 0.0
        %4073 = vmatmul.mubr.f32.gmra.mxu0 %v3655
        %v4074 = vpop.f32.mrf.mxu0
        %v4075 = vadd.f32 %v3850, %v4074
        %v4076 = vpop.f32.mrf.mxu0
        %4077 = vmatprep.mubr.f32.mxu0 0.0
        %4078 = vmatmul.mubr.f32.gmra.mxu0 %v3656
        %v4079 = vpop.f32.mrf.mxu0
        %v4080 = vadd.f32 %v3855, %v4079
        %v4081 = vpop.f32.mrf.mxu0
        %4082 = vmatprep.mubr.f32.mxu0 0.0
        %4083 = vmatmul.mubr.f32.gmra.mxu0 %v3657
        %v4084 = vpop.f32.mrf.mxu0
        %v4085 = vadd.f32 %v3860, %v4084
        %v4086 = vpop.f32.mrf.mxu0
        %4087 = vmatprep.mubr.f32.mxu0 0.0
        %4088 = vmatmul.mubr.f32.gmra.mxu0 %v3658
        %v4089 = vpop.f32.mrf.mxu0
        %v4090 = vadd.f32 %v3865, %v4089
        %v4091 = vpop.f32.mrf.mxu0
        %4092 = vmatprep.mubr.f32.mxu0 0.0
        %4093 = vmatmul.mubr.f32.gmra.mxu0 %v3659
        %v4094 = vpop.f32.mrf.mxu0
        %v4095 = vadd.f32 %v3870, %v4094
        %v4096 = vpop.f32.mrf.mxu0
        %4097 = vmatprep.mubr.f32.mxu0 0.0
        %4098 = vmatmul.mubr.f32.gmra.mxu0 %v3660
        %v4099 = vpop.f32.mrf.mxu0
        %v4100 = vadd.f32 %v3875, %v4099
        %v4101 = vpop.f32.mrf.mxu0
        %4102 = vmatprep.mubr.f32.mxu0 0.0
        %4103 = vmatmul.mubr.f32.gmra.mxu0 %v3661
        %v4104 = vpop.f32.mrf.mxu0
        %v4105 = vadd.f32 %v3880, %v4104
        %v4106 = vpop.f32.mrf.mxu0
        %4107 = vmatprep.mubr.f32.mxu0 0.0
        %4108 = vmatmul.mubr.f32.gmra.mxu0 %v3662
        %v4109 = vpop.f32.mrf.mxu0
        %v4110 = vadd.f32 %v3885, %v4109
        %v4111 = vpop.f32.mrf.mxu0
        %4112 = vmatprep.mubr.f32.mxu0 0.0
        %4113 = vmatmul.mubr.f32.gmra.mxu0 %v3663
        %v4114 = vpop.f32.mrf.mxu0
        %v4115 = vadd.f32 %v3890, %v4114
        %v4116 = vpop.f32.mrf.mxu0
        %4117 = vmatprep.mubr.f32.mxu0 0.0
        %4118 = vmatmul.mubr.f32.gmra.mxu0 %v3664
        %v4119 = vpop.f32.mrf.mxu0
        %v4120 = vadd.f32 %v3895, %v4119
        %v4121 = vpop.f32.mrf.mxu0
        %4122 = vmatprep.mubr.f32.mxu0 0.0
        %4123 = vmatmul.mubr.f32.gmra.mxu0 %v3665
        %v4124 = vpop.f32.mrf.mxu0
        %v4125 = vadd.f32 %v3900, %v4124
        %v4126 = vpop.f32.mrf.mxu0
        %4127 = vmatprep.mubr.f32.mxu0 0.0
        %4128 = vmatmul.mubr.f32.gmra.mxu0 %v3666
        %v4129 = vpop.f32.mrf.mxu0
        %v4130 = vadd.f32 %v3905, %v4129
        %v4131 = vpop.f32.mrf.mxu0
        %4132 = vmatprep.mubr.f32.mxu0 0.0
        %4133 = vmatmul.mubr.f32.gmra.mxu0 %v3667
        %v4134 = vpop.f32.mrf.mxu0
        %v4135 = vadd.f32 %v3910, %v4134
        %v4136 = vpop.f32.mrf.mxu0
        %4137 = vmatprep.mubr.f32.mxu0 0.0
        %4138 = vmatmul.mubr.f32.gmra.mxu0 %v3668
        %v4139 = vpop.f32.mrf.mxu0
        %v4140 = vadd.f32 %v3915, %v4139
        %v4141 = vpop.f32.mrf.mxu0
        %4142 = vmatprep.mubr.f32.mxu0 0.0
        %4143 = vmatmul.mubr.f32.gmra.mxu0 %v3669
        %v4144 = vpop.f32.mrf.mxu0
        %v4145 = vadd.f32 %v3920, %v4144
        %v4146 = vpop.f32.mrf.mxu0
        %4147 = vmatprep.mubr.f32.mxu0 0.0
        %4148 = vmatmul.mubr.f32.gmra.mxu0 %v3670
        %v4149 = vpop.f32.mrf.mxu0
        %v4150 = vadd.f32 %v3925, %v4149
        %v4151 = vpop.f32.mrf.mxu0
        %4152 = vmatprep.mubr.f32.mxu0 0.0
        %4153 = vmatmul.mubr.f32.gmra.mxu0 %v3671
        %v4154 = vpop.f32.mrf.mxu0
        %v4155 = vadd.f32 %v3930, %v4154
        %v4156 = vpop.f32.mrf.mxu0
        %4157 = vmatprep.mubr.f32.mxu0 0.0
        %4158 = vmatmul.mubr.f32.gmra.mxu0 %v3672
        %v4159 = vpop.f32.mrf.mxu0
        %v4160 = vadd.f32 %v3935, %v4159
        %v4161 = vpop.f32.mrf.mxu0
        %4162 = vmatprep.mubr.f32.mxu0 0.0
        %4163 = vmatmul.mubr.f32.gmra.mxu0 %v3673
        %v4164 = vpop.f32.mrf.mxu0
        %v4165 = vadd.f32 %v3940, %v4164
        %v4166 = vpop.f32.mrf.mxu0
        %4167 = vmatprep.mubr.f32.mxu0 0.0
        %4168 = vmatmul.mubr.f32.gmra.mxu0 %v3674
        %v4169 = vpop.f32.mrf.mxu0
        %v4170 = vadd.f32 %v3945, %v4169
        %v4171 = vpop.f32.mrf.mxu0
        %4172 = vdwg.mxu0
        %v4173 = vadd.f32 %v3421, %v4015
        %v4174 = vadd.f32 %v3426, %v4020
        %v4175 = vadd.f32 %v3431, %v4025
        %v4176 = vadd.f32 %v3436, %v4030
        %v4177 = vadd.f32 %v3441, %v4035
        %v4178 = vadd.f32 %v3446, %v4040
        %v4179 = vadd.f32 %v3451, %v4045
        %v4180 = vadd.f32 %v3456, %v4050
        %v4181 = vadd.f32 %v3461, %v4055
        %v4182 = vadd.f32 %v3466, %v4060
        %v4183 = vadd.f32 %v3471, %v4065
        %v4184 = vadd.f32 %v3476, %v4070
        %v4185 = vadd.f32 %v3481, %v4075
        %v4186 = vadd.f32 %v3486, %v4080
        %v4187 = vadd.f32 %v3491, %v4085
        %v4188 = vadd.f32 %v3496, %v4090
        %v4189 = vadd.f32 %v3501, %v4095
        %v4190 = vadd.f32 %v3506, %v4100
        %v4191 = vadd.f32 %v3511, %v4105
        %v4192 = vadd.f32 %v3516, %v4110
        %v4193 = vadd.f32 %v3521, %v4115
        %v4194 = vadd.f32 %v3526, %v4120
        %v4195 = vadd.f32 %v3531, %v4125
        %v4196 = vadd.f32 %v3536, %v4130
        %v4197 = vadd.f32 %v3541, %v4135
        %v4198 = vadd.f32 %v3546, %v4140
        %v4199 = vadd.f32 %v3551, %v4145
        %v4200 = vadd.f32 %v3556, %v4150
        %v4201 = vadd.f32 %v3561, %v4155
        %v4202 = vadd.f32 %v3566, %v4160
        %v4203 = vadd.f32 %v3571, %v4165
        %v4204 = vadd.f32 %v3576, %v4170
        %v4205 = vld [vmem:[%s5] sm:$0x1]
        %v4207 = vlaneseq
        %v4208 = vshrl.u32 %v4207, 7
        %v4209 = vsub.s32 0, %v4208
        %v4210 = vrot.slane %v4205, %v4209
        %v4212 = vmul.f32 %v4173, %v4210
        %v4213 = vmul.f32 %v4174, %v4210
        %v4214 = vmul.f32 %v4175, %v4210
        %v4215 = vmul.f32 %v4176, %v4210
        %v4216 = vmul.f32 %v4177, %v4210
        %v4217 = vmul.f32 %v4178, %v4210
        %v4218 = vmul.f32 %v4179, %v4210
        %v4219 = vmul.f32 %v4180, %v4210
        %v4220 = vmul.f32 %v4181, %v4210
        %v4221 = vmul.f32 %v4182, %v4210
        %v4222 = vmul.f32 %v4183, %v4210
        %v4223 = vmul.f32 %v4184, %v4210
        %v4224 = vmul.f32 %v4185, %v4210
        %v4225 = vmul.f32 %v4186, %v4210
        %v4226 = vmul.f32 %v4187, %v4210
        %v4227 = vmul.f32 %v4188, %v4210
        %v4228 = vmul.f32 %v4189, %v4210
        %v4229 = vmul.f32 %v4190, %v4210
        %v4230 = vmul.f32 %v4191, %v4210
        %v4231 = vmul.f32 %v4192, %v4210
        %v4232 = vmul.f32 %v4193, %v4210
        %v4233 = vmul.f32 %v4194, %v4210
        %v4234 = vmul.f32 %v4195, %v4210
        %v4235 = vmul.f32 %v4196, %v4210
        %v4236 = vmul.f32 %v4197, %v4210
        %v4237 = vmul.f32 %v4198, %v4210
        %v4238 = vmul.f32 %v4199, %v4210
        %v4239 = vmul.f32 %v4200, %v4210
        %v4240 = vmul.f32 %v4201, %v4210
        %v4241 = vmul.f32 %v4202, %v4210
        %v4242 = vmul.f32 %v4203, %v4210
        %v4243 = vmul.f32 %v4204, %v4210
        %v4244 = vld [vmem:[%s6] sm:$0x1]
        %v4246 = vlaneseq
        %v4247 = vshrl.u32 %v4246, 7
        %v4248 = vsub.s32 0, %v4247
        %v4249 = vrot.slane %v4244, %v4248
        %v4251 = vadd.f32 %v4212, %v4249
        %v4252 = vadd.f32 %v4213, %v4249
        %v4253 = vadd.f32 %v4214, %v4249
        %v4254 = vadd.f32 %v4215, %v4249
        %v4255 = vadd.f32 %v4216, %v4249
        %v4256 = vadd.f32 %v4217, %v4249
        %v4257 = vadd.f32 %v4218, %v4249
        %v4258 = vadd.f32 %v4219, %v4249
        %v4259 = vadd.f32 %v4220, %v4249
        %v4260 = vadd.f32 %v4221, %v4249
        %v4261 = vadd.f32 %v4222, %v4249
        %v4262 = vadd.f32 %v4223, %v4249
        %v4263 = vadd.f32 %v4224, %v4249
        %v4264 = vadd.f32 %v4225, %v4249
        %v4265 = vadd.f32 %v4226, %v4249
        %v4266 = vadd.f32 %v4227, %v4249
        %v4267 = vadd.f32 %v4228, %v4249
        %v4268 = vadd.f32 %v4229, %v4249
        %v4269 = vadd.f32 %v4230, %v4249
        %v4270 = vadd.f32 %v4231, %v4249
        %v4271 = vadd.f32 %v4232, %v4249
        %v4272 = vadd.f32 %v4233, %v4249
        %v4273 = vadd.f32 %v4234, %v4249
        %v4274 = vadd.f32 %v4235, %v4249
        %v4275 = vadd.f32 %v4236, %v4249
        %v4276 = vadd.f32 %v4237, %v4249
        %v4277 = vadd.f32 %v4238, %v4249
        %v4278 = vadd.f32 %v4239, %v4249
        %v4279 = vadd.f32 %v4240, %v4249
        %v4280 = vadd.f32 %v4241, %v4249
        %v4281 = vadd.f32 %v4242, %v4249
        %v4282 = vadd.f32 %v4243, %v4249
        %v4283 = vld [vmem:[%s287] sm:$0xff]
        %v4284 = vld [vmem:[%s287 + $0x8] sm:$0xff]
        %v4285 = vld [vmem:[%s287 + $0x10] sm:$0xff]
        %v4286 = vld [vmem:[%s287 + $0x18] sm:$0xff]
        %v4287 = vld [vmem:[%s287 + $0x20] sm:$0xff]
        %v4288 = vld [vmem:[%s287 + $0x28] sm:$0xff]
        %v4289 = vld [vmem:[%s287 + $0x30] sm:$0xff]
        %v4290 = vld [vmem:[%s287 + $0x38] sm:$0xff]
        %v4291 = vld [vmem:[%s287 + $0x40] sm:$0xff]
        %v4292 = vld [vmem:[%s287 + $0x48] sm:$0xff]
        %v4293 = vld [vmem:[%s287 + $0x50] sm:$0xff]
        %v4294 = vld [vmem:[%s287 + $0x58] sm:$0xff]
        %v4295 = vld [vmem:[%s287 + $0x60] sm:$0xff]
        %v4296 = vld [vmem:[%s287 + $0x68] sm:$0xff]
        %v4297 = vld [vmem:[%s287 + $0x70] sm:$0xff]
        %v4298 = vld [vmem:[%s287 + $0x78] sm:$0xff]
        %v4299 = vld [vmem:[%s287 + $0x80] sm:$0xff]
        %v4300 = vld [vmem:[%s287 + $0x88] sm:$0xff]
        %v4301 = vld [vmem:[%s287 + $0x90] sm:$0xff]
        %v4302 = vld [vmem:[%s287 + $0x98] sm:$0xff]
        %v4303 = vld [vmem:[%s287 + $0xa0] sm:$0xff]
        %v4304 = vld [vmem:[%s287 + $0xa8] sm:$0xff]
        %v4305 = vld [vmem:[%s287 + $0xb0] sm:$0xff]
        %v4306 = vld [vmem:[%s287 + $0xb8] sm:$0xff]
        %v4307 = vld [vmem:[%s287 + $0xc0] sm:$0xff]
        %v4308 = vld [vmem:[%s287 + $0xc8] sm:$0xff]
        %v4309 = vld [vmem:[%s287 + $0xd0] sm:$0xff]
        %v4310 = vld [vmem:[%s287 + $0xd8] sm:$0xff]
        %v4311 = vld [vmem:[%s287 + $0xe0] sm:$0xff]
        %v4312 = vld [vmem:[%s287 + $0xe8] sm:$0xff]
        %v4313 = vld [vmem:[%s287 + $0xf0] sm:$0xff]
        %v4314 = vld [vmem:[%s287 + $0xf8] sm:$0xff]
        %v4315 = vadd.f32 %v4251, %v4283
        %v4316 = vadd.f32 %v4252, %v4284
        %v4317 = vadd.f32 %v4253, %v4285
        %v4318 = vadd.f32 %v4254, %v4286
        %v4319 = vadd.f32 %v4255, %v4287
        %v4320 = vadd.f32 %v4256, %v4288
        %v4321 = vadd.f32 %v4257, %v4289
        %v4322 = vadd.f32 %v4258, %v4290
        %v4323 = vadd.f32 %v4259, %v4291
        %v4324 = vadd.f32 %v4260, %v4292
        %v4325 = vadd.f32 %v4261, %v4293
        %v4326 = vadd.f32 %v4262, %v4294
        %v4327 = vadd.f32 %v4263, %v4295
        %v4328 = vadd.f32 %v4264, %v4296
        %v4329 = vadd.f32 %v4265, %v4297
        %v4330 = vadd.f32 %v4266, %v4298
        %v4331 = vadd.f32 %v4267, %v4299
        %v4332 = vadd.f32 %v4268, %v4300
        %v4333 = vadd.f32 %v4269, %v4301
        %v4334 = vadd.f32 %v4270, %v4302
        %v4335 = vadd.f32 %v4271, %v4303
        %v4336 = vadd.f32 %v4272, %v4304
        %v4337 = vadd.f32 %v4273, %v4305
        %v4338 = vadd.f32 %v4274, %v4306
        %v4339 = vadd.f32 %v4275, %v4307
        %v4340 = vadd.f32 %v4276, %v4308
        %v4341 = vadd.f32 %v4277, %v4309
        %v4342 = vadd.f32 %v4278, %v4310
        %v4343 = vadd.f32 %v4279, %v4311
        %v4344 = vadd.f32 %v4280, %v4312
        %v4345 = vadd.f32 %v4281, %v4313
        %v4346 = vadd.f32 %v4282, %v4314
        %v4347 = vmax.f32 %v4315, 0.0
        %v4348 = vmax.f32 %v4316, 0.0
        %v4349 = vmax.f32 %v4317, 0.0
        %v4350 = vmax.f32 %v4318, 0.0
        %v4351 = vmax.f32 %v4319, 0.0
        %v4352 = vmax.f32 %v4320, 0.0
        %v4353 = vmax.f32 %v4321, 0.0
        %v4354 = vmax.f32 %v4322, 0.0
        %v4355 = vmax.f32 %v4323, 0.0
        %v4356 = vmax.f32 %v4324, 0.0
        %v4357 = vmax.f32 %v4325, 0.0
        %v4358 = vmax.f32 %v4326, 0.0
        %v4359 = vmax.f32 %v4327, 0.0
        %v4360 = vmax.f32 %v4328, 0.0
        %v4361 = vmax.f32 %v4329, 0.0
        %v4362 = vmax.f32 %v4330, 0.0
        %v4363 = vmax.f32 %v4331, 0.0
        %v4364 = vmax.f32 %v4332, 0.0
        %v4365 = vmax.f32 %v4333, 0.0
        %v4366 = vmax.f32 %v4334, 0.0
        %v4367 = vmax.f32 %v4335, 0.0
        %v4368 = vmax.f32 %v4336, 0.0
        %v4369 = vmax.f32 %v4337, 0.0
        %v4370 = vmax.f32 %v4338, 0.0
        %v4371 = vmax.f32 %v4339, 0.0
        %v4372 = vmax.f32 %v4340, 0.0
        %v4373 = vmax.f32 %v4341, 0.0
        %v4374 = vmax.f32 %v4342, 0.0
        %v4375 = vmax.f32 %v4343, 0.0
        %v4376 = vmax.f32 %v4344, 0.0
        %v4377 = vmax.f32 %v4345, 0.0
        %v4378 = vmax.f32 %v4346, 0.0
        %4379 = vst [vmem:[%s325] sm:$0xff] %v4347
        %4380 = vst [vmem:[%s325 + $0x8] sm:$0xff] %v4348
        %4381 = vst [vmem:[%s325 + $0x10] sm:$0xff] %v4349
        %4382 = vst [vmem:[%s325 + $0x18] sm:$0xff] %v4350
        %4383 = vst [vmem:[%s325 + $0x20] sm:$0xff] %v4351
        %4384 = vst [vmem:[%s325 + $0x28] sm:$0xff] %v4352
        %4385 = vst [vmem:[%s325 + $0x30] sm:$0xff] %v4353
        %4386 = vst [vmem:[%s325 + $0x38] sm:$0xff] %v4354
        %4387 = vst [vmem:[%s325 + $0x40] sm:$0xff] %v4355
        %4388 = vst [vmem:[%s325 + $0x48] sm:$0xff] %v4356
        %4389 = vst [vmem:[%s325 + $0x50] sm:$0xff] %v4357
        %4390 = vst [vmem:[%s325 + $0x58] sm:$0xff] %v4358
        %4391 = vst [vmem:[%s325 + $0x60] sm:$0xff] %v4359
        %4392 = vst [vmem:[%s325 + $0x68] sm:$0xff] %v4360
        %4393 = vst [vmem:[%s325 + $0x70] sm:$0xff] %v4361
        %4394 = vst [vmem:[%s325 + $0x78] sm:$0xff] %v4362
        %4395 = vst [vmem:[%s325 + $0x80] sm:$0xff] %v4363
        %4396 = vst [vmem:[%s325 + $0x88] sm:$0xff] %v4364
        %4397 = vst [vmem:[%s325 + $0x90] sm:$0xff] %v4365
        %4398 = vst [vmem:[%s325 + $0x98] sm:$0xff] %v4366
        %4399 = vst [vmem:[%s325 + $0xa0] sm:$0xff] %v4367
        %4400 = vst [vmem:[%s325 + $0xa8] sm:$0xff] %v4368
        %4401 = vst [vmem:[%s325 + $0xb0] sm:$0xff] %v4369
        %4402 = vst [vmem:[%s325 + $0xb8] sm:$0xff] %v4370
        %4403 = vst [vmem:[%s325 + $0xc0] sm:$0xff] %v4371
        %4404 = vst [vmem:[%s325 + $0xc8] sm:$0xff] %v4372
        %4405 = vst [vmem:[%s325 + $0xd0] sm:$0xff] %v4373
        %4406 = vst [vmem:[%s325 + $0xd8] sm:$0xff] %v4374
        %4407 = vst [vmem:[%s325 + $0xe0] sm:$0xff] %v4375
        %4408 = vst [vmem:[%s325 + $0xe8] sm:$0xff] %v4376
        %4409 = vst [vmem:[%s325 + $0xf0] sm:$0xff] %v4377
        %4410 = vst [vmem:[%s325 + $0xf8] sm:$0xff] %v4378
        %s4411 = sand.u32 %s185, 1
        %s4412 = scalar_lea.sflag [#allocation5], %s4411
        %s4413 = sand.u32 %s185, 1
        %s4414 = smul.addr %s4413, 256
        %s4415 = scalar_lea.vmem [#allocation9], %s4414
        // Predicated region
        $region61: #{tpu_custom_call.1} parent=47 // pred_check
          %p4416 = pneg %p195
        $region62: #{tpu_custom_call.1} parent=47 // pred_check_branch
          %4418 = sbr.rel (%p4416) target = $region64
        $region63: #{tpu_custom_call.1} parent=47 // pred_region
          %s4420 = ssub.s32 4096, 4096
          %4421 = vsyncadd %s4412, %s4420
          %s4422 = smul.addr %s25, 32
          %s4423 = smul.addr %s4422, 128
          %s4424 = scalar_lea.hbm %s7, %s4423
          %s4425 = sshll.u32 %s4415, 4
          %s4426 = int_to_ptr.vmem [resolvable:$true] %s4425
          %4431 = dma.vmem_to_hbm [thread:$0]  %s4426, 4096, %s4424, %s4412, 128, 128, 8
        $region64: #{tpu_custom_call.1} parent=47 // pred_fallthru
          _
      $region48: #{tpu_custom_call.1} parent=5 // pred_fallthru
        _
      %p4432 = scmp.le.s32.totalorder 2, %s20
      // Predicated region
      $region65: #{tpu_custom_call.1} parent=5 // pred_check
        %p4433 = pneg %p4432
      $region66: #{tpu_custom_call.1} parent=5 // pred_check_branch
        %4435 = sbr.rel (%p4433) target = $region68
      $region67: #{tpu_custom_call.1} parent=5 // pred_region
        %s4436 = ssub.s32 %s20, 2
        // Predicated region
        $region69: #{tpu_custom_call.1} parent=67 // pred_check
          %p4437 = pneg %p201
        $region70: #{tpu_custom_call.1} parent=67 // pred_check_branch
          %4439 = sbr.rel (%p4437) target = $region72
        $region71: #{tpu_custom_call.1} parent=67 // pred_region
          %s4440 = sand.u32 %s186, 1
          %s4441 = scalar_lea.sflag [#allocation5], %s4440
          %s4442 = sand.u32 %s186, 1
          %s4443 = smul.addr %s4442, 256
          %s4444 = scalar_lea.vmem [#allocation9], %s4443
          %4445 = dma.done %s4441, 4096
        $region72: #{tpu_custom_call.1} parent=67 // pred_fallthru
          _
      $region68: #{tpu_custom_call.1} parent=5 // pred_fallthru
        _
    $region6: #{tpu_custom_call.1} parent=1 // loop_footer
      %s24 = sadd.s32 1, %s20
    $region7: #{tpu_custom_call.1} parent=1 // loop_footer_branch
      %19 = sbr.rel target = $region3
    $region8: #{tpu_custom_call.1} parent=1 // loop_exit
      _
    %4446 = vsyncpa [#allocation4], 1
    %s4447 = scalar_lea.sflag [#allocation4], 1
    %4448 = vsyncpa %s4447, 1
    %4449 = vsyncpa [#allocation7], 1
    %4450 = vsyncpa [#allocation5], 1
    %s4451 = scalar_lea.sflag [#allocation5], 1
    %4452 = vsyncpa %s4451, 1

</llo_original>
